<compile_context>
chip_gen: v6e
topology: v6e:2x2x1
jax: 0.10.0
libtpu: 0.0.40
codegen_flags: <defaults>
</compile_context>

<pallas_src>
import functools

import jax
import jax.numpy as jnp
from jax.experimental import pallas as pl
from jax.experimental.pallas import tpu as pltpu

LANE = 128  # TPU lane width; output channels are zero-padded up to a multiple of this.


def conv_prelu_kernel(x_ref, w_ref, b_ref, alpha_ref, o_ref, *, k, H, W):
    """One batch image per grid step.

    x_ref:     (1, H+k-1, W+k-1, C_in)  spatially pre-padded input (f32 or bf16)
    w_ref:     (k*k, C_in, C_out_pad)   conv taps, out channels zero-padded to lane width
    b_ref:     (1, C_out_pad)           f32 bias (zeros in padded channels)
    alpha_ref: (1, C_out_pad)           f32 PReLU slope (nn.PReLU() single shared param, broadcast)
    o_ref:     (1, H, W, C_out_pad)     f32 output
    """
    x = x_ref[0]                                   # (H+k-1, W+k-1, C_in)
    c_out_pad = o_ref.shape[-1]
    acc = jnp.zeros((H * W, c_out_pad), jnp.float32)

    # Conv as k*k shifted matmuls, accumulated in f32 on the MXU.
    for dy in range(k):
        for dx in range(k):
            tap = x[dy:dy + H, dx:dx + W, :]             # (H, W, C_in) static slice
            lhs = tap.reshape(H * W, tap.shape[-1])      # layout-friendly (W multiple of 8)
            acc = acc + jnp.dot(lhs, w_ref[dy * k + dx],
                                preferred_element_type=jnp.float32)

    # Bias + PReLU epilogue, all in f32 vregs (required for a clean v5e path too).
    acc = acc + b_ref[...]
    out = jnp.where(acc >= 0.0, acc, acc * alpha_ref[...])
    o_ref[0] = out.reshape(H, W, c_out_pad).astype(o_ref.dtype)


def decoder_trmisr_forward(x, weight, bias, alpha, *, matmul_dtype=jnp.float32):
    """PReLU(Conv2d(x)) with PyTorch semantics.

    x:      (B, C_in, H, W) float32 (NCHW, as the nn.Module expects)
    weight: (C_out, C_in, k, k) float32 (torch Conv2d layout)
    bias:   (C_out,) float32
    alpha:  () float32 — nn.PReLU() single shared slope
    Returns (B, C_out, H, W) float32.
    """
    B, C_in, H, W = x.shape
    C_out, C_in_w, k, k2 = weight.shape
    assert C_in == C_in_w and k == k2
    pad = k // 2
    C_out_pad = ((C_out + LANE - 1) // LANE) * LANE

    # ---- host-side layout plumbing only (no compute) ----
    x_nhwc = jnp.transpose(x, (0, 2, 3, 1))                               # (B, H, W, C_in)
    x_pad = jnp.pad(x_nhwc, ((0, 0), (pad, pad), (pad, pad), (0, 0)))
    x_pad = x_pad.astype(matmul_dtype)                                    # bf16 halves DMA bytes on v6e/v7x
    # (C_out, C_in, k, k) -> (k*k, C_in, C_out_pad), lane-dense output channels.
    w_taps = jnp.transpose(weight, (2, 3, 1, 0)).reshape(k * k, C_in, C_out)
    w_taps = jnp.pad(w_taps, ((0, 0), (0, 0), (0, C_out_pad - C_out))).astype(matmul_dtype)
    b_pad = jnp.pad(bias, (0, C_out_pad - C_out)).reshape(1, C_out_pad).astype(jnp.float32)
    alpha_b = jnp.full((1, C_out_pad), alpha, jnp.float32)

    Hp, Wp = H + 2 * pad, W + 2 * pad
    kernel = functools.partial(conv_prelu_kernel, k=k, H=H, W=W)

    # NOTE: one whole image per grid step keeps per-step pipeline overhead negligible at
    # these sizes; for very large H, tile rows with a halo (manual DMA) instead.
    out = pl.pallas_call(
        kernel,
        out_shape=jax.ShapeDtypeStruct((B, H, W, C_out_pad), jnp.float32),
        grid_spec=pltpu.PrefetchScalarGridSpec(
            num_scalar_prefetch=0,
            grid=(B,),  # >= 2 steps so the parallel axis shards across both v7x TensorCores
            in_specs=[
                pl.BlockSpec((1, Hp, Wp, C_in), lambda b: (b, 0, 0, 0)),       # padded image
                pl.BlockSpec((k * k, C_in, C_out_pad), lambda b: (0, 0, 0)),   # weights (constant)
                pl.BlockSpec((1, C_out_pad), lambda b: (0, 0)),                # bias (constant)
                pl.BlockSpec((1, C_out_pad), lambda b: (0, 0)),                # PReLU slope (constant)
            ],
            out_specs=pl.BlockSpec((1, H, W, C_out_pad), lambda b: (b, 0, 0, 0)),
        ),
        compiler_params=pltpu.CompilerParams(
            dimension_semantics=("parallel",),
            vmem_limit_bytes=32 * 1024 * 1024,  # sized against v7x's smaller VMEM budget
        ),
    )(x_pad, w_taps, b_pad, alpha_b)

    # Drop the lane padding, back to NCHW.
    return jnp.transpose(out[..., :C_out], (0, 3, 1, 2))


if __name__ == "__main__":
    # Small shapes consistent with the module: final conv of a MISR decoder.
    # config['final'] = {'in_channels': 64, 'kernel_size': 3}, out_channels = 1.
    B, C_in, H, W = 2, 64, 16, 16
    C_out, k = 1, 3

    key = jax.random.PRNGKey(0)
    kx, kw, kb = jax.random.split(key, 3)
    x = jax.random.normal(kx, (B, C_in, H, W), dtype=jnp.float32)

    # nn.Conv2d-style uniform init bounds; nn.PReLU() default slope 0.25.
    fan_in = C_in * k * k
    lim = 1.0 / (fan_in ** 0.5)
    weight = jax.random.uniform(kw, (C_out, C_in, k, k), jnp.float32, -lim, lim)
    bias = jax.random.uniform(kb, (C_out,), jnp.float32, -lim, lim)
    alpha = jnp.float32(0.25)

    # Plain-JAX reference: conv (NCHW/OIHW, padding k//2) + bias + PReLU.
    ref_conv = jax.lax.conv_general_dilated(
        x, weight, window_strides=(1, 1), padding=[(k // 2, k // 2)] * 2,
        dimension_numbers=("NCHW", "OIHW", "NCHW"),
        precision=jax.lax.Precision.HIGHEST)
    ref_conv = ref_conv + bias.reshape(1, C_out, 1, 1)
    ref = jnp.where(ref_conv >= 0, ref_conv, alpha * ref_conv)

    # f32 MXU path (all generations).
    y32 = decoder_trmisr_forward(x, weight, bias, alpha, matmul_dtype=jnp.float32)
    jax.block_until_ready(y32)
    assert y32.shape == (B, C_out, H, W)
    assert jnp.allclose(y32, ref, atol=1e-3, rtol=1e-3), "f32 kernel mismatch vs reference"

    # bf16 matmul inputs, f32 accumulation + f32 epilogue (v6e/v7x fast path).
    y16 = decoder_trmisr_forward(x, weight, bias, alpha, matmul_dtype=jnp.bfloat16)
    jax.block_until_ready(y16)
    assert jnp.allclose(y16, ref, atol=5e-2, rtol=5e-2), "bf16 kernel mismatch vs reference"

    print("KERNEL_OK")
</pallas_src>

<mosaic_0001>
module attributes {stable_mosaic.version = 11 : i64} {
  func.func @conv_prelu_kernel(%arg0: i32, %arg1: memref<1x18x18x64xf32, #tpu.memory_space<vmem>>, %arg2: memref<9x64x128xf32, #tpu.memory_space<vmem>>, %arg3: memref<1x128xf32, #tpu.memory_space<vmem>>, %arg4: memref<1x128xf32, #tpu.memory_space<vmem>>, %arg5: memref<1x16x16x128xf32, #tpu.memory_space<vmem>>) attributes {dimension_semantics = [#tpu.dimension_semantics<parallel>], iteration_bounds = array<i64: 2>, scalar_prefetch = 0 : i64, scratch_operands = 0 : i64, tpu.core_type = #tpu.core_type<tc>, window_params = [{transform_indices = @transform_0, window_bounds = array<i64: 1, 18, 18, 64>}, {pipeline_mode = #tpu.pipeline_mode<synchronous>, transform_indices = @transform_1, window_bounds = array<i64: 9, 64, 128>}, {pipeline_mode = #tpu.pipeline_mode<synchronous>, transform_indices = @transform_2, window_bounds = array<i64: 1, 128>}, {pipeline_mode = #tpu.pipeline_mode<synchronous>, transform_indices = @transform_3, window_bounds = array<i64: 1, 128>}, {transform_indices = @transform_4, window_bounds = array<i64: 1, 16, 16, 128>}]} {
    %c0 = arith.constant 0 : index
    %c0_0 = arith.constant 0 : index
    %c0_1 = arith.constant 0 : index
    %c0_2 = arith.constant 0 : index
    %0 = vector.load %arg1[%c0, %c0_0, %c0_1, %c0_2] : memref<1x18x18x64xf32, #tpu.memory_space<vmem>>, vector<1x18x18x64xf32>
    %1 = vector.shape_cast %0 : vector<1x18x18x64xf32> to vector<18x18x64xf32>
    %cst = arith.constant 0.000000e+00 : f32
    %2 = vector.broadcast %cst : f32 to vector<256x128xf32>
    %3 = vector.extract_strided_slice %1 {offsets = [0, 0, 0], sizes = [16, 16, 64], strides = [1, 1, 1]} : vector<18x18x64xf32> to vector<16x16x64xf32>
    %4 = vector.shape_cast %3 : vector<16x16x64xf32> to vector<256x64xf32>
    %c0_3 = arith.constant 0 : index
    %c0_4 = arith.constant 0 : index
    %c0_5 = arith.constant 0 : index
    %5 = vector.load %arg2[%c0_3, %c0_4, %c0_5] : memref<9x64x128xf32, #tpu.memory_space<vmem>>, vector<1x64x128xf32>
    %6 = vector.shape_cast %5 : vector<1x64x128xf32> to vector<64x128xf32>
    %cst_6 = arith.constant dense<0.000000e+00> : vector<256x128xf32>
    %7 = tpu.matmul %4, %6, %cst_6 {dimension_numbers = #tpu.dot_dimension_numbers<[1], [0], [0], [1], [0, 0, 1, 1], [], []>} : vector<256x64xf32>, vector<64x128xf32>, vector<256x128xf32> -> vector<256x128xf32>
    %8 = arith.addf %2, %7 : vector<256x128xf32>
    %9 = vector.extract_strided_slice %1 {offsets = [0, 1, 0], sizes = [16, 16, 64], strides = [1, 1, 1]} : vector<18x18x64xf32> to vector<16x16x64xf32>
    %10 = vector.shape_cast %9 : vector<16x16x64xf32> to vector<256x64xf32>
    %c1 = arith.constant 1 : index
    %c0_7 = arith.constant 0 : index
    %c0_8 = arith.constant 0 : index
    %11 = vector.load %arg2[%c1, %c0_7, %c0_8] : memref<9x64x128xf32, #tpu.memory_space<vmem>>, vector<1x64x128xf32>
    %12 = vector.shape_cast %11 : vector<1x64x128xf32> to vector<64x128xf32>
    %cst_9 = arith.constant dense<0.000000e+00> : vector<256x128xf32>
    %13 = tpu.matmul %10, %12, %cst_9 {dimension_numbers = #tpu.dot_dimension_numbers<[1], [0], [0], [1], [0, 0, 1, 1], [], []>} : vector<256x64xf32>, vector<64x128xf32>, vector<256x128xf32> -> vector<256x128xf32>
    %14 = arith.addf %8, %13 : vector<256x128xf32>
    %15 = vector.extract_strided_slice %1 {offsets = [0, 2, 0], sizes = [16, 16, 64], strides = [1, 1, 1]} : vector<18x18x64xf32> to vector<16x16x64xf32>
    %16 = vector.shape_cast %15 : vector<16x16x64xf32> to vector<256x64xf32>
    %c2 = arith.constant 2 : index
    %c0_10 = arith.constant 0 : index
    %c0_11 = arith.constant 0 : index
    %17 = vector.load %arg2[%c2, %c0_10, %c0_11] : memref<9x64x128xf32, #tpu.memory_space<vmem>>, vector<1x64x128xf32>
    %18 = vector.shape_cast %17 : vector<1x64x128xf32> to vector<64x128xf32>
    %cst_12 = arith.constant dense<0.000000e+00> : vector<256x128xf32>
    %19 = tpu.matmul %16, %18, %cst_12 {dimension_numbers = #tpu.dot_dimension_numbers<[1], [0], [0], [1], [0, 0, 1, 1], [], []>} : vector<256x64xf32>, vector<64x128xf32>, vector<256x128xf32> -> vector<256x128xf32>
    %20 = arith.addf %14, %19 : vector<256x128xf32>
    %21 = vector.extract_strided_slice %1 {offsets = [1, 0, 0], sizes = [16, 16, 64], strides = [1, 1, 1]} : vector<18x18x64xf32> to vector<16x16x64xf32>
    %22 = vector.shape_cast %21 : vector<16x16x64xf32> to vector<256x64xf32>
    %c3 = arith.constant 3 : index
    %c0_13 = arith.constant 0 : index
    %c0_14 = arith.constant 0 : index
    %23 = vector.load %arg2[%c3, %c0_13, %c0_14] : memref<9x64x128xf32, #tpu.memory_space<vmem>>, vector<1x64x128xf32>
    %24 = vector.shape_cast %23 : vector<1x64x128xf32> to vector<64x128xf32>
    %cst_15 = arith.constant dense<0.000000e+00> : vector<256x128xf32>
    %25 = tpu.matmul %22, %24, %cst_15 {dimension_numbers = #tpu.dot_dimension_numbers<[1], [0], [0], [1], [0, 0, 1, 1], [], []>} : vector<256x64xf32>, vector<64x128xf32>, vector<256x128xf32> -> vector<256x128xf32>
    %26 = arith.addf %20, %25 : vector<256x128xf32>
    %27 = vector.extract_strided_slice %1 {offsets = [1, 1, 0], sizes = [16, 16, 64], strides = [1, 1, 1]} : vector<18x18x64xf32> to vector<16x16x64xf32>
    %28 = vector.shape_cast %27 : vector<16x16x64xf32> to vector<256x64xf32>
    %c4 = arith.constant 4 : index
    %c0_16 = arith.constant 0 : index
    %c0_17 = arith.constant 0 : index
    %29 = vector.load %arg2[%c4, %c0_16, %c0_17] : memref<9x64x128xf32, #tpu.memory_space<vmem>>, vector<1x64x128xf32>
    %30 = vector.shape_cast %29 : vector<1x64x128xf32> to vector<64x128xf32>
    %cst_18 = arith.constant dense<0.000000e+00> : vector<256x128xf32>
    %31 = tpu.matmul %28, %30, %cst_18 {dimension_numbers = #tpu.dot_dimension_numbers<[1], [0], [0], [1], [0, 0, 1, 1], [], []>} : vector<256x64xf32>, vector<64x128xf32>, vector<256x128xf32> -> vector<256x128xf32>
    %32 = arith.addf %26, %31 : vector<256x128xf32>
    %33 = vector.extract_strided_slice %1 {offsets = [1, 2, 0], sizes = [16, 16, 64], strides = [1, 1, 1]} : vector<18x18x64xf32> to vector<16x16x64xf32>
    %34 = vector.shape_cast %33 : vector<16x16x64xf32> to vector<256x64xf32>
    %c5 = arith.constant 5 : index
    %c0_19 = arith.constant 0 : index
    %c0_20 = arith.constant 0 : index
    %35 = vector.load %arg2[%c5, %c0_19, %c0_20] : memref<9x64x128xf32, #tpu.memory_space<vmem>>, vector<1x64x128xf32>
    %36 = vector.shape_cast %35 : vector<1x64x128xf32> to vector<64x128xf32>
    %cst_21 = arith.constant dense<0.000000e+00> : vector<256x128xf32>
    %37 = tpu.matmul %34, %36, %cst_21 {dimension_numbers = #tpu.dot_dimension_numbers<[1], [0], [0], [1], [0, 0, 1, 1], [], []>} : vector<256x64xf32>, vector<64x128xf32>, vector<256x128xf32> -> vector<256x128xf32>
    %38 = arith.addf %32, %37 : vector<256x128xf32>
    %39 = vector.extract_strided_slice %1 {offsets = [2, 0, 0], sizes = [16, 16, 64], strides = [1, 1, 1]} : vector<18x18x64xf32> to vector<16x16x64xf32>
    %40 = vector.shape_cast %39 : vector<16x16x64xf32> to vector<256x64xf32>
    %c6 = arith.constant 6 : index
    %c0_22 = arith.constant 0 : index
    %c0_23 = arith.constant 0 : index
    %41 = vector.load %arg2[%c6, %c0_22, %c0_23] : memref<9x64x128xf32, #tpu.memory_space<vmem>>, vector<1x64x128xf32>
    %42 = vector.shape_cast %41 : vector<1x64x128xf32> to vector<64x128xf32>
    %cst_24 = arith.constant dense<0.000000e+00> : vector<256x128xf32>
    %43 = tpu.matmul %40, %42, %cst_24 {dimension_numbers = #tpu.dot_dimension_numbers<[1], [0], [0], [1], [0, 0, 1, 1], [], []>} : vector<256x64xf32>, vector<64x128xf32>, vector<256x128xf32> -> vector<256x128xf32>
    %44 = arith.addf %38, %43 : vector<256x128xf32>
    %45 = vector.extract_strided_slice %1 {offsets = [2, 1, 0], sizes = [16, 16, 64], strides = [1, 1, 1]} : vector<18x18x64xf32> to vector<16x16x64xf32>
    %46 = vector.shape_cast %45 : vector<16x16x64xf32> to vector<256x64xf32>
    %c7 = arith.constant 7 : index
    %c0_25 = arith.constant 0 : index
    %c0_26 = arith.constant 0 : index
    %47 = vector.load %arg2[%c7, %c0_25, %c0_26] : memref<9x64x128xf32, #tpu.memory_space<vmem>>, vector<1x64x128xf32>
    %48 = vector.shape_cast %47 : vector<1x64x128xf32> to vector<64x128xf32>
    %cst_27 = arith.constant dense<0.000000e+00> : vector<256x128xf32>
    %49 = tpu.matmul %46, %48, %cst_27 {dimension_numbers = #tpu.dot_dimension_numbers<[1], [0], [0], [1], [0, 0, 1, 1], [], []>} : vector<256x64xf32>, vector<64x128xf32>, vector<256x128xf32> -> vector<256x128xf32>
    %50 = arith.addf %44, %49 : vector<256x128xf32>
    %51 = vector.extract_strided_slice %1 {offsets = [2, 2, 0], sizes = [16, 16, 64], strides = [1, 1, 1]} : vector<18x18x64xf32> to vector<16x16x64xf32>
    %52 = vector.shape_cast %51 : vector<16x16x64xf32> to vector<256x64xf32>
    %c8 = arith.constant 8 : index
    %c0_28 = arith.constant 0 : index
    %c0_29 = arith.constant 0 : index
    %53 = vector.load %arg2[%c8, %c0_28, %c0_29] : memref<9x64x128xf32, #tpu.memory_space<vmem>>, vector<1x64x128xf32>
    %54 = vector.shape_cast %53 : vector<1x64x128xf32> to vector<64x128xf32>
    %cst_30 = arith.constant dense<0.000000e+00> : vector<256x128xf32>
    %55 = tpu.matmul %52, %54, %cst_30 {dimension_numbers = #tpu.dot_dimension_numbers<[1], [0], [0], [1], [0, 0, 1, 1], [], []>} : vector<256x64xf32>, vector<64x128xf32>, vector<256x128xf32> -> vector<256x128xf32>
    %56 = arith.addf %50, %55 : vector<256x128xf32>
    %c0_31 = arith.constant 0 : index
    %c0_32 = arith.constant 0 : index
    %57 = vector.load %arg3[%c0_31, %c0_32] : memref<1x128xf32, #tpu.memory_space<vmem>>, vector<1x128xf32>
    %58 = vector.broadcast %57 : vector<1x128xf32> to vector<256x128xf32>
    %59 = arith.addf %56, %58 : vector<256x128xf32>
    %cst_33 = arith.constant 0.000000e+00 : f32
    %60 = vector.broadcast %cst_33 : f32 to vector<256x128xf32>
    %61 = arith.cmpf oge, %59, %60 : vector<256x128xf32>
    %c0_34 = arith.constant 0 : index
    %c0_35 = arith.constant 0 : index
    %62 = vector.load %arg4[%c0_34, %c0_35] : memref<1x128xf32, #tpu.memory_space<vmem>>, vector<1x128xf32>
    %63 = vector.broadcast %62 : vector<1x128xf32> to vector<256x128xf32>
    %64 = arith.mulf %59, %63 : vector<256x128xf32>
    %65 = arith.select %61, %59, %64 : vector<256x128xi1>, vector<256x128xf32>
    %66 = vector.shape_cast %65 : vector<256x128xf32> to vector<16x16x128xf32>
    %c0_36 = arith.constant 0 : index
    %c0_37 = arith.constant 0 : index
    %c0_38 = arith.constant 0 : index
    %c0_39 = arith.constant 0 : index
    %67 = vector.load %arg5[%c0_36, %c0_37, %c0_38, %c0_39] : memref<1x16x16x128xf32, #tpu.memory_space<vmem>>, vector<1x16x16x128xf32>
    %68 = vector.shape_cast %67 : vector<1x16x16x128xf32> to vector<16x16x128xf32>
    %69 = vector.shape_cast %66 : vector<16x16x128xf32> to vector<1x16x16x128xf32>
    tpu.vector_store %arg5[%c0_36, %c0_37, %c0_38, %c0_39], %69 {strides = array<i32>} : memref<1x16x16x128xf32, #tpu.memory_space<vmem>>, vector<1x16x16x128xf32>,
    return
  }
  func.func @transform_0(%arg0: i32) -> (i32, i32, i32, i32) {
    %c0_i32 = arith.constant 0 : i32
    %c0_i32_0 = arith.constant 0 : i32
    %c0_i32_1 = arith.constant 0 : i32
    %c0_i32_2 = arith.constant 0 : i32
    return %arg0, %c0_i32, %c0_i32_0, %c0_i32_1 : i32, i32, i32, i32
  }
  func.func @transform_1(%arg0: i32) -> (i32, i32, i32) {
    %c0_i32 = arith.constant 0 : i32
    %c0_i32_0 = arith.constant 0 : i32
    %c0_i32_1 = arith.constant 0 : i32
    %c0_i32_2 = arith.constant 0 : i32
    return %c0_i32, %c0_i32_0, %c0_i32_1 : i32, i32, i32
  }
  func.func @transform_2(%arg0: i32) -> (i32, i32) {
    %c0_i32 = arith.constant 0 : i32
    %c0_i32_0 = arith.constant 0 : i32
    %c0_i32_1 = arith.constant 0 : i32
    return %c0_i32, %c0_i32_0 : i32, i32
  }
  func.func @transform_3(%arg0: i32) -> (i32, i32) {
    %c0_i32 = arith.constant 0 : i32
    %c0_i32_0 = arith.constant 0 : i32
    %c0_i32_1 = arith.constant 0 : i32
    return %c0_i32, %c0_i32_0 : i32, i32
  }
  func.func @transform_4(%arg0: i32) -> (i32, i32, i32, i32) {
    %c0_i32 = arith.constant 0 : i32
    %c0_i32_0 = arith.constant 0 : i32
    %c0_i32_1 = arith.constant 0 : i32
    %c0_i32_2 = arith.constant 0 : i32
    return %arg0, %c0_i32, %c0_i32_0, %c0_i32_1 : i32, i32, i32, i32
  }
}

</mosaic_0001>

<llo_original>
// kernel: tpu_custom_call.1
$region0: #{tpu_custom_call.1}
  #allocation0 [shape = 'u32[]', space=smem, size = 0x4, offset = 0x4, fixed_abs, tag = 'smem constant byte address 0x4 - core index']
  #allocation1 [shape = 'u32[144,128]{1,0:T(1,128)}', space=vmem, size = 0x12000, scoped, tag = 'internal scratch']
  %s0 = inlined_call_operand.vmem [shape: f32[2,18,18,64], index: 0, kind: input, shape index: {}]
  %s1 = inlined_call_operand.vmem [shape: f32[9,64,128], index: 1, kind: input, shape index: {}]
  %s2 = inlined_call_operand.vmem [shape: f32[1,128], index: 2, kind: input, shape index: {}]
  %s3 = inlined_call_operand.vmem [shape: f32[1,128], index: 3, kind: input, shape index: {}]
  %s4 = inlined_call_operand.hbm [shape: f32[2,16,16,128], index: 4, kind: output, shape index: {}]
  %s5 = sld [smem:[#allocation0]]
  $region49: #{tpu_custom_call.1} parent=0
    _
  %s7 = ssub.s32 1, %s5
  %s8 = scalar_select 0, %s7, %s5
  $region1: #{tpu_custom_call.1} parent=0
    #allocation2 [shape = 'u8[262144]{0}', space=vmem, size = 0x40000, scoped, tag = 'output window, operand 0']
    #allocation3 [shape = 's32[2]{0}', space=sflag, size = 0x8, scoped, tag = 'scoped memory for tpu_custom_call.1']
    %9 = vsyncpa [#allocation3], 0
    %s10 = scalar_lea.sflag [#allocation3], 1
    %11 = vsyncpa %s10, 0
    loop: start=0, step=1, limit=4
    $region2: #{tpu_custom_call.1} parent=1 // loop_pre_header
      _
    $region3: #{tpu_custom_call.1} parent=1 // loop_header
      %s13 = sphi 0, %s17
      %p14 = scmp.ge.s32.totalorder %s13, 4
      %s23 = sphi 0, %s25
      %s26 = sphi 0, %s23
      %s27 = sphi 0, %s26
      %s43 = sphi 0, %s27
      %s47 = sphi 0, %s47
      %s49 = sphi 0, %s47
      %s50 = sphi 0, %s49
      %s64 = sphi 0, %s50
      %s68 = sphi 0, %s68
      %s70 = sphi 0, %s68
      %s71 = sphi 0, %s70
      %s85 = sphi 0, %s71
      %s89 = sphi 0, %s89
      %s91 = sphi 0, %s89
      %s92 = sphi 0, %s91
      %s106 = sphi 0, %s92
      %s112 = sphi 0, %s114
      %s115 = sphi 0, %s112
      %s116 = sphi 0, %s115
      %s132 = sphi 0, %s116
    $region4: #{tpu_custom_call.1} parent=1 // loop_header_branch
      %16 = sbr.rel (%p14) target = $region8
    $region5: #{tpu_custom_call.1} parent=1 // loop_body
      %s18 = ssub.s32 %s13, 1
      %s19 = ssub.s32 %s13, 2
      %s20 = sadd.s32 %s13, 1
      %s21 = ssub.s32 %s13, %s20
      %p22 = scmp.eq.s32.totalorder %s21, 0
      %s24 = sadd.s32 %s23, 1
      %s25 = scalar_select %p22, %s23, %s24
      %p28 = pneg %p22
      %p29 = scmp.eq.s32.totalorder %s13, 1
      %p30 = por %p28, %p29
      %p31 = scmp.ne.s32.totalorder %s23, %s26
      %p32 = scmp.eq.s32.totalorder %s13, 0
      %p33 = por %p31, %p32
      %p34 = scmp.ne.s32.totalorder %s23, %s26
      %p35 = scmp.eq.s32.totalorder %s18, 1
      %p36 = por %p34, %p35
      %p37 = scmp.ne.s32.totalorder %s26, %s27
      %p38 = scmp.eq.s32.totalorder %s18, 0
      %p39 = por %p37, %p38
      %p40 = scmp.ne.s32.totalorder %s26, %s27
      %p41 = scmp.eq.s32.totalorder %s19, 1
      %p42 = por %p40, %p41
      %p44 = scmp.ne.s32.totalorder %s27, %s43
      %p45 = scmp.eq.s32.totalorder %s19, 0
      %p46 = por %p44, %p45
      %s48 = sadd.s32 %s47, 1
      %p51 = scmp.eq.s32.totalorder %s13, 1
      %p52 = scmp.ne.s32.totalorder %s47, %s49
      %p53 = scmp.eq.s32.totalorder %s13, 0
      %p54 = por %p52, %p53
      %p55 = scmp.ne.s32.totalorder %s47, %s49
      %p56 = scmp.eq.s32.totalorder %s18, 1
      %p57 = por %p55, %p56
      %p58 = scmp.ne.s32.totalorder %s49, %s50
      %p59 = scmp.eq.s32.totalorder %s18, 0
      %p60 = por %p58, %p59
      %p61 = scmp.ne.s32.totalorder %s49, %s50
      %p62 = scmp.eq.s32.totalorder %s19, 1
      %p63 = por %p61, %p62
      %p65 = scmp.ne.s32.totalorder %s50, %s64
      %p66 = scmp.eq.s32.totalorder %s19, 0
      %p67 = por %p65, %p66
      %s69 = sadd.s32 %s68, 1
      %p72 = scmp.eq.s32.totalorder %s13, 1
      %p73 = scmp.ne.s32.totalorder %s68, %s70
      %p74 = scmp.eq.s32.totalorder %s13, 0
      %p75 = por %p73, %p74
      %p76 = scmp.ne.s32.totalorder %s68, %s70
      %p77 = scmp.eq.s32.totalorder %s18, 1
      %p78 = por %p76, %p77
      %p79 = scmp.ne.s32.totalorder %s70, %s71
      %p80 = scmp.eq.s32.totalorder %s18, 0
      %p81 = por %p79, %p80
      %p82 = scmp.ne.s32.totalorder %s70, %s71
      %p83 = scmp.eq.s32.totalorder %s19, 1
      %p84 = por %p82, %p83
      %p86 = scmp.ne.s32.totalorder %s71, %s85
      %p87 = scmp.eq.s32.totalorder %s19, 0
      %p88 = por %p86, %p87
      %s90 = sadd.s32 %s89, 1
      %p93 = scmp.eq.s32.totalorder %s13, 1
      %p94 = scmp.ne.s32.totalorder %s89, %s91
      %p95 = scmp.eq.s32.totalorder %s13, 0
      %p96 = por %p94, %p95
      %p97 = scmp.ne.s32.totalorder %s89, %s91
      %p98 = scmp.eq.s32.totalorder %s18, 1
      %p99 = por %p97, %p98
      %p100 = scmp.ne.s32.totalorder %s91, %s92
      %p101 = scmp.eq.s32.totalorder %s18, 0
      %p102 = por %p100, %p101
      %p103 = scmp.ne.s32.totalorder %s91, %s92
      %p104 = scmp.eq.s32.totalorder %s19, 1
      %p105 = por %p103, %p104
      %p107 = scmp.ne.s32.totalorder %s92, %s106
      %p108 = scmp.eq.s32.totalorder %s19, 0
      %p109 = por %p107, %p108
      %s110 = ssub.s32 %s13, %s20
      %p111 = scmp.eq.s32.totalorder %s110, 0
      %s113 = sadd.s32 %s112, 1
      %s114 = scalar_select %p111, %s112, %s113
      %p117 = pneg %p111
      %p118 = scmp.eq.s32.totalorder %s13, 1
      %p119 = por %p117, %p118
      %p120 = scmp.ne.s32.totalorder %s112, %s115
      %p121 = scmp.eq.s32.totalorder %s13, 0
      %p122 = por %p120, %p121
      %p123 = scmp.ne.s32.totalorder %s112, %s115
      %p124 = scmp.eq.s32.totalorder %s18, 1
      %p125 = por %p123, %p124
      %p126 = scmp.ne.s32.totalorder %s115, %s116
      %p127 = scmp.eq.s32.totalorder %s18, 0
      %p128 = por %p126, %p127
      %p129 = scmp.ne.s32.totalorder %s115, %s116
      %p130 = scmp.eq.s32.totalorder %s19, 1
      %p131 = por %p129, %p130
      %p133 = scmp.ne.s32.totalorder %s116, %s132
      %p134 = scmp.eq.s32.totalorder %s19, 0
      %p135 = por %p133, %p134
      %p136 = scmp.le.s32.totalorder 1, %s13
      %p137 = scmp.lt.s32.totalorder %s13, 3
      %p138 = pnand %p136, %p137
      %p139 = pneg %p138
      // Predicated region
      $region9: #{tpu_custom_call.1} parent=5 // pred_check
        _
      $region10: #{tpu_custom_call.1} parent=5 // pred_check_branch
        %141 = sbr.rel (%p138) target = $region12
      $region11: #{tpu_custom_call.1} parent=5 // pred_region
        %s142 = ssub.s32 %s13, 1
        // Predicated region
        $region13: #{tpu_custom_call.1} parent=11 // pred_check
          %p143 = pneg %p60
        $region14: #{tpu_custom_call.1} parent=11 // pred_check_branch
          %145 = sbr.rel (%p143) target = $region16
        $region15: #{tpu_custom_call.1} parent=11 // pred_region
          _
        $region16: #{tpu_custom_call.1} parent=11 // pred_fallthru
          _
        // Predicated region
        $region17: #{tpu_custom_call.1} parent=11 // pred_check
          %p146 = pneg %p81
        $region18: #{tpu_custom_call.1} parent=11 // pred_check_branch
          %148 = sbr.rel (%p146) target = $region20
        $region19: #{tpu_custom_call.1} parent=11 // pred_region
          _
        $region20: #{tpu_custom_call.1} parent=11 // pred_fallthru
          _
        // Predicated region
        $region21: #{tpu_custom_call.1} parent=11 // pred_check
          %p149 = pneg %p102
        $region22: #{tpu_custom_call.1} parent=11 // pred_check_branch
          %151 = sbr.rel (%p149) target = $region24
        $region23: #{tpu_custom_call.1} parent=11 // pred_region
          _
        $region24: #{tpu_custom_call.1} parent=11 // pred_fallthru
          _
      $region12: #{tpu_custom_call.1} parent=5 // pred_fallthru
        _
      %p152 = scmp.lt.s32.totalorder %s13, 2
      // Predicated region
      $region25: #{tpu_custom_call.1} parent=5 // pred_check
        %p153 = pneg %p152
      $region26: #{tpu_custom_call.1} parent=5 // pred_check_branch
        %155 = sbr.rel (%p153) target = $region28
      $region27: #{tpu_custom_call.1} parent=5 // pred_region
        // Predicated region
        $region29: #{tpu_custom_call.1} parent=27 // pred_check
          %p156 = pneg %p33
        $region30: #{tpu_custom_call.1} parent=27 // pred_check_branch
          %158 = sbr.rel (%p156) target = $region32
        $region31: #{tpu_custom_call.1} parent=27 // pred_region
          %p159 = scmp.lt.s32.totalorder %s13, 1
          %s160 = scalar_select %p159, %s13, 1
          %s161 = smul.addr %s160, 54
          %s162 = smul.addr %s161, 8
          %s163 = scalar_lea.vmem %s0, %s162
        $region32: #{tpu_custom_call.1} parent=27 // pred_fallthru
          _
      $region28: #{tpu_custom_call.1} parent=5 // pred_fallthru
        _
      %p164 = scmp.le.s32.totalorder 1, %s13
      %p165 = scmp.lt.s32.totalorder %s13, 3
      %p166 = pnand %p164, %p165
      %p167 = pneg %p166
      // Predicated region
      $region33: #{tpu_custom_call.1} parent=5 // pred_check
        _
      $region34: #{tpu_custom_call.1} parent=5 // pred_check_branch
        %169 = sbr.rel (%p166) target = $region36
      $region35: #{tpu_custom_call.1} parent=5 // pred_region
        %s170 = ssub.s32 %s13, 1
        %p171 = scmp.lt.s32.totalorder %s18, 1
        %s172 = scalar_select %p171, %s18, 1
        %s173 = smul.addr %s172, 54
        %s174 = smul.addr %s173, 8
        %s175 = scalar_lea.vmem %s0, %s174
        %p176 = pneg %p39
        %p177 = pneg %p36
        %p178 = pneg %p60
        %p179 = pneg %p57
        %p180 = pneg %p81
        %p181 = pneg %p78
        %p182 = pneg %p102
        %p183 = pneg %p99
        %p184 = pneg %p128
        %p185 = pneg %p125
        %s186 = sand.u32 %s115, 1
        %s187 = scalar_lea.sflag [#allocation3], %s186
        %s188 = sand.u32 %s115, 1
        %s189 = smul.addr %s188, 256
        %s190 = scalar_lea.vmem [#allocation2], %s189
        %p191 = scmp.lt.s32.totalorder %s18, 1
        %s192 = scalar_select %p191, %s18, 1
        %s193 = smul.addr %s192, 54
        %s194 = smul.addr %s193, 8
        %s195 = scalar_lea.vmem %s0, %s194
        %v196 = vld [vmem:[%s195] sm:$0xff]
        %v197 = vld [vmem:[%s195 + $0x8] sm:$0xff]
        %v198 = vld [vmem:[%s195 + $0x10] sm:$0x3]
        %v199 = vld [vmem:[%s195 + $0x18] sm:$0xff]
        %v200 = vld [vmem:[%s195 + $0x20] sm:$0xff]
        %v201 = vld [vmem:[%s195 + $0x28] sm:$0x3]
        %v202 = vld [vmem:[%s195 + $0x30] sm:$0xff]
        %v203 = vld [vmem:[%s195 + $0x38] sm:$0xff]
        %v204 = vld [vmem:[%s195 + $0x40] sm:$0x3]
        %v205 = vld [vmem:[%s195 + $0x48] sm:$0xff]
        %v206 = vld [vmem:[%s195 + $0x50] sm:$0xff]
        %v207 = vld [vmem:[%s195 + $0x58] sm:$0x3]
        %v208 = vld [vmem:[%s195 + $0x60] sm:$0xff]
        %v209 = vld [vmem:[%s195 + $0x68] sm:$0xff]
        %v210 = vld [vmem:[%s195 + $0x70] sm:$0x3]
        %v211 = vld [vmem:[%s195 + $0x78] sm:$0xff]
        %v212 = vld [vmem:[%s195 + $0x80] sm:$0xff]
        %v213 = vld [vmem:[%s195 + $0x88] sm:$0x3]
        %v214 = vld [vmem:[%s195 + $0x90] sm:$0xff]
        %v215 = vld [vmem:[%s195 + $0x98] sm:$0xff]
        %v216 = vld [vmem:[%s195 + $0xa0] sm:$0x3]
        %v217 = vld [vmem:[%s195 + $0xa8] sm:$0xff]
        %v218 = vld [vmem:[%s195 + $0xb0] sm:$0xff]
        %v219 = vld [vmem:[%s195 + $0xb8] sm:$0x3]
        %v220 = vld [vmem:[%s195 + $0xc0] sm:$0xff]
        %v221 = vld [vmem:[%s195 + $0xc8] sm:$0xff]
        %v222 = vld [vmem:[%s195 + $0xd0] sm:$0x3]
        %v223 = vld [vmem:[%s195 + $0xd8] sm:$0xff]
        %v224 = vld [vmem:[%s195 + $0xe0] sm:$0xff]
        %v225 = vld [vmem:[%s195 + $0xe8] sm:$0x3]
        %v226 = vld [vmem:[%s195 + $0xf0] sm:$0xff]
        %v227 = vld [vmem:[%s195 + $0xf8] sm:$0xff]
        %v228 = vld [vmem:[%s195 + $0x100] sm:$0x3]
        %v229 = vld [vmem:[%s195 + $0x108] sm:$0xff]
        %v230 = vld [vmem:[%s195 + $0x110] sm:$0xff]
        %v231 = vld [vmem:[%s195 + $0x118] sm:$0x3]
        %v232 = vld [vmem:[%s195 + $0x120] sm:$0xff]
        %v233 = vld [vmem:[%s195 + $0x128] sm:$0xff]
        %v234 = vld [vmem:[%s195 + $0x130] sm:$0x3]
        %v235 = vld [vmem:[%s195 + $0x138] sm:$0xff]
        %v236 = vld [vmem:[%s195 + $0x140] sm:$0xff]
        %v237 = vld [vmem:[%s195 + $0x148] sm:$0x3]
        %v238 = vld [vmem:[%s195 + $0x150] sm:$0xff]
        %v239 = vld [vmem:[%s195 + $0x158] sm:$0xff]
        %v240 = vld [vmem:[%s195 + $0x160] sm:$0x3]
        %v241 = vld [vmem:[%s195 + $0x168] sm:$0xff]
        %v242 = vld [vmem:[%s195 + $0x170] sm:$0xff]
        %v243 = vld [vmem:[%s195 + $0x178] sm:$0x3]
        %v244 = vld [vmem:[%s195 + $0x180] sm:$0xff]
        %v245 = vld [vmem:[%s195 + $0x188] sm:$0xff]
        %v246 = vld [vmem:[%s195 + $0x190] sm:$0x3]
        %v247 = vld [vmem:[%s195 + $0x198] sm:$0xff]
        %v248 = vld [vmem:[%s195 + $0x1a0] sm:$0xff]
        %v249 = vld [vmem:[%s195 + $0x1a8] sm:$0x3]
        %v250 = vld [vmem:[%s1] sm:$0xff]
        %v251 = vld [vmem:[%s1 + $0x8] sm:$0xff]
        %v252 = vld [vmem:[%s1 + $0x10] sm:$0xff]
        %v253 = vld [vmem:[%s1 + $0x18] sm:$0xff]
        %v254 = vld [vmem:[%s1 + $0x20] sm:$0xff]
        %v255 = vld [vmem:[%s1 + $0x28] sm:$0xff]
        %v256 = vld [vmem:[%s1 + $0x30] sm:$0xff]
        %v257 = vld [vmem:[%s1 + $0x38] sm:$0xff]
        %vm306 = vcmask 1046528
        %v307 = vrot.slane %v196, 1
        %v308 = vrot.slane %v197, 1
        %v309 = vsel %vm306, %v307, %v308
        %v310 = vrot.slane %v198, 1
        %v311 = vsel %vm306, %v308, %v310
        %v312 = vrot.slane %v199, 1
        %v313 = vrot.slane %v200, 1
        %v314 = vsel %vm306, %v312, %v313
        %v315 = vrot.slane %v201, 1
        %v316 = vsel %vm306, %v313, %v315
        %v317 = vrot.slane %v202, 1
        %v318 = vrot.slane %v203, 1
        %v319 = vsel %vm306, %v317, %v318
        %v320 = vrot.slane %v204, 1
        %v321 = vsel %vm306, %v318, %v320
        %v322 = vrot.slane %v205, 1
        %v323 = vrot.slane %v206, 1
        %v324 = vsel %vm306, %v322, %v323
        %v325 = vrot.slane %v207, 1
        %v326 = vsel %vm306, %v323, %v325
        %v327 = vrot.slane %v208, 1
        %v328 = vrot.slane %v209, 1
        %v329 = vsel %vm306, %v327, %v328
        %v330 = vrot.slane %v210, 1
        %v331 = vsel %vm306, %v328, %v330
        %v332 = vrot.slane %v211, 1
        %v333 = vrot.slane %v212, 1
        %v334 = vsel %vm306, %v332, %v333
        %v335 = vrot.slane %v213, 1
        %v336 = vsel %vm306, %v333, %v335
        %v337 = vrot.slane %v214, 1
        %v338 = vrot.slane %v215, 1
        %v339 = vsel %vm306, %v337, %v338
        %v340 = vrot.slane %v216, 1
        %v341 = vsel %vm306, %v338, %v340
        %v342 = vrot.slane %v217, 1
        %v343 = vrot.slane %v218, 1
        %v344 = vsel %vm306, %v342, %v343
        %v345 = vrot.slane %v219, 1
        %v346 = vsel %vm306, %v343, %v345
        %v347 = vrot.slane %v220, 1
        %v348 = vrot.slane %v221, 1
        %v349 = vsel %vm306, %v347, %v348
        %v350 = vrot.slane %v222, 1
        %v351 = vsel %vm306, %v348, %v350
        %v352 = vrot.slane %v223, 1
        %v353 = vrot.slane %v224, 1
        %v354 = vsel %vm306, %v352, %v353
        %v355 = vrot.slane %v225, 1
        %v356 = vsel %vm306, %v353, %v355
        %v357 = vrot.slane %v226, 1
        %v358 = vrot.slane %v227, 1
        %v359 = vsel %vm306, %v357, %v358
        %v360 = vrot.slane %v228, 1
        %v361 = vsel %vm306, %v358, %v360
        %v362 = vrot.slane %v229, 1
        %v363 = vrot.slane %v230, 1
        %v364 = vsel %vm306, %v362, %v363
        %v365 = vrot.slane %v231, 1
        %v366 = vsel %vm306, %v363, %v365
        %v367 = vrot.slane %v232, 1
        %v368 = vrot.slane %v233, 1
        %v369 = vsel %vm306, %v367, %v368
        %v370 = vrot.slane %v234, 1
        %v371 = vsel %vm306, %v368, %v370
        %v372 = vrot.slane %v235, 1
        %v373 = vrot.slane %v236, 1
        %v374 = vsel %vm306, %v372, %v373
        %v375 = vrot.slane %v237, 1
        %v376 = vsel %vm306, %v373, %v375
        %v377 = vrot.slane %v238, 1
        %v378 = vrot.slane %v239, 1
        %v379 = vsel %vm306, %v377, %v378
        %v380 = vrot.slane %v240, 1
        %v381 = vsel %vm306, %v378, %v380
        %v382 = vrot.slane %v241, 1
        %v383 = vrot.slane %v242, 1
        %v384 = vsel %vm306, %v382, %v383
        %v385 = vrot.slane %v243, 1
        %v386 = vsel %vm306, %v383, %v385
        %s387 = scalar_lea.vmem %s1, 64
        %v388 = vld [vmem:[%s387] sm:$0xff]
        %v389 = vld [vmem:[%s387 + $0x8] sm:$0xff]
        %v390 = vld [vmem:[%s387 + $0x10] sm:$0xff]
        %v391 = vld [vmem:[%s387 + $0x18] sm:$0xff]
        %v392 = vld [vmem:[%s387 + $0x20] sm:$0xff]
        %v393 = vld [vmem:[%s387 + $0x28] sm:$0xff]
        %v394 = vld [vmem:[%s387 + $0x30] sm:$0xff]
        %v395 = vld [vmem:[%s387 + $0x38] sm:$0xff]
        %vm396 = vcmask 523264
        %v397 = vsel %vm396, %v309, 0
        %v399 = vsel %vm396, %v311, 0
        %v401 = vsel %vm396, %v314, 0
        %v403 = vsel %vm396, %v316, 0
        %v405 = vsel %vm396, %v319, 0
        %v407 = vsel %vm396, %v321, 0
        %v409 = vsel %vm396, %v324, 0
        %v411 = vsel %vm396, %v326, 0
        %v413 = vsel %vm396, %v329, 0
        %v415 = vsel %vm396, %v331, 0
        %v417 = vsel %vm396, %v334, 0
        %v419 = vsel %vm396, %v336, 0
        %v421 = vsel %vm396, %v339, 0
        %v423 = vsel %vm396, %v341, 0
        %v425 = vsel %vm396, %v344, 0
        %v427 = vsel %vm396, %v346, 0
        %v429 = vsel %vm396, %v349, 0
        %v431 = vsel %vm396, %v351, 0
        %v433 = vsel %vm396, %v354, 0
        %v435 = vsel %vm396, %v356, 0
        %v437 = vsel %vm396, %v359, 0
        %v439 = vsel %vm396, %v361, 0
        %v441 = vsel %vm396, %v364, 0
        %v443 = vsel %vm396, %v366, 0
        %v445 = vsel %vm396, %v369, 0
        %v447 = vsel %vm396, %v371, 0
        %v449 = vsel %vm396, %v374, 0
        %v451 = vsel %vm396, %v376, 0
        %v453 = vsel %vm396, %v379, 0
        %v455 = vsel %vm396, %v381, 0
        %v457 = vsel %vm396, %v384, 0
        %v459 = vsel %vm396, %v386, 0
        %461 = vmatprep.subr.mxu0 0.0
        %462 = vmatpush1.msra.mxu0 0.0
        %463 = vmatprep.subr.mxu0 0.0
        %464 = vmatpush1.msra.mxu0 0.0
        %465 = vmatprep.subr.mxu0 0.0
        %466 = vmatpush1.msra.mxu0 0.0
        %467 = vmatprep.subr.mxu0 0.0
        %468 = vmatpush1.msra.mxu0 0.0
        %469 = vmatprep.subr.mxu0 0.0
        %470 = vmatpush1.msra.mxu0 0.0
        %471 = vmatprep.subr.mxu0 0.0
        %472 = vmatpush1.msra.mxu0 0.0
        %473 = vmatprep.subr.mxu0 0.0
        %474 = vmatpush1.msra.mxu0 0.0
        %475 = vmatprep.subr.mxu0 0.0
        %476 = vmatpush1.msra.mxu0 0.0
        %477 = vmatprep.subr.mxu0 0.0
        %478 = vmatpush1.msra.mxu0 %v395
        %479 = vmatprep.subr.mxu0 0.0
        %480 = vmatpush1.msra.mxu0 %v394
        %481 = vmatprep.subr.mxu0 0.0
        %482 = vmatpush1.msra.mxu0 %v393
        %483 = vmatprep.subr.mxu0 0.0
        %484 = vmatpush1.msra.mxu0 %v392
        %485 = vmatprep.subr.mxu0 0.0
        %486 = vmatpush1.msra.mxu0 %v391
        %487 = vmatprep.subr.mxu0 0.0
        %488 = vmatpush1.msra.mxu0 %v390
        %489 = vmatprep.subr.mxu0 0.0
        %490 = vmatpush1.msra.mxu0 %v389
        %491 = vmatprep.subr.mxu0 0.0
        %492 = vmatpush1.msra.mxu0 %v388
        %493 = vmatprep.subr.mxu0 0.0
        %494 = vmatpush2.msra.mxu0 0.0
        %495 = vmatprep.subr.mxu0 0.0
        %496 = vmatpush2.msra.mxu0 0.0
        %497 = vmatprep.subr.mxu0 0.0
        %498 = vmatpush2.msra.mxu0 0.0
        %499 = vmatprep.subr.mxu0 0.0
        %500 = vmatpush2.msra.mxu0 0.0
        %501 = vmatprep.subr.mxu0 0.0
        %502 = vmatpush2.msra.mxu0 0.0
        %503 = vmatprep.subr.mxu0 0.0
        %504 = vmatpush2.msra.mxu0 0.0
        %505 = vmatprep.subr.mxu0 0.0
        %506 = vmatpush2.msra.mxu0 0.0
        %507 = vmatprep.subr.mxu0 0.0
        %508 = vmatpush2.msra.mxu0 0.0
        %509 = vmatprep.subr.mxu0 0.0
        %510 = vmatpush2.msra.mxu0 0.0
        %511 = vmatprep.subr.mxu0 0.0
        %512 = vmatpush2.msra.mxu0 0.0
        %513 = vmatprep.subr.mxu0 0.0
        %514 = vmatpush2.msra.mxu0 0.0
        %515 = vmatprep.subr.mxu0 0.0
        %516 = vmatpush2.msra.mxu0 0.0
        %517 = vmatprep.subr.mxu0 0.0
        %518 = vmatpush2.msra.mxu0 0.0
        %519 = vmatprep.subr.mxu0 0.0
        %520 = vmatpush2.msra.mxu0 0.0
        %521 = vmatprep.subr.mxu0 0.0
        %522 = vmatpush2.msra.mxu0 0.0
        %523 = vmatprep.subr.mxu0 0.0
        %524 = vmatpush2.msra.mxu0 0.0
        %525 = vmatprep.mubr.f32.mxu0 0.0
        %526 = vmatmul.mubr.f32.gmra.mxu0 %v397
        %v527 = vpop.f32.mrf.mxu0
        %v528 = vadd.f32 0.0, %v527
        %v529 = vpop.f32.mrf.mxu0
        %530 = vmatprep.mubr.f32.mxu0 0.0
        %531 = vmatmul.mubr.f32.gmra.mxu0 %v399
        %v532 = vpop.f32.mrf.mxu0
        %v533 = vadd.f32 0.0, %v532
        %v534 = vpop.f32.mrf.mxu0
        %535 = vmatprep.mubr.f32.mxu0 0.0
        %536 = vmatmul.mubr.f32.gmra.mxu0 %v401
        %v537 = vpop.f32.mrf.mxu0
        %v538 = vadd.f32 0.0, %v537
        %v539 = vpop.f32.mrf.mxu0
        %540 = vmatprep.mubr.f32.mxu0 0.0
        %541 = vmatmul.mubr.f32.gmra.mxu0 %v403
        %v542 = vpop.f32.mrf.mxu0
        %v543 = vadd.f32 0.0, %v542
        %v544 = vpop.f32.mrf.mxu0
        %545 = vmatprep.mubr.f32.mxu0 0.0
        %546 = vmatmul.mubr.f32.gmra.mxu0 %v405
        %v547 = vpop.f32.mrf.mxu0
        %v548 = vadd.f32 0.0, %v547
        %v549 = vpop.f32.mrf.mxu0
        %550 = vmatprep.mubr.f32.mxu0 0.0
        %551 = vmatmul.mubr.f32.gmra.mxu0 %v407
        %v552 = vpop.f32.mrf.mxu0
        %v553 = vadd.f32 0.0, %v552
        %v554 = vpop.f32.mrf.mxu0
        %555 = vmatprep.mubr.f32.mxu0 0.0
        %556 = vmatmul.mubr.f32.gmra.mxu0 %v409
        %v557 = vpop.f32.mrf.mxu0
        %v558 = vadd.f32 0.0, %v557
        %v559 = vpop.f32.mrf.mxu0
        %560 = vmatprep.mubr.f32.mxu0 0.0
        %561 = vmatmul.mubr.f32.gmra.mxu0 %v411
        %v562 = vpop.f32.mrf.mxu0
        %v563 = vadd.f32 0.0, %v562
        %v564 = vpop.f32.mrf.mxu0
        %565 = vmatprep.mubr.f32.mxu0 0.0
        %566 = vmatmul.mubr.f32.gmra.mxu0 %v413
        %v567 = vpop.f32.mrf.mxu0
        %v568 = vadd.f32 0.0, %v567
        %v569 = vpop.f32.mrf.mxu0
        %570 = vmatprep.mubr.f32.mxu0 0.0
        %571 = vmatmul.mubr.f32.gmra.mxu0 %v415
        %v572 = vpop.f32.mrf.mxu0
        %v573 = vadd.f32 0.0, %v572
        %v574 = vpop.f32.mrf.mxu0
        %575 = vmatprep.mubr.f32.mxu0 0.0
        %576 = vmatmul.mubr.f32.gmra.mxu0 %v417
        %v577 = vpop.f32.mrf.mxu0
        %v578 = vadd.f32 0.0, %v577
        %v579 = vpop.f32.mrf.mxu0
        %580 = vmatprep.mubr.f32.mxu0 0.0
        %581 = vmatmul.mubr.f32.gmra.mxu0 %v419
        %v582 = vpop.f32.mrf.mxu0
        %v583 = vadd.f32 0.0, %v582
        %v584 = vpop.f32.mrf.mxu0
        %585 = vmatprep.mubr.f32.mxu0 0.0
        %586 = vmatmul.mubr.f32.gmra.mxu0 %v421
        %v587 = vpop.f32.mrf.mxu0
        %v588 = vadd.f32 0.0, %v587
        %v589 = vpop.f32.mrf.mxu0
        %590 = vmatprep.mubr.f32.mxu0 0.0
        %591 = vmatmul.mubr.f32.gmra.mxu0 %v423
        %v592 = vpop.f32.mrf.mxu0
        %v593 = vadd.f32 0.0, %v592
        %v594 = vpop.f32.mrf.mxu0
        %595 = vmatprep.mubr.f32.mxu0 0.0
        %596 = vmatmul.mubr.f32.gmra.mxu0 %v425
        %v597 = vpop.f32.mrf.mxu0
        %v598 = vadd.f32 0.0, %v597
        %v599 = vpop.f32.mrf.mxu0
        %600 = vmatprep.mubr.f32.mxu0 0.0
        %601 = vmatmul.mubr.f32.gmra.mxu0 %v427
        %v602 = vpop.f32.mrf.mxu0
        %v603 = vadd.f32 0.0, %v602
        %v604 = vpop.f32.mrf.mxu0
        %605 = vmatprep.mubr.f32.mxu0 0.0
        %606 = vmatmul.mubr.f32.gmra.mxu0 %v429
        %v607 = vpop.f32.mrf.mxu0
        %v608 = vadd.f32 0.0, %v607
        %v609 = vpop.f32.mrf.mxu0
        %610 = vmatprep.mubr.f32.mxu0 0.0
        %611 = vmatmul.mubr.f32.gmra.mxu0 %v431
        %v612 = vpop.f32.mrf.mxu0
        %v613 = vadd.f32 0.0, %v612
        %v614 = vpop.f32.mrf.mxu0
        %615 = vmatprep.mubr.f32.mxu0 0.0
        %616 = vmatmul.mubr.f32.gmra.mxu0 %v433
        %v617 = vpop.f32.mrf.mxu0
        %v618 = vadd.f32 0.0, %v617
        %v619 = vpop.f32.mrf.mxu0
        %620 = vmatprep.mubr.f32.mxu0 0.0
        %621 = vmatmul.mubr.f32.gmra.mxu0 %v435
        %v622 = vpop.f32.mrf.mxu0
        %v623 = vadd.f32 0.0, %v622
        %v624 = vpop.f32.mrf.mxu0
        %625 = vmatprep.mubr.f32.mxu0 0.0
        %626 = vmatmul.mubr.f32.gmra.mxu0 %v437
        %v627 = vpop.f32.mrf.mxu0
        %v628 = vadd.f32 0.0, %v627
        %v629 = vpop.f32.mrf.mxu0
        %630 = vmatprep.mubr.f32.mxu0 0.0
        %631 = vmatmul.mubr.f32.gmra.mxu0 %v439
        %v632 = vpop.f32.mrf.mxu0
        %v633 = vadd.f32 0.0, %v632
        %v634 = vpop.f32.mrf.mxu0
        %635 = vmatprep.mubr.f32.mxu0 0.0
        %636 = vmatmul.mubr.f32.gmra.mxu0 %v441
        %v637 = vpop.f32.mrf.mxu0
        %v638 = vadd.f32 0.0, %v637
        %v639 = vpop.f32.mrf.mxu0
        %640 = vmatprep.mubr.f32.mxu0 0.0
        %641 = vmatmul.mubr.f32.gmra.mxu0 %v443
        %v642 = vpop.f32.mrf.mxu0
        %v643 = vadd.f32 0.0, %v642
        %v644 = vpop.f32.mrf.mxu0
        %645 = vmatprep.mubr.f32.mxu0 0.0
        %646 = vmatmul.mubr.f32.gmra.mxu0 %v445
        %v647 = vpop.f32.mrf.mxu0
        %v648 = vadd.f32 0.0, %v647
        %v649 = vpop.f32.mrf.mxu0
        %650 = vmatprep.mubr.f32.mxu0 0.0
        %651 = vmatmul.mubr.f32.gmra.mxu0 %v447
        %v652 = vpop.f32.mrf.mxu0
        %v653 = vadd.f32 0.0, %v652
        %v654 = vpop.f32.mrf.mxu0
        %655 = vmatprep.mubr.f32.mxu0 0.0
        %656 = vmatmul.mubr.f32.gmra.mxu0 %v449
        %v657 = vpop.f32.mrf.mxu0
        %v658 = vadd.f32 0.0, %v657
        %v659 = vpop.f32.mrf.mxu0
        %660 = vmatprep.mubr.f32.mxu0 0.0
        %661 = vmatmul.mubr.f32.gmra.mxu0 %v451
        %v662 = vpop.f32.mrf.mxu0
        %v663 = vadd.f32 0.0, %v662
        %v664 = vpop.f32.mrf.mxu0
        %665 = vmatprep.mubr.f32.mxu0 0.0
        %666 = vmatmul.mubr.f32.gmra.mxu0 %v453
        %v667 = vpop.f32.mrf.mxu0
        %v668 = vadd.f32 0.0, %v667
        %v669 = vpop.f32.mrf.mxu0
        %670 = vmatprep.mubr.f32.mxu0 0.0
        %671 = vmatmul.mubr.f32.gmra.mxu0 %v455
        %v672 = vpop.f32.mrf.mxu0
        %v673 = vadd.f32 0.0, %v672
        %v674 = vpop.f32.mrf.mxu0
        %675 = vmatprep.mubr.f32.mxu0 0.0
        %676 = vmatmul.mubr.f32.gmra.mxu0 %v457
        %v677 = vpop.f32.mrf.mxu0
        %v678 = vadd.f32 0.0, %v677
        %v679 = vpop.f32.mrf.mxu0
        %680 = vmatprep.mubr.f32.mxu0 0.0
        %681 = vmatmul.mubr.f32.gmra.mxu0 %v459
        %v682 = vpop.f32.mrf.mxu0
        %v683 = vadd.f32 0.0, %v682
        %v684 = vpop.f32.mrf.mxu0
        %685 = vdwg.mxu0
        %v686 = vsel %vm396, %v196, 0
        %v688 = vsel %vm396, %v197, 0
        %v690 = vsel %vm396, %v199, 0
        %v692 = vsel %vm396, %v200, 0
        %v694 = vsel %vm396, %v202, 0
        %v696 = vsel %vm396, %v203, 0
        %v698 = vsel %vm396, %v205, 0
        %v700 = vsel %vm396, %v206, 0
        %v702 = vsel %vm396, %v208, 0
        %v704 = vsel %vm396, %v209, 0
        %v706 = vsel %vm396, %v211, 0
        %v708 = vsel %vm396, %v212, 0
        %v710 = vsel %vm396, %v214, 0
        %v712 = vsel %vm396, %v215, 0
        %v714 = vsel %vm396, %v217, 0
        %v716 = vsel %vm396, %v218, 0
        %v718 = vsel %vm396, %v220, 0
        %v720 = vsel %vm396, %v221, 0
        %v722 = vsel %vm396, %v223, 0
        %v724 = vsel %vm396, %v224, 0
        %v726 = vsel %vm396, %v226, 0
        %v728 = vsel %vm396, %v227, 0
        %v730 = vsel %vm396, %v229, 0
        %v732 = vsel %vm396, %v230, 0
        %v734 = vsel %vm396, %v232, 0
        %v736 = vsel %vm396, %v233, 0
        %v738 = vsel %vm396, %v235, 0
        %v740 = vsel %vm396, %v236, 0
        %v742 = vsel %vm396, %v238, 0
        %v744 = vsel %vm396, %v239, 0
        %v746 = vsel %vm396, %v241, 0
        %v748 = vsel %vm396, %v242, 0
        %750 = vmatprep.subr.mxu0 0.0
        %751 = vmatpush1.msra.mxu0 0.0
        %752 = vmatprep.subr.mxu0 0.0
        %753 = vmatpush1.msra.mxu0 0.0
        %754 = vmatprep.subr.mxu0 0.0
        %755 = vmatpush1.msra.mxu0 0.0
        %756 = vmatprep.subr.mxu0 0.0
        %757 = vmatpush1.msra.mxu0 0.0
        %758 = vmatprep.subr.mxu0 0.0
        %759 = vmatpush1.msra.mxu0 0.0
        %760 = vmatprep.subr.mxu0 0.0
        %761 = vmatpush1.msra.mxu0 0.0
        %762 = vmatprep.subr.mxu0 0.0
        %763 = vmatpush1.msra.mxu0 0.0
        %764 = vmatprep.subr.mxu0 0.0
        %765 = vmatpush1.msra.mxu0 0.0
        %766 = vmatprep.subr.mxu0 0.0
        %767 = vmatpush1.msra.mxu0 %v257
        %768 = vmatprep.subr.mxu0 0.0
        %769 = vmatpush1.msra.mxu0 %v256
        %770 = vmatprep.subr.mxu0 0.0
        %771 = vmatpush1.msra.mxu0 %v255
        %772 = vmatprep.subr.mxu0 0.0
        %773 = vmatpush1.msra.mxu0 %v254
        %774 = vmatprep.subr.mxu0 0.0
        %775 = vmatpush1.msra.mxu0 %v253
        %776 = vmatprep.subr.mxu0 0.0
        %777 = vmatpush1.msra.mxu0 %v252
        %778 = vmatprep.subr.mxu0 0.0
        %779 = vmatpush1.msra.mxu0 %v251
        %780 = vmatprep.subr.mxu0 0.0
        %781 = vmatpush1.msra.mxu0 %v250
        %782 = vmatprep.subr.mxu0 0.0
        %783 = vmatpush2.msra.mxu0 0.0
        %784 = vmatprep.subr.mxu0 0.0
        %785 = vmatpush2.msra.mxu0 0.0
        %786 = vmatprep.subr.mxu0 0.0
        %787 = vmatpush2.msra.mxu0 0.0
        %788 = vmatprep.subr.mxu0 0.0
        %789 = vmatpush2.msra.mxu0 0.0
        %790 = vmatprep.subr.mxu0 0.0
        %791 = vmatpush2.msra.mxu0 0.0
        %792 = vmatprep.subr.mxu0 0.0
        %793 = vmatpush2.msra.mxu0 0.0
        %794 = vmatprep.subr.mxu0 0.0
        %795 = vmatpush2.msra.mxu0 0.0
        %796 = vmatprep.subr.mxu0 0.0
        %797 = vmatpush2.msra.mxu0 0.0
        %798 = vmatprep.subr.mxu0 0.0
        %799 = vmatpush2.msra.mxu0 0.0
        %800 = vmatprep.subr.mxu0 0.0
        %801 = vmatpush2.msra.mxu0 0.0
        %802 = vmatprep.subr.mxu0 0.0
        %803 = vmatpush2.msra.mxu0 0.0
        %804 = vmatprep.subr.mxu0 0.0
        %805 = vmatpush2.msra.mxu0 0.0
        %806 = vmatprep.subr.mxu0 0.0
        %807 = vmatpush2.msra.mxu0 0.0
        %808 = vmatprep.subr.mxu0 0.0
        %809 = vmatpush2.msra.mxu0 0.0
        %810 = vmatprep.subr.mxu0 0.0
        %811 = vmatpush2.msra.mxu0 0.0
        %812 = vmatprep.subr.mxu0 0.0
        %813 = vmatpush2.msra.mxu0 0.0
        %814 = vmatprep.mubr.f32.mxu0 0.0
        %815 = vmatmul.mubr.f32.gmra.mxu0 %v686
        %v816 = vpop.f32.mrf.mxu0
        %v817 = vadd.f32 %v528, %v816
        %v818 = vpop.f32.mrf.mxu0
        %819 = vmatprep.mubr.f32.mxu0 0.0
        %820 = vmatmul.mubr.f32.gmra.mxu0 %v688
        %v821 = vpop.f32.mrf.mxu0
        %v822 = vadd.f32 %v533, %v821
        %v823 = vpop.f32.mrf.mxu0
        %824 = vmatprep.mubr.f32.mxu0 0.0
        %825 = vmatmul.mubr.f32.gmra.mxu0 %v690
        %v826 = vpop.f32.mrf.mxu0
        %v827 = vadd.f32 %v538, %v826
        %v828 = vpop.f32.mrf.mxu0
        %829 = vmatprep.mubr.f32.mxu0 0.0
        %830 = vmatmul.mubr.f32.gmra.mxu0 %v692
        %v831 = vpop.f32.mrf.mxu0
        %v832 = vadd.f32 %v543, %v831
        %v833 = vpop.f32.mrf.mxu0
        %834 = vmatprep.mubr.f32.mxu0 0.0
        %835 = vmatmul.mubr.f32.gmra.mxu0 %v694
        %v836 = vpop.f32.mrf.mxu0
        %v837 = vadd.f32 %v548, %v836
        %v838 = vpop.f32.mrf.mxu0
        %839 = vmatprep.mubr.f32.mxu0 0.0
        %840 = vmatmul.mubr.f32.gmra.mxu0 %v696
        %v841 = vpop.f32.mrf.mxu0
        %v842 = vadd.f32 %v553, %v841
        %v843 = vpop.f32.mrf.mxu0
        %844 = vmatprep.mubr.f32.mxu0 0.0
        %845 = vmatmul.mubr.f32.gmra.mxu0 %v698
        %v846 = vpop.f32.mrf.mxu0
        %v847 = vadd.f32 %v558, %v846
        %v848 = vpop.f32.mrf.mxu0
        %849 = vmatprep.mubr.f32.mxu0 0.0
        %850 = vmatmul.mubr.f32.gmra.mxu0 %v700
        %v851 = vpop.f32.mrf.mxu0
        %v852 = vadd.f32 %v563, %v851
        %v853 = vpop.f32.mrf.mxu0
        %854 = vmatprep.mubr.f32.mxu0 0.0
        %855 = vmatmul.mubr.f32.gmra.mxu0 %v702
        %v856 = vpop.f32.mrf.mxu0
        %v857 = vadd.f32 %v568, %v856
        %v858 = vpop.f32.mrf.mxu0
        %859 = vmatprep.mubr.f32.mxu0 0.0
        %860 = vmatmul.mubr.f32.gmra.mxu0 %v704
        %v861 = vpop.f32.mrf.mxu0
        %v862 = vadd.f32 %v573, %v861
        %v863 = vpop.f32.mrf.mxu0
        %864 = vmatprep.mubr.f32.mxu0 0.0
        %865 = vmatmul.mubr.f32.gmra.mxu0 %v706
        %v866 = vpop.f32.mrf.mxu0
        %v867 = vadd.f32 %v578, %v866
        %v868 = vpop.f32.mrf.mxu0
        %869 = vmatprep.mubr.f32.mxu0 0.0
        %870 = vmatmul.mubr.f32.gmra.mxu0 %v708
        %v871 = vpop.f32.mrf.mxu0
        %v872 = vadd.f32 %v583, %v871
        %v873 = vpop.f32.mrf.mxu0
        %874 = vmatprep.mubr.f32.mxu0 0.0
        %875 = vmatmul.mubr.f32.gmra.mxu0 %v710
        %v876 = vpop.f32.mrf.mxu0
        %v877 = vadd.f32 %v588, %v876
        %v878 = vpop.f32.mrf.mxu0
        %879 = vmatprep.mubr.f32.mxu0 0.0
        %880 = vmatmul.mubr.f32.gmra.mxu0 %v712
        %v881 = vpop.f32.mrf.mxu0
        %v882 = vadd.f32 %v593, %v881
        %v883 = vpop.f32.mrf.mxu0
        %884 = vmatprep.mubr.f32.mxu0 0.0
        %885 = vmatmul.mubr.f32.gmra.mxu0 %v714
        %v886 = vpop.f32.mrf.mxu0
        %v887 = vadd.f32 %v598, %v886
        %v888 = vpop.f32.mrf.mxu0
        %889 = vmatprep.mubr.f32.mxu0 0.0
        %890 = vmatmul.mubr.f32.gmra.mxu0 %v716
        %v891 = vpop.f32.mrf.mxu0
        %v892 = vadd.f32 %v603, %v891
        %v893 = vpop.f32.mrf.mxu0
        %894 = vmatprep.mubr.f32.mxu0 0.0
        %895 = vmatmul.mubr.f32.gmra.mxu0 %v718
        %v896 = vpop.f32.mrf.mxu0
        %v897 = vadd.f32 %v608, %v896
        %v898 = vpop.f32.mrf.mxu0
        %899 = vmatprep.mubr.f32.mxu0 0.0
        %900 = vmatmul.mubr.f32.gmra.mxu0 %v720
        %v901 = vpop.f32.mrf.mxu0
        %v902 = vadd.f32 %v613, %v901
        %v903 = vpop.f32.mrf.mxu0
        %904 = vmatprep.mubr.f32.mxu0 0.0
        %905 = vmatmul.mubr.f32.gmra.mxu0 %v722
        %v906 = vpop.f32.mrf.mxu0
        %v907 = vadd.f32 %v618, %v906
        %v908 = vpop.f32.mrf.mxu0
        %909 = vmatprep.mubr.f32.mxu0 0.0
        %910 = vmatmul.mubr.f32.gmra.mxu0 %v724
        %v911 = vpop.f32.mrf.mxu0
        %v912 = vadd.f32 %v623, %v911
        %v913 = vpop.f32.mrf.mxu0
        %914 = vmatprep.mubr.f32.mxu0 0.0
        %915 = vmatmul.mubr.f32.gmra.mxu0 %v726
        %v916 = vpop.f32.mrf.mxu0
        %v917 = vadd.f32 %v628, %v916
        %v918 = vpop.f32.mrf.mxu0
        %919 = vmatprep.mubr.f32.mxu0 0.0
        %920 = vmatmul.mubr.f32.gmra.mxu0 %v728
        %v921 = vpop.f32.mrf.mxu0
        %v922 = vadd.f32 %v633, %v921
        %v923 = vpop.f32.mrf.mxu0
        %924 = vmatprep.mubr.f32.mxu0 0.0
        %925 = vmatmul.mubr.f32.gmra.mxu0 %v730
        %v926 = vpop.f32.mrf.mxu0
        %v927 = vadd.f32 %v638, %v926
        %v928 = vpop.f32.mrf.mxu0
        %929 = vmatprep.mubr.f32.mxu0 0.0
        %930 = vmatmul.mubr.f32.gmra.mxu0 %v732
        %v931 = vpop.f32.mrf.mxu0
        %v932 = vadd.f32 %v643, %v931
        %v933 = vpop.f32.mrf.mxu0
        %934 = vmatprep.mubr.f32.mxu0 0.0
        %935 = vmatmul.mubr.f32.gmra.mxu0 %v734
        %v936 = vpop.f32.mrf.mxu0
        %v937 = vadd.f32 %v648, %v936
        %v938 = vpop.f32.mrf.mxu0
        %939 = vmatprep.mubr.f32.mxu0 0.0
        %940 = vmatmul.mubr.f32.gmra.mxu0 %v736
        %v941 = vpop.f32.mrf.mxu0
        %v942 = vadd.f32 %v653, %v941
        %v943 = vpop.f32.mrf.mxu0
        %944 = vmatprep.mubr.f32.mxu0 0.0
        %945 = vmatmul.mubr.f32.gmra.mxu0 %v738
        %v946 = vpop.f32.mrf.mxu0
        %v947 = vadd.f32 %v658, %v946
        %v948 = vpop.f32.mrf.mxu0
        %949 = vmatprep.mubr.f32.mxu0 0.0
        %950 = vmatmul.mubr.f32.gmra.mxu0 %v740
        %v951 = vpop.f32.mrf.mxu0
        %v952 = vadd.f32 %v663, %v951
        %v953 = vpop.f32.mrf.mxu0
        %954 = vmatprep.mubr.f32.mxu0 0.0
        %955 = vmatmul.mubr.f32.gmra.mxu0 %v742
        %v956 = vpop.f32.mrf.mxu0
        %v957 = vadd.f32 %v668, %v956
        %v958 = vpop.f32.mrf.mxu0
        %959 = vmatprep.mubr.f32.mxu0 0.0
        %960 = vmatmul.mubr.f32.gmra.mxu0 %v744
        %v961 = vpop.f32.mrf.mxu0
        %v962 = vadd.f32 %v673, %v961
        %v963 = vpop.f32.mrf.mxu0
        %964 = vmatprep.mubr.f32.mxu0 0.0
        %965 = vmatmul.mubr.f32.gmra.mxu0 %v746
        %v966 = vpop.f32.mrf.mxu0
        %v967 = vadd.f32 %v678, %v966
        %v968 = vpop.f32.mrf.mxu0
        %969 = vmatprep.mubr.f32.mxu0 0.0
        %970 = vmatmul.mubr.f32.gmra.mxu0 %v748
        %v971 = vpop.f32.mrf.mxu0
        %v972 = vadd.f32 %v683, %v971
        %v973 = vpop.f32.mrf.mxu0
        %974 = vdwg.mxu0
        %vm975 = vcmask 1045504
        %v976 = vrot.slane %v196, 2
        %v977 = vrot.slane %v197, 2
        %v978 = vsel %vm975, %v976, %v977
        %v979 = vrot.slane %v198, 2
        %v980 = vsel %vm975, %v977, %v979
        %v981 = vrot.slane %v199, 2
        %v982 = vrot.slane %v200, 2
        %v983 = vsel %vm975, %v981, %v982
        %v984 = vrot.slane %v201, 2
        %v985 = vsel %vm975, %v982, %v984
        %v986 = vrot.slane %v202, 2
        %v987 = vrot.slane %v203, 2
        %v988 = vsel %vm975, %v986, %v987
        %v989 = vrot.slane %v204, 2
        %v990 = vsel %vm975, %v987, %v989
        %v991 = vrot.slane %v205, 2
        %v992 = vrot.slane %v206, 2
        %v993 = vsel %vm975, %v991, %v992
        %v994 = vrot.slane %v207, 2
        %v995 = vsel %vm975, %v992, %v994
        %v996 = vrot.slane %v208, 2
        %v997 = vrot.slane %v209, 2
        %v998 = vsel %vm975, %v996, %v997
        %v999 = vrot.slane %v210, 2
        %v1000 = vsel %vm975, %v997, %v999
        %v1001 = vrot.slane %v211, 2
        %v1002 = vrot.slane %v212, 2
        %v1003 = vsel %vm975, %v1001, %v1002
        %v1004 = vrot.slane %v213, 2
        %v1005 = vsel %vm975, %v1002, %v1004
        %v1006 = vrot.slane %v214, 2
        %v1007 = vrot.slane %v215, 2
        %v1008 = vsel %vm975, %v1006, %v1007
        %v1009 = vrot.slane %v216, 2
        %v1010 = vsel %vm975, %v1007, %v1009
        %v1011 = vrot.slane %v217, 2
        %v1012 = vrot.slane %v218, 2
        %v1013 = vsel %vm975, %v1011, %v1012
        %v1014 = vrot.slane %v219, 2
        %v1015 = vsel %vm975, %v1012, %v1014
        %v1016 = vrot.slane %v220, 2
        %v1017 = vrot.slane %v221, 2
        %v1018 = vsel %vm975, %v1016, %v1017
        %v1019 = vrot.slane %v222, 2
        %v1020 = vsel %vm975, %v1017, %v1019
        %v1021 = vrot.slane %v223, 2
        %v1022 = vrot.slane %v224, 2
        %v1023 = vsel %vm975, %v1021, %v1022
        %v1024 = vrot.slane %v225, 2
        %v1025 = vsel %vm975, %v1022, %v1024
        %v1026 = vrot.slane %v226, 2
        %v1027 = vrot.slane %v227, 2
        %v1028 = vsel %vm975, %v1026, %v1027
        %v1029 = vrot.slane %v228, 2
        %v1030 = vsel %vm975, %v1027, %v1029
        %v1031 = vrot.slane %v229, 2
        %v1032 = vrot.slane %v230, 2
        %v1033 = vsel %vm975, %v1031, %v1032
        %v1034 = vrot.slane %v231, 2
        %v1035 = vsel %vm975, %v1032, %v1034
        %v1036 = vrot.slane %v232, 2
        %v1037 = vrot.slane %v233, 2
        %v1038 = vsel %vm975, %v1036, %v1037
        %v1039 = vrot.slane %v234, 2
        %v1040 = vsel %vm975, %v1037, %v1039
        %v1041 = vrot.slane %v235, 2
        %v1042 = vrot.slane %v236, 2
        %v1043 = vsel %vm975, %v1041, %v1042
        %v1044 = vrot.slane %v237, 2
        %v1045 = vsel %vm975, %v1042, %v1044
        %v1046 = vrot.slane %v238, 2
        %v1047 = vrot.slane %v239, 2
        %v1048 = vsel %vm975, %v1046, %v1047
        %v1049 = vrot.slane %v240, 2
        %v1050 = vsel %vm975, %v1047, %v1049
        %v1051 = vrot.slane %v241, 2
        %v1052 = vrot.slane %v242, 2
        %v1053 = vsel %vm975, %v1051, %v1052
        %v1054 = vrot.slane %v243, 2
        %v1055 = vsel %vm975, %v1052, %v1054
        %s1056 = scalar_lea.vmem %s1, 128
        %v1057 = vld [vmem:[%s1056] sm:$0xff]
        %v1058 = vld [vmem:[%s1056 + $0x8] sm:$0xff]
        %v1059 = vld [vmem:[%s1056 + $0x10] sm:$0xff]
        %v1060 = vld [vmem:[%s1056 + $0x18] sm:$0xff]
        %v1061 = vld [vmem:[%s1056 + $0x20] sm:$0xff]
        %v1062 = vld [vmem:[%s1056 + $0x28] sm:$0xff]
        %v1063 = vld [vmem:[%s1056 + $0x30] sm:$0xff]
        %v1064 = vld [vmem:[%s1056 + $0x38] sm:$0xff]
        %v1065 = vsel %vm396, %v978, 0
        %v1067 = vsel %vm396, %v980, 0
        %v1069 = vsel %vm396, %v983, 0
        %v1071 = vsel %vm396, %v985, 0
        %v1073 = vsel %vm396, %v988, 0
        %v1075 = vsel %vm396, %v990, 0
        %v1077 = vsel %vm396, %v993, 0
        %v1079 = vsel %vm396, %v995, 0
        %v1081 = vsel %vm396, %v998, 0
        %v1083 = vsel %vm396, %v1000, 0
        %v1085 = vsel %vm396, %v1003, 0
        %v1087 = vsel %vm396, %v1005, 0
        %v1089 = vsel %vm396, %v1008, 0
        %v1091 = vsel %vm396, %v1010, 0
        %v1093 = vsel %vm396, %v1013, 0
        %v1095 = vsel %vm396, %v1015, 0
        %v1097 = vsel %vm396, %v1018, 0
        %v1099 = vsel %vm396, %v1020, 0
        %v1101 = vsel %vm396, %v1023, 0
        %v1103 = vsel %vm396, %v1025, 0
        %v1105 = vsel %vm396, %v1028, 0
        %v1107 = vsel %vm396, %v1030, 0
        %v1109 = vsel %vm396, %v1033, 0
        %v1111 = vsel %vm396, %v1035, 0
        %v1113 = vsel %vm396, %v1038, 0
        %v1115 = vsel %vm396, %v1040, 0
        %v1117 = vsel %vm396, %v1043, 0
        %v1119 = vsel %vm396, %v1045, 0
        %v1121 = vsel %vm396, %v1048, 0
        %v1123 = vsel %vm396, %v1050, 0
        %v1125 = vsel %vm396, %v1053, 0
        %v1127 = vsel %vm396, %v1055, 0
        %1129 = vmatprep.subr.mxu0 0.0
        %1130 = vmatpush1.msra.mxu0 0.0
        %1131 = vmatprep.subr.mxu0 0.0
        %1132 = vmatpush1.msra.mxu0 0.0
        %1133 = vmatprep.subr.mxu0 0.0
        %1134 = vmatpush1.msra.mxu0 0.0
        %1135 = vmatprep.subr.mxu0 0.0
        %1136 = vmatpush1.msra.mxu0 0.0
        %1137 = vmatprep.subr.mxu0 0.0
        %1138 = vmatpush1.msra.mxu0 0.0
        %1139 = vmatprep.subr.mxu0 0.0
        %1140 = vmatpush1.msra.mxu0 0.0
        %1141 = vmatprep.subr.mxu0 0.0
        %1142 = vmatpush1.msra.mxu0 0.0
        %1143 = vmatprep.subr.mxu0 0.0
        %1144 = vmatpush1.msra.mxu0 0.0
        %1145 = vmatprep.subr.mxu0 0.0
        %1146 = vmatpush1.msra.mxu0 %v1064
        %1147 = vmatprep.subr.mxu0 0.0
        %1148 = vmatpush1.msra.mxu0 %v1063
        %1149 = vmatprep.subr.mxu0 0.0
        %1150 = vmatpush1.msra.mxu0 %v1062
        %1151 = vmatprep.subr.mxu0 0.0
        %1152 = vmatpush1.msra.mxu0 %v1061
        %1153 = vmatprep.subr.mxu0 0.0
        %1154 = vmatpush1.msra.mxu0 %v1060
        %1155 = vmatprep.subr.mxu0 0.0
        %1156 = vmatpush1.msra.mxu0 %v1059
        %1157 = vmatprep.subr.mxu0 0.0
        %1158 = vmatpush1.msra.mxu0 %v1058
        %1159 = vmatprep.subr.mxu0 0.0
        %1160 = vmatpush1.msra.mxu0 %v1057
        %1161 = vmatprep.subr.mxu0 0.0
        %1162 = vmatpush2.msra.mxu0 0.0
        %1163 = vmatprep.subr.mxu0 0.0
        %1164 = vmatpush2.msra.mxu0 0.0
        %1165 = vmatprep.subr.mxu0 0.0
        %1166 = vmatpush2.msra.mxu0 0.0
        %1167 = vmatprep.subr.mxu0 0.0
        %1168 = vmatpush2.msra.mxu0 0.0
        %1169 = vmatprep.subr.mxu0 0.0
        %1170 = vmatpush2.msra.mxu0 0.0
        %1171 = vmatprep.subr.mxu0 0.0
        %1172 = vmatpush2.msra.mxu0 0.0
        %1173 = vmatprep.subr.mxu0 0.0
        %1174 = vmatpush2.msra.mxu0 0.0
        %1175 = vmatprep.subr.mxu0 0.0
        %1176 = vmatpush2.msra.mxu0 0.0
        %1177 = vmatprep.subr.mxu0 0.0
        %1178 = vmatpush2.msra.mxu0 0.0
        %1179 = vmatprep.subr.mxu0 0.0
        %1180 = vmatpush2.msra.mxu0 0.0
        %1181 = vmatprep.subr.mxu0 0.0
        %1182 = vmatpush2.msra.mxu0 0.0
        %1183 = vmatprep.subr.mxu0 0.0
        %1184 = vmatpush2.msra.mxu0 0.0
        %1185 = vmatprep.subr.mxu0 0.0
        %1186 = vmatpush2.msra.mxu0 0.0
        %1187 = vmatprep.subr.mxu0 0.0
        %1188 = vmatpush2.msra.mxu0 0.0
        %1189 = vmatprep.subr.mxu0 0.0
        %1190 = vmatpush2.msra.mxu0 0.0
        %1191 = vmatprep.subr.mxu0 0.0
        %1192 = vmatpush2.msra.mxu0 0.0
        %1193 = vmatprep.mubr.f32.mxu0 0.0
        %1194 = vmatmul.mubr.f32.gmra.mxu0 %v1065
        %v1195 = vpop.f32.mrf.mxu0
        %v1196 = vadd.f32 0.0, %v1195
        %v1197 = vpop.f32.mrf.mxu0
        %1198 = vmatprep.mubr.f32.mxu0 0.0
        %1199 = vmatmul.mubr.f32.gmra.mxu0 %v1067
        %v1200 = vpop.f32.mrf.mxu0
        %v1201 = vadd.f32 0.0, %v1200
        %v1202 = vpop.f32.mrf.mxu0
        %1203 = vmatprep.mubr.f32.mxu0 0.0
        %1204 = vmatmul.mubr.f32.gmra.mxu0 %v1069
        %v1205 = vpop.f32.mrf.mxu0
        %v1206 = vadd.f32 0.0, %v1205
        %v1207 = vpop.f32.mrf.mxu0
        %1208 = vmatprep.mubr.f32.mxu0 0.0
        %1209 = vmatmul.mubr.f32.gmra.mxu0 %v1071
        %v1210 = vpop.f32.mrf.mxu0
        %v1211 = vadd.f32 0.0, %v1210
        %v1212 = vpop.f32.mrf.mxu0
        %1213 = vmatprep.mubr.f32.mxu0 0.0
        %1214 = vmatmul.mubr.f32.gmra.mxu0 %v1073
        %v1215 = vpop.f32.mrf.mxu0
        %v1216 = vadd.f32 0.0, %v1215
        %v1217 = vpop.f32.mrf.mxu0
        %1218 = vmatprep.mubr.f32.mxu0 0.0
        %1219 = vmatmul.mubr.f32.gmra.mxu0 %v1075
        %v1220 = vpop.f32.mrf.mxu0
        %v1221 = vadd.f32 0.0, %v1220
        %v1222 = vpop.f32.mrf.mxu0
        %1223 = vmatprep.mubr.f32.mxu0 0.0
        %1224 = vmatmul.mubr.f32.gmra.mxu0 %v1077
        %v1225 = vpop.f32.mrf.mxu0
        %v1226 = vadd.f32 0.0, %v1225
        %v1227 = vpop.f32.mrf.mxu0
        %1228 = vmatprep.mubr.f32.mxu0 0.0
        %1229 = vmatmul.mubr.f32.gmra.mxu0 %v1079
        %v1230 = vpop.f32.mrf.mxu0
        %v1231 = vadd.f32 0.0, %v1230
        %v1232 = vpop.f32.mrf.mxu0
        %1233 = vmatprep.mubr.f32.mxu0 0.0
        %1234 = vmatmul.mubr.f32.gmra.mxu0 %v1081
        %v1235 = vpop.f32.mrf.mxu0
        %v1236 = vadd.f32 0.0, %v1235
        %v1237 = vpop.f32.mrf.mxu0
        %1238 = vmatprep.mubr.f32.mxu0 0.0
        %1239 = vmatmul.mubr.f32.gmra.mxu0 %v1083
        %v1240 = vpop.f32.mrf.mxu0
        %v1241 = vadd.f32 0.0, %v1240
        %v1242 = vpop.f32.mrf.mxu0
        %1243 = vmatprep.mubr.f32.mxu0 0.0
        %1244 = vmatmul.mubr.f32.gmra.mxu0 %v1085
        %v1245 = vpop.f32.mrf.mxu0
        %v1246 = vadd.f32 0.0, %v1245
        %v1247 = vpop.f32.mrf.mxu0
        %1248 = vmatprep.mubr.f32.mxu0 0.0
        %1249 = vmatmul.mubr.f32.gmra.mxu0 %v1087
        %v1250 = vpop.f32.mrf.mxu0
        %v1251 = vadd.f32 0.0, %v1250
        %v1252 = vpop.f32.mrf.mxu0
        %1253 = vmatprep.mubr.f32.mxu0 0.0
        %1254 = vmatmul.mubr.f32.gmra.mxu0 %v1089
        %v1255 = vpop.f32.mrf.mxu0
        %v1256 = vadd.f32 0.0, %v1255
        %v1257 = vpop.f32.mrf.mxu0
        %1258 = vmatprep.mubr.f32.mxu0 0.0
        %1259 = vmatmul.mubr.f32.gmra.mxu0 %v1091
        %v1260 = vpop.f32.mrf.mxu0
        %v1261 = vadd.f32 0.0, %v1260
        %v1262 = vpop.f32.mrf.mxu0
        %1263 = vmatprep.mubr.f32.mxu0 0.0
        %1264 = vmatmul.mubr.f32.gmra.mxu0 %v1093
        %v1265 = vpop.f32.mrf.mxu0
        %v1266 = vadd.f32 0.0, %v1265
        %v1267 = vpop.f32.mrf.mxu0
        %1268 = vmatprep.mubr.f32.mxu0 0.0
        %1269 = vmatmul.mubr.f32.gmra.mxu0 %v1095
        %v1270 = vpop.f32.mrf.mxu0
        %v1271 = vadd.f32 0.0, %v1270
        %v1272 = vpop.f32.mrf.mxu0
        %1273 = vmatprep.mubr.f32.mxu0 0.0
        %1274 = vmatmul.mubr.f32.gmra.mxu0 %v1097
        %v1275 = vpop.f32.mrf.mxu0
        %v1276 = vadd.f32 0.0, %v1275
        %v1277 = vpop.f32.mrf.mxu0
        %1278 = vmatprep.mubr.f32.mxu0 0.0
        %1279 = vmatmul.mubr.f32.gmra.mxu0 %v1099
        %v1280 = vpop.f32.mrf.mxu0
        %v1281 = vadd.f32 0.0, %v1280
        %v1282 = vpop.f32.mrf.mxu0
        %1283 = vmatprep.mubr.f32.mxu0 0.0
        %1284 = vmatmul.mubr.f32.gmra.mxu0 %v1101
        %v1285 = vpop.f32.mrf.mxu0
        %v1286 = vadd.f32 0.0, %v1285
        %v1287 = vpop.f32.mrf.mxu0
        %1288 = vmatprep.mubr.f32.mxu0 0.0
        %1289 = vmatmul.mubr.f32.gmra.mxu0 %v1103
        %v1290 = vpop.f32.mrf.mxu0
        %v1291 = vadd.f32 0.0, %v1290
        %v1292 = vpop.f32.mrf.mxu0
        %1293 = vmatprep.mubr.f32.mxu0 0.0
        %1294 = vmatmul.mubr.f32.gmra.mxu0 %v1105
        %v1295 = vpop.f32.mrf.mxu0
        %v1296 = vadd.f32 0.0, %v1295
        %v1297 = vpop.f32.mrf.mxu0
        %1298 = vmatprep.mubr.f32.mxu0 0.0
        %1299 = vmatmul.mubr.f32.gmra.mxu0 %v1107
        %v1300 = vpop.f32.mrf.mxu0
        %v1301 = vadd.f32 0.0, %v1300
        %v1302 = vpop.f32.mrf.mxu0
        %1303 = vmatprep.mubr.f32.mxu0 0.0
        %1304 = vmatmul.mubr.f32.gmra.mxu0 %v1109
        %v1305 = vpop.f32.mrf.mxu0
        %v1306 = vadd.f32 0.0, %v1305
        %v1307 = vpop.f32.mrf.mxu0
        %1308 = vmatprep.mubr.f32.mxu0 0.0
        %1309 = vmatmul.mubr.f32.gmra.mxu0 %v1111
        %v1310 = vpop.f32.mrf.mxu0
        %v1311 = vadd.f32 0.0, %v1310
        %v1312 = vpop.f32.mrf.mxu0
        %1313 = vmatprep.mubr.f32.mxu0 0.0
        %1314 = vmatmul.mubr.f32.gmra.mxu0 %v1113
        %v1315 = vpop.f32.mrf.mxu0
        %v1316 = vadd.f32 0.0, %v1315
        %v1317 = vpop.f32.mrf.mxu0
        %1318 = vmatprep.mubr.f32.mxu0 0.0
        %1319 = vmatmul.mubr.f32.gmra.mxu0 %v1115
        %v1320 = vpop.f32.mrf.mxu0
        %v1321 = vadd.f32 0.0, %v1320
        %v1322 = vpop.f32.mrf.mxu0
        %1323 = vmatprep.mubr.f32.mxu0 0.0
        %1324 = vmatmul.mubr.f32.gmra.mxu0 %v1117
        %v1325 = vpop.f32.mrf.mxu0
        %v1326 = vadd.f32 0.0, %v1325
        %v1327 = vpop.f32.mrf.mxu0
        %1328 = vmatprep.mubr.f32.mxu0 0.0
        %1329 = vmatmul.mubr.f32.gmra.mxu0 %v1119
        %v1330 = vpop.f32.mrf.mxu0
        %v1331 = vadd.f32 0.0, %v1330
        %v1332 = vpop.f32.mrf.mxu0
        %1333 = vmatprep.mubr.f32.mxu0 0.0
        %1334 = vmatmul.mubr.f32.gmra.mxu0 %v1121
        %v1335 = vpop.f32.mrf.mxu0
        %v1336 = vadd.f32 0.0, %v1335
        %v1337 = vpop.f32.mrf.mxu0
        %1338 = vmatprep.mubr.f32.mxu0 0.0
        %1339 = vmatmul.mubr.f32.gmra.mxu0 %v1123
        %v1340 = vpop.f32.mrf.mxu0
        %v1341 = vadd.f32 0.0, %v1340
        %v1342 = vpop.f32.mrf.mxu0
        %1343 = vmatprep.mubr.f32.mxu0 0.0
        %1344 = vmatmul.mubr.f32.gmra.mxu0 %v1125
        %v1345 = vpop.f32.mrf.mxu0
        %v1346 = vadd.f32 0.0, %v1345
        %v1347 = vpop.f32.mrf.mxu0
        %1348 = vmatprep.mubr.f32.mxu0 0.0
        %1349 = vmatmul.mubr.f32.gmra.mxu0 %v1127
        %v1350 = vpop.f32.mrf.mxu0
        %v1351 = vadd.f32 0.0, %v1350
        %v1352 = vpop.f32.mrf.mxu0
        %1353 = vdwg.mxu0
        %v1354 = vadd.f32 %v817, %v1196
        %v1355 = vadd.f32 %v822, %v1201
        %v1356 = vadd.f32 %v827, %v1206
        %v1357 = vadd.f32 %v832, %v1211
        %v1358 = vadd.f32 %v837, %v1216
        %v1359 = vadd.f32 %v842, %v1221
        %v1360 = vadd.f32 %v847, %v1226
        %v1361 = vadd.f32 %v852, %v1231
        %v1362 = vadd.f32 %v857, %v1236
        %v1363 = vadd.f32 %v862, %v1241
        %v1364 = vadd.f32 %v867, %v1246
        %v1365 = vadd.f32 %v872, %v1251
        %v1366 = vadd.f32 %v877, %v1256
        %v1367 = vadd.f32 %v882, %v1261
        %v1368 = vadd.f32 %v887, %v1266
        %v1369 = vadd.f32 %v892, %v1271
        %v1370 = vadd.f32 %v897, %v1276
        %v1371 = vadd.f32 %v902, %v1281
        %v1372 = vadd.f32 %v907, %v1286
        %v1373 = vadd.f32 %v912, %v1291
        %v1374 = vadd.f32 %v917, %v1296
        %v1375 = vadd.f32 %v922, %v1301
        %v1376 = vadd.f32 %v927, %v1306
        %v1377 = vadd.f32 %v932, %v1311
        %v1378 = vadd.f32 %v937, %v1316
        %v1379 = vadd.f32 %v942, %v1321
        %v1380 = vadd.f32 %v947, %v1326
        %v1381 = vadd.f32 %v952, %v1331
        %v1382 = vadd.f32 %v957, %v1336
        %v1383 = vadd.f32 %v962, %v1341
        %v1384 = vadd.f32 %v967, %v1346
        %v1385 = vadd.f32 %v972, %v1351
        %s1386 = scalar_lea.vmem %s1, 192
        %v1387 = vld [vmem:[%s1386] sm:$0xff]
        %v1388 = vld [vmem:[%s1386 + $0x8] sm:$0xff]
        %v1389 = vld [vmem:[%s1386 + $0x10] sm:$0xff]
        %v1390 = vld [vmem:[%s1386 + $0x18] sm:$0xff]
        %v1391 = vld [vmem:[%s1386 + $0x20] sm:$0xff]
        %v1392 = vld [vmem:[%s1386 + $0x28] sm:$0xff]
        %v1393 = vld [vmem:[%s1386 + $0x30] sm:$0xff]
        %v1394 = vld [vmem:[%s1386 + $0x38] sm:$0xff]
        %v1396 = vsel %vm396, %v244, 0
        %v1399 = vsel %vm396, %v245, 0
        %1401 = vmatprep.subr.mxu0 0.0
        %1402 = vmatpush1.msra.mxu0 0.0
        %1403 = vmatprep.subr.mxu0 0.0
        %1404 = vmatpush1.msra.mxu0 0.0
        %1405 = vmatprep.subr.mxu0 0.0
        %1406 = vmatpush1.msra.mxu0 0.0
        %1407 = vmatprep.subr.mxu0 0.0
        %1408 = vmatpush1.msra.mxu0 0.0
        %1409 = vmatprep.subr.mxu0 0.0
        %1410 = vmatpush1.msra.mxu0 0.0
        %1411 = vmatprep.subr.mxu0 0.0
        %1412 = vmatpush1.msra.mxu0 0.0
        %1413 = vmatprep.subr.mxu0 0.0
        %1414 = vmatpush1.msra.mxu0 0.0
        %1415 = vmatprep.subr.mxu0 0.0
        %1416 = vmatpush1.msra.mxu0 0.0
        %1417 = vmatprep.subr.mxu0 0.0
        %1418 = vmatpush1.msra.mxu0 %v1394
        %1419 = vmatprep.subr.mxu0 0.0
        %1420 = vmatpush1.msra.mxu0 %v1393
        %1421 = vmatprep.subr.mxu0 0.0
        %1422 = vmatpush1.msra.mxu0 %v1392
        %1423 = vmatprep.subr.mxu0 0.0
        %1424 = vmatpush1.msra.mxu0 %v1391
        %1425 = vmatprep.subr.mxu0 0.0
        %1426 = vmatpush1.msra.mxu0 %v1390
        %1427 = vmatprep.subr.mxu0 0.0
        %1428 = vmatpush1.msra.mxu0 %v1389
        %1429 = vmatprep.subr.mxu0 0.0
        %1430 = vmatpush1.msra.mxu0 %v1388
        %1431 = vmatprep.subr.mxu0 0.0
        %1432 = vmatpush1.msra.mxu0 %v1387
        %1433 = vmatprep.subr.mxu0 0.0
        %1434 = vmatpush2.msra.mxu0 0.0
        %1435 = vmatprep.subr.mxu0 0.0
        %1436 = vmatpush2.msra.mxu0 0.0
        %1437 = vmatprep.subr.mxu0 0.0
        %1438 = vmatpush2.msra.mxu0 0.0
        %1439 = vmatprep.subr.mxu0 0.0
        %1440 = vmatpush2.msra.mxu0 0.0
        %1441 = vmatprep.subr.mxu0 0.0
        %1442 = vmatpush2.msra.mxu0 0.0
        %1443 = vmatprep.subr.mxu0 0.0
        %1444 = vmatpush2.msra.mxu0 0.0
        %1445 = vmatprep.subr.mxu0 0.0
        %1446 = vmatpush2.msra.mxu0 0.0
        %1447 = vmatprep.subr.mxu0 0.0
        %1448 = vmatpush2.msra.mxu0 0.0
        %1449 = vmatprep.subr.mxu0 0.0
        %1450 = vmatpush2.msra.mxu0 0.0
        %1451 = vmatprep.subr.mxu0 0.0
        %1452 = vmatpush2.msra.mxu0 0.0
        %1453 = vmatprep.subr.mxu0 0.0
        %1454 = vmatpush2.msra.mxu0 0.0
        %1455 = vmatprep.subr.mxu0 0.0
        %1456 = vmatpush2.msra.mxu0 0.0
        %1457 = vmatprep.subr.mxu0 0.0
        %1458 = vmatpush2.msra.mxu0 0.0
        %1459 = vmatprep.subr.mxu0 0.0
        %1460 = vmatpush2.msra.mxu0 0.0
        %1461 = vmatprep.subr.mxu0 0.0
        %1462 = vmatpush2.msra.mxu0 0.0
        %1463 = vmatprep.subr.mxu0 0.0
        %1464 = vmatpush2.msra.mxu0 0.0
        %1465 = vmatprep.mubr.f32.mxu0 0.0
        %1466 = vmatmul.mubr.f32.gmra.mxu0 %v690
        %v1467 = vpop.f32.mrf.mxu0
        %v1468 = vadd.f32 0.0, %v1467
        %v1469 = vpop.f32.mrf.mxu0
        %1470 = vmatprep.mubr.f32.mxu0 0.0
        %1471 = vmatmul.mubr.f32.gmra.mxu0 %v692
        %v1472 = vpop.f32.mrf.mxu0
        %v1473 = vadd.f32 0.0, %v1472
        %v1474 = vpop.f32.mrf.mxu0
        %1475 = vmatprep.mubr.f32.mxu0 0.0
        %1476 = vmatmul.mubr.f32.gmra.mxu0 %v694
        %v1477 = vpop.f32.mrf.mxu0
        %v1478 = vadd.f32 0.0, %v1477
        %v1479 = vpop.f32.mrf.mxu0
        %1480 = vmatprep.mubr.f32.mxu0 0.0
        %1481 = vmatmul.mubr.f32.gmra.mxu0 %v696
        %v1482 = vpop.f32.mrf.mxu0
        %v1483 = vadd.f32 0.0, %v1482
        %v1484 = vpop.f32.mrf.mxu0
        %1485 = vmatprep.mubr.f32.mxu0 0.0
        %1486 = vmatmul.mubr.f32.gmra.mxu0 %v698
        %v1487 = vpop.f32.mrf.mxu0
        %v1488 = vadd.f32 0.0, %v1487
        %v1489 = vpop.f32.mrf.mxu0
        %1490 = vmatprep.mubr.f32.mxu0 0.0
        %1491 = vmatmul.mubr.f32.gmra.mxu0 %v700
        %v1492 = vpop.f32.mrf.mxu0
        %v1493 = vadd.f32 0.0, %v1492
        %v1494 = vpop.f32.mrf.mxu0
        %1495 = vmatprep.mubr.f32.mxu0 0.0
        %1496 = vmatmul.mubr.f32.gmra.mxu0 %v702
        %v1497 = vpop.f32.mrf.mxu0
        %v1498 = vadd.f32 0.0, %v1497
        %v1499 = vpop.f32.mrf.mxu0
        %1500 = vmatprep.mubr.f32.mxu0 0.0
        %1501 = vmatmul.mubr.f32.gmra.mxu0 %v704
        %v1502 = vpop.f32.mrf.mxu0
        %v1503 = vadd.f32 0.0, %v1502
        %v1504 = vpop.f32.mrf.mxu0
        %1505 = vmatprep.mubr.f32.mxu0 0.0
        %1506 = vmatmul.mubr.f32.gmra.mxu0 %v706
        %v1507 = vpop.f32.mrf.mxu0
        %v1508 = vadd.f32 0.0, %v1507
        %v1509 = vpop.f32.mrf.mxu0
        %1510 = vmatprep.mubr.f32.mxu0 0.0
        %1511 = vmatmul.mubr.f32.gmra.mxu0 %v708
        %v1512 = vpop.f32.mrf.mxu0
        %v1513 = vadd.f32 0.0, %v1512
        %v1514 = vpop.f32.mrf.mxu0
        %1515 = vmatprep.mubr.f32.mxu0 0.0
        %1516 = vmatmul.mubr.f32.gmra.mxu0 %v710
        %v1517 = vpop.f32.mrf.mxu0
        %v1518 = vadd.f32 0.0, %v1517
        %v1519 = vpop.f32.mrf.mxu0
        %1520 = vmatprep.mubr.f32.mxu0 0.0
        %1521 = vmatmul.mubr.f32.gmra.mxu0 %v712
        %v1522 = vpop.f32.mrf.mxu0
        %v1523 = vadd.f32 0.0, %v1522
        %v1524 = vpop.f32.mrf.mxu0
        %1525 = vmatprep.mubr.f32.mxu0 0.0
        %1526 = vmatmul.mubr.f32.gmra.mxu0 %v714
        %v1527 = vpop.f32.mrf.mxu0
        %v1528 = vadd.f32 0.0, %v1527
        %v1529 = vpop.f32.mrf.mxu0
        %1530 = vmatprep.mubr.f32.mxu0 0.0
        %1531 = vmatmul.mubr.f32.gmra.mxu0 %v716
        %v1532 = vpop.f32.mrf.mxu0
        %v1533 = vadd.f32 0.0, %v1532
        %v1534 = vpop.f32.mrf.mxu0
        %1535 = vmatprep.mubr.f32.mxu0 0.0
        %1536 = vmatmul.mubr.f32.gmra.mxu0 %v718
        %v1537 = vpop.f32.mrf.mxu0
        %v1538 = vadd.f32 0.0, %v1537
        %v1539 = vpop.f32.mrf.mxu0
        %1540 = vmatprep.mubr.f32.mxu0 0.0
        %1541 = vmatmul.mubr.f32.gmra.mxu0 %v720
        %v1542 = vpop.f32.mrf.mxu0
        %v1543 = vadd.f32 0.0, %v1542
        %v1544 = vpop.f32.mrf.mxu0
        %1545 = vmatprep.mubr.f32.mxu0 0.0
        %1546 = vmatmul.mubr.f32.gmra.mxu0 %v722
        %v1547 = vpop.f32.mrf.mxu0
        %v1548 = vadd.f32 0.0, %v1547
        %v1549 = vpop.f32.mrf.mxu0
        %1550 = vmatprep.mubr.f32.mxu0 0.0
        %1551 = vmatmul.mubr.f32.gmra.mxu0 %v724
        %v1552 = vpop.f32.mrf.mxu0
        %v1553 = vadd.f32 0.0, %v1552
        %v1554 = vpop.f32.mrf.mxu0
        %1555 = vmatprep.mubr.f32.mxu0 0.0
        %1556 = vmatmul.mubr.f32.gmra.mxu0 %v726
        %v1557 = vpop.f32.mrf.mxu0
        %v1558 = vadd.f32 0.0, %v1557
        %v1559 = vpop.f32.mrf.mxu0
        %1560 = vmatprep.mubr.f32.mxu0 0.0
        %1561 = vmatmul.mubr.f32.gmra.mxu0 %v728
        %v1562 = vpop.f32.mrf.mxu0
        %v1563 = vadd.f32 0.0, %v1562
        %v1564 = vpop.f32.mrf.mxu0
        %1565 = vmatprep.mubr.f32.mxu0 0.0
        %1566 = vmatmul.mubr.f32.gmra.mxu0 %v730
        %v1567 = vpop.f32.mrf.mxu0
        %v1568 = vadd.f32 0.0, %v1567
        %v1569 = vpop.f32.mrf.mxu0
        %1570 = vmatprep.mubr.f32.mxu0 0.0
        %1571 = vmatmul.mubr.f32.gmra.mxu0 %v732
        %v1572 = vpop.f32.mrf.mxu0
        %v1573 = vadd.f32 0.0, %v1572
        %v1574 = vpop.f32.mrf.mxu0
        %1575 = vmatprep.mubr.f32.mxu0 0.0
        %1576 = vmatmul.mubr.f32.gmra.mxu0 %v734
        %v1577 = vpop.f32.mrf.mxu0
        %v1578 = vadd.f32 0.0, %v1577
        %v1579 = vpop.f32.mrf.mxu0
        %1580 = vmatprep.mubr.f32.mxu0 0.0
        %1581 = vmatmul.mubr.f32.gmra.mxu0 %v736
        %v1582 = vpop.f32.mrf.mxu0
        %v1583 = vadd.f32 0.0, %v1582
        %v1584 = vpop.f32.mrf.mxu0
        %1585 = vmatprep.mubr.f32.mxu0 0.0
        %1586 = vmatmul.mubr.f32.gmra.mxu0 %v738
        %v1587 = vpop.f32.mrf.mxu0
        %v1588 = vadd.f32 0.0, %v1587
        %v1589 = vpop.f32.mrf.mxu0
        %1590 = vmatprep.mubr.f32.mxu0 0.0
        %1591 = vmatmul.mubr.f32.gmra.mxu0 %v740
        %v1592 = vpop.f32.mrf.mxu0
        %v1593 = vadd.f32 0.0, %v1592
        %v1594 = vpop.f32.mrf.mxu0
        %1595 = vmatprep.mubr.f32.mxu0 0.0
        %1596 = vmatmul.mubr.f32.gmra.mxu0 %v742
        %v1597 = vpop.f32.mrf.mxu0
        %v1598 = vadd.f32 0.0, %v1597
        %v1599 = vpop.f32.mrf.mxu0
        %1600 = vmatprep.mubr.f32.mxu0 0.0
        %1601 = vmatmul.mubr.f32.gmra.mxu0 %v744
        %v1602 = vpop.f32.mrf.mxu0
        %v1603 = vadd.f32 0.0, %v1602
        %v1604 = vpop.f32.mrf.mxu0
        %1605 = vmatprep.mubr.f32.mxu0 0.0
        %1606 = vmatmul.mubr.f32.gmra.mxu0 %v746
        %v1607 = vpop.f32.mrf.mxu0
        %v1608 = vadd.f32 0.0, %v1607
        %v1609 = vpop.f32.mrf.mxu0
        %1610 = vmatprep.mubr.f32.mxu0 0.0
        %1611 = vmatmul.mubr.f32.gmra.mxu0 %v748
        %v1612 = vpop.f32.mrf.mxu0
        %v1613 = vadd.f32 0.0, %v1612
        %v1614 = vpop.f32.mrf.mxu0
        %1615 = vmatprep.mubr.f32.mxu0 0.0
        %1616 = vmatmul.mubr.f32.gmra.mxu0 %v1396
        %v1617 = vpop.f32.mrf.mxu0
        %v1618 = vadd.f32 0.0, %v1617
        %v1619 = vpop.f32.mrf.mxu0
        %1620 = vmatprep.mubr.f32.mxu0 0.0
        %1621 = vmatmul.mubr.f32.gmra.mxu0 %v1399
        %v1622 = vpop.f32.mrf.mxu0
        %v1623 = vadd.f32 0.0, %v1622
        %v1624 = vpop.f32.mrf.mxu0
        %1625 = vdwg.mxu0
        %v1626 = vadd.f32 %v1354, %v1468
        %v1627 = vadd.f32 %v1355, %v1473
        %v1628 = vadd.f32 %v1356, %v1478
        %v1629 = vadd.f32 %v1357, %v1483
        %v1630 = vadd.f32 %v1358, %v1488
        %v1631 = vadd.f32 %v1359, %v1493
        %v1632 = vadd.f32 %v1360, %v1498
        %v1633 = vadd.f32 %v1361, %v1503
        %v1634 = vadd.f32 %v1362, %v1508
        %v1635 = vadd.f32 %v1363, %v1513
        %v1636 = vadd.f32 %v1364, %v1518
        %v1637 = vadd.f32 %v1365, %v1523
        %v1638 = vadd.f32 %v1366, %v1528
        %v1639 = vadd.f32 %v1367, %v1533
        %v1640 = vadd.f32 %v1368, %v1538
        %v1641 = vadd.f32 %v1369, %v1543
        %v1642 = vadd.f32 %v1370, %v1548
        %v1643 = vadd.f32 %v1371, %v1553
        %v1644 = vadd.f32 %v1372, %v1558
        %v1645 = vadd.f32 %v1373, %v1563
        %v1646 = vadd.f32 %v1374, %v1568
        %v1647 = vadd.f32 %v1375, %v1573
        %v1648 = vadd.f32 %v1376, %v1578
        %v1649 = vadd.f32 %v1377, %v1583
        %v1650 = vadd.f32 %v1378, %v1588
        %v1651 = vadd.f32 %v1379, %v1593
        %v1652 = vadd.f32 %v1380, %v1598
        %v1653 = vadd.f32 %v1381, %v1603
        %v1654 = vadd.f32 %v1382, %v1608
        %v1655 = vadd.f32 %v1383, %v1613
        %v1656 = vadd.f32 %v1384, %v1618
        %v1657 = vadd.f32 %v1385, %v1623
        %v1659 = vrot.slane %v244, 1
        %v1660 = vrot.slane %v245, 1
        %v1661 = vsel %vm306, %v1659, %v1660
        %v1662 = vrot.slane %v246, 1
        %v1663 = vsel %vm306, %v1660, %v1662
        %s1664 = scalar_lea.vmem %s1, 256
        %v1665 = vld [vmem:[%s1664] sm:$0xff]
        %v1666 = vld [vmem:[%s1664 + $0x8] sm:$0xff]
        %v1667 = vld [vmem:[%s1664 + $0x10] sm:$0xff]
        %v1668 = vld [vmem:[%s1664 + $0x18] sm:$0xff]
        %v1669 = vld [vmem:[%s1664 + $0x20] sm:$0xff]
        %v1670 = vld [vmem:[%s1664 + $0x28] sm:$0xff]
        %v1671 = vld [vmem:[%s1664 + $0x30] sm:$0xff]
        %v1672 = vld [vmem:[%s1664 + $0x38] sm:$0xff]
        %v1673 = vsel %vm396, %v1661, 0
        %v1675 = vsel %vm396, %v1663, 0
        %1677 = vmatprep.subr.mxu0 0.0
        %1678 = vmatpush1.msra.mxu0 0.0
        %1679 = vmatprep.subr.mxu0 0.0
        %1680 = vmatpush1.msra.mxu0 0.0
        %1681 = vmatprep.subr.mxu0 0.0
        %1682 = vmatpush1.msra.mxu0 0.0
        %1683 = vmatprep.subr.mxu0 0.0
        %1684 = vmatpush1.msra.mxu0 0.0
        %1685 = vmatprep.subr.mxu0 0.0
        %1686 = vmatpush1.msra.mxu0 0.0
        %1687 = vmatprep.subr.mxu0 0.0
        %1688 = vmatpush1.msra.mxu0 0.0
        %1689 = vmatprep.subr.mxu0 0.0
        %1690 = vmatpush1.msra.mxu0 0.0
        %1691 = vmatprep.subr.mxu0 0.0
        %1692 = vmatpush1.msra.mxu0 0.0
        %1693 = vmatprep.subr.mxu0 0.0
        %1694 = vmatpush1.msra.mxu0 %v1672
        %1695 = vmatprep.subr.mxu0 0.0
        %1696 = vmatpush1.msra.mxu0 %v1671
        %1697 = vmatprep.subr.mxu0 0.0
        %1698 = vmatpush1.msra.mxu0 %v1670
        %1699 = vmatprep.subr.mxu0 0.0
        %1700 = vmatpush1.msra.mxu0 %v1669
        %1701 = vmatprep.subr.mxu0 0.0
        %1702 = vmatpush1.msra.mxu0 %v1668
        %1703 = vmatprep.subr.mxu0 0.0
        %1704 = vmatpush1.msra.mxu0 %v1667
        %1705 = vmatprep.subr.mxu0 0.0
        %1706 = vmatpush1.msra.mxu0 %v1666
        %1707 = vmatprep.subr.mxu0 0.0
        %1708 = vmatpush1.msra.mxu0 %v1665
        %1709 = vmatprep.subr.mxu0 0.0
        %1710 = vmatpush2.msra.mxu0 0.0
        %1711 = vmatprep.subr.mxu0 0.0
        %1712 = vmatpush2.msra.mxu0 0.0
        %1713 = vmatprep.subr.mxu0 0.0
        %1714 = vmatpush2.msra.mxu0 0.0
        %1715 = vmatprep.subr.mxu0 0.0
        %1716 = vmatpush2.msra.mxu0 0.0
        %1717 = vmatprep.subr.mxu0 0.0
        %1718 = vmatpush2.msra.mxu0 0.0
        %1719 = vmatprep.subr.mxu0 0.0
        %1720 = vmatpush2.msra.mxu0 0.0
        %1721 = vmatprep.subr.mxu0 0.0
        %1722 = vmatpush2.msra.mxu0 0.0
        %1723 = vmatprep.subr.mxu0 0.0
        %1724 = vmatpush2.msra.mxu0 0.0
        %1725 = vmatprep.subr.mxu0 0.0
        %1726 = vmatpush2.msra.mxu0 0.0
        %1727 = vmatprep.subr.mxu0 0.0
        %1728 = vmatpush2.msra.mxu0 0.0
        %1729 = vmatprep.subr.mxu0 0.0
        %1730 = vmatpush2.msra.mxu0 0.0
        %1731 = vmatprep.subr.mxu0 0.0
        %1732 = vmatpush2.msra.mxu0 0.0
        %1733 = vmatprep.subr.mxu0 0.0
        %1734 = vmatpush2.msra.mxu0 0.0
        %1735 = vmatprep.subr.mxu0 0.0
        %1736 = vmatpush2.msra.mxu0 0.0
        %1737 = vmatprep.subr.mxu0 0.0
        %1738 = vmatpush2.msra.mxu0 0.0
        %1739 = vmatprep.subr.mxu0 0.0
        %1740 = vmatpush2.msra.mxu0 0.0
        %1741 = vmatprep.mubr.f32.mxu0 0.0
        %1742 = vmatmul.mubr.f32.gmra.mxu0 %v401
        %v1743 = vpop.f32.mrf.mxu0
        %v1744 = vadd.f32 0.0, %v1743
        %v1745 = vpop.f32.mrf.mxu0
        %1746 = vmatprep.mubr.f32.mxu0 0.0
        %1747 = vmatmul.mubr.f32.gmra.mxu0 %v403
        %v1748 = vpop.f32.mrf.mxu0
        %v1749 = vadd.f32 0.0, %v1748
        %v1750 = vpop.f32.mrf.mxu0
        %1751 = vmatprep.mubr.f32.mxu0 0.0
        %1752 = vmatmul.mubr.f32.gmra.mxu0 %v405
        %v1753 = vpop.f32.mrf.mxu0
        %v1754 = vadd.f32 0.0, %v1753
        %v1755 = vpop.f32.mrf.mxu0
        %1756 = vmatprep.mubr.f32.mxu0 0.0
        %1757 = vmatmul.mubr.f32.gmra.mxu0 %v407
        %v1758 = vpop.f32.mrf.mxu0
        %v1759 = vadd.f32 0.0, %v1758
        %v1760 = vpop.f32.mrf.mxu0
        %1761 = vmatprep.mubr.f32.mxu0 0.0
        %1762 = vmatmul.mubr.f32.gmra.mxu0 %v409
        %v1763 = vpop.f32.mrf.mxu0
        %v1764 = vadd.f32 0.0, %v1763
        %v1765 = vpop.f32.mrf.mxu0
        %1766 = vmatprep.mubr.f32.mxu0 0.0
        %1767 = vmatmul.mubr.f32.gmra.mxu0 %v411
        %v1768 = vpop.f32.mrf.mxu0
        %v1769 = vadd.f32 0.0, %v1768
        %v1770 = vpop.f32.mrf.mxu0
        %1771 = vmatprep.mubr.f32.mxu0 0.0
        %1772 = vmatmul.mubr.f32.gmra.mxu0 %v413
        %v1773 = vpop.f32.mrf.mxu0
        %v1774 = vadd.f32 0.0, %v1773
        %v1775 = vpop.f32.mrf.mxu0
        %1776 = vmatprep.mubr.f32.mxu0 0.0
        %1777 = vmatmul.mubr.f32.gmra.mxu0 %v415
        %v1778 = vpop.f32.mrf.mxu0
        %v1779 = vadd.f32 0.0, %v1778
        %v1780 = vpop.f32.mrf.mxu0
        %1781 = vmatprep.mubr.f32.mxu0 0.0
        %1782 = vmatmul.mubr.f32.gmra.mxu0 %v417
        %v1783 = vpop.f32.mrf.mxu0
        %v1784 = vadd.f32 0.0, %v1783
        %v1785 = vpop.f32.mrf.mxu0
        %1786 = vmatprep.mubr.f32.mxu0 0.0
        %1787 = vmatmul.mubr.f32.gmra.mxu0 %v419
        %v1788 = vpop.f32.mrf.mxu0
        %v1789 = vadd.f32 0.0, %v1788
        %v1790 = vpop.f32.mrf.mxu0
        %1791 = vmatprep.mubr.f32.mxu0 0.0
        %1792 = vmatmul.mubr.f32.gmra.mxu0 %v421
        %v1793 = vpop.f32.mrf.mxu0
        %v1794 = vadd.f32 0.0, %v1793
        %v1795 = vpop.f32.mrf.mxu0
        %1796 = vmatprep.mubr.f32.mxu0 0.0
        %1797 = vmatmul.mubr.f32.gmra.mxu0 %v423
        %v1798 = vpop.f32.mrf.mxu0
        %v1799 = vadd.f32 0.0, %v1798
        %v1800 = vpop.f32.mrf.mxu0
        %1801 = vmatprep.mubr.f32.mxu0 0.0
        %1802 = vmatmul.mubr.f32.gmra.mxu0 %v425
        %v1803 = vpop.f32.mrf.mxu0
        %v1804 = vadd.f32 0.0, %v1803
        %v1805 = vpop.f32.mrf.mxu0
        %1806 = vmatprep.mubr.f32.mxu0 0.0
        %1807 = vmatmul.mubr.f32.gmra.mxu0 %v427
        %v1808 = vpop.f32.mrf.mxu0
        %v1809 = vadd.f32 0.0, %v1808
        %v1810 = vpop.f32.mrf.mxu0
        %1811 = vmatprep.mubr.f32.mxu0 0.0
        %1812 = vmatmul.mubr.f32.gmra.mxu0 %v429
        %v1813 = vpop.f32.mrf.mxu0
        %v1814 = vadd.f32 0.0, %v1813
        %v1815 = vpop.f32.mrf.mxu0
        %1816 = vmatprep.mubr.f32.mxu0 0.0
        %1817 = vmatmul.mubr.f32.gmra.mxu0 %v431
        %v1818 = vpop.f32.mrf.mxu0
        %v1819 = vadd.f32 0.0, %v1818
        %v1820 = vpop.f32.mrf.mxu0
        %1821 = vmatprep.mubr.f32.mxu0 0.0
        %1822 = vmatmul.mubr.f32.gmra.mxu0 %v433
        %v1823 = vpop.f32.mrf.mxu0
        %v1824 = vadd.f32 0.0, %v1823
        %v1825 = vpop.f32.mrf.mxu0
        %1826 = vmatprep.mubr.f32.mxu0 0.0
        %1827 = vmatmul.mubr.f32.gmra.mxu0 %v435
        %v1828 = vpop.f32.mrf.mxu0
        %v1829 = vadd.f32 0.0, %v1828
        %v1830 = vpop.f32.mrf.mxu0
        %1831 = vmatprep.mubr.f32.mxu0 0.0
        %1832 = vmatmul.mubr.f32.gmra.mxu0 %v437
        %v1833 = vpop.f32.mrf.mxu0
        %v1834 = vadd.f32 0.0, %v1833
        %v1835 = vpop.f32.mrf.mxu0
        %1836 = vmatprep.mubr.f32.mxu0 0.0
        %1837 = vmatmul.mubr.f32.gmra.mxu0 %v439
        %v1838 = vpop.f32.mrf.mxu0
        %v1839 = vadd.f32 0.0, %v1838
        %v1840 = vpop.f32.mrf.mxu0
        %1841 = vmatprep.mubr.f32.mxu0 0.0
        %1842 = vmatmul.mubr.f32.gmra.mxu0 %v441
        %v1843 = vpop.f32.mrf.mxu0
        %v1844 = vadd.f32 0.0, %v1843
        %v1845 = vpop.f32.mrf.mxu0
        %1846 = vmatprep.mubr.f32.mxu0 0.0
        %1847 = vmatmul.mubr.f32.gmra.mxu0 %v443
        %v1848 = vpop.f32.mrf.mxu0
        %v1849 = vadd.f32 0.0, %v1848
        %v1850 = vpop.f32.mrf.mxu0
        %1851 = vmatprep.mubr.f32.mxu0 0.0
        %1852 = vmatmul.mubr.f32.gmra.mxu0 %v445
        %v1853 = vpop.f32.mrf.mxu0
        %v1854 = vadd.f32 0.0, %v1853
        %v1855 = vpop.f32.mrf.mxu0
        %1856 = vmatprep.mubr.f32.mxu0 0.0
        %1857 = vmatmul.mubr.f32.gmra.mxu0 %v447
        %v1858 = vpop.f32.mrf.mxu0
        %v1859 = vadd.f32 0.0, %v1858
        %v1860 = vpop.f32.mrf.mxu0
        %1861 = vmatprep.mubr.f32.mxu0 0.0
        %1862 = vmatmul.mubr.f32.gmra.mxu0 %v449
        %v1863 = vpop.f32.mrf.mxu0
        %v1864 = vadd.f32 0.0, %v1863
        %v1865 = vpop.f32.mrf.mxu0
        %1866 = vmatprep.mubr.f32.mxu0 0.0
        %1867 = vmatmul.mubr.f32.gmra.mxu0 %v451
        %v1868 = vpop.f32.mrf.mxu0
        %v1869 = vadd.f32 0.0, %v1868
        %v1870 = vpop.f32.mrf.mxu0
        %1871 = vmatprep.mubr.f32.mxu0 0.0
        %1872 = vmatmul.mubr.f32.gmra.mxu0 %v453
        %v1873 = vpop.f32.mrf.mxu0
        %v1874 = vadd.f32 0.0, %v1873
        %v1875 = vpop.f32.mrf.mxu0
        %1876 = vmatprep.mubr.f32.mxu0 0.0
        %1877 = vmatmul.mubr.f32.gmra.mxu0 %v455
        %v1878 = vpop.f32.mrf.mxu0
        %v1879 = vadd.f32 0.0, %v1878
        %v1880 = vpop.f32.mrf.mxu0
        %1881 = vmatprep.mubr.f32.mxu0 0.0
        %1882 = vmatmul.mubr.f32.gmra.mxu0 %v457
        %v1883 = vpop.f32.mrf.mxu0
        %v1884 = vadd.f32 0.0, %v1883
        %v1885 = vpop.f32.mrf.mxu0
        %1886 = vmatprep.mubr.f32.mxu0 0.0
        %1887 = vmatmul.mubr.f32.gmra.mxu0 %v459
        %v1888 = vpop.f32.mrf.mxu0
        %v1889 = vadd.f32 0.0, %v1888
        %v1890 = vpop.f32.mrf.mxu0
        %1891 = vmatprep.mubr.f32.mxu0 0.0
        %1892 = vmatmul.mubr.f32.gmra.mxu0 %v1673
        %v1893 = vpop.f32.mrf.mxu0
        %v1894 = vadd.f32 0.0, %v1893
        %v1895 = vpop.f32.mrf.mxu0
        %1896 = vmatprep.mubr.f32.mxu0 0.0
        %1897 = vmatmul.mubr.f32.gmra.mxu0 %v1675
        %v1898 = vpop.f32.mrf.mxu0
        %v1899 = vadd.f32 0.0, %v1898
        %v1900 = vpop.f32.mrf.mxu0
        %1901 = vdwg.mxu0
        %v1902 = vadd.f32 %v1626, %v1744
        %v1903 = vadd.f32 %v1627, %v1749
        %v1904 = vadd.f32 %v1628, %v1754
        %v1905 = vadd.f32 %v1629, %v1759
        %v1906 = vadd.f32 %v1630, %v1764
        %v1907 = vadd.f32 %v1631, %v1769
        %v1908 = vadd.f32 %v1632, %v1774
        %v1909 = vadd.f32 %v1633, %v1779
        %v1910 = vadd.f32 %v1634, %v1784
        %v1911 = vadd.f32 %v1635, %v1789
        %v1912 = vadd.f32 %v1636, %v1794
        %v1913 = vadd.f32 %v1637, %v1799
        %v1914 = vadd.f32 %v1638, %v1804
        %v1915 = vadd.f32 %v1639, %v1809
        %v1916 = vadd.f32 %v1640, %v1814
        %v1917 = vadd.f32 %v1641, %v1819
        %v1918 = vadd.f32 %v1642, %v1824
        %v1919 = vadd.f32 %v1643, %v1829
        %v1920 = vadd.f32 %v1644, %v1834
        %v1921 = vadd.f32 %v1645, %v1839
        %v1922 = vadd.f32 %v1646, %v1844
        %v1923 = vadd.f32 %v1647, %v1849
        %v1924 = vadd.f32 %v1648, %v1854
        %v1925 = vadd.f32 %v1649, %v1859
        %v1926 = vadd.f32 %v1650, %v1864
        %v1927 = vadd.f32 %v1651, %v1869
        %v1928 = vadd.f32 %v1652, %v1874
        %v1929 = vadd.f32 %v1653, %v1879
        %v1930 = vadd.f32 %v1654, %v1884
        %v1931 = vadd.f32 %v1655, %v1889
        %v1932 = vadd.f32 %v1656, %v1894
        %v1933 = vadd.f32 %v1657, %v1899
        %v1934 = vrot.slane %v244, 2
        %v1935 = vrot.slane %v245, 2
        %v1936 = vsel %vm975, %v1934, %v1935
        %v1937 = vrot.slane %v246, 2
        %v1938 = vsel %vm975, %v1935, %v1937
        %s1939 = scalar_lea.vmem %s1, 320
        %v1940 = vld [vmem:[%s1939] sm:$0xff]
        %v1941 = vld [vmem:[%s1939 + $0x8] sm:$0xff]
        %v1942 = vld [vmem:[%s1939 + $0x10] sm:$0xff]
        %v1943 = vld [vmem:[%s1939 + $0x18] sm:$0xff]
        %v1944 = vld [vmem:[%s1939 + $0x20] sm:$0xff]
        %v1945 = vld [vmem:[%s1939 + $0x28] sm:$0xff]
        %v1946 = vld [vmem:[%s1939 + $0x30] sm:$0xff]
        %v1947 = vld [vmem:[%s1939 + $0x38] sm:$0xff]
        %v1948 = vsel %vm396, %v1936, 0
        %v1950 = vsel %vm396, %v1938, 0
        %1952 = vmatprep.subr.mxu0 0.0
        %1953 = vmatpush1.msra.mxu0 0.0
        %1954 = vmatprep.subr.mxu0 0.0
        %1955 = vmatpush1.msra.mxu0 0.0
        %1956 = vmatprep.subr.mxu0 0.0
        %1957 = vmatpush1.msra.mxu0 0.0
        %1958 = vmatprep.subr.mxu0 0.0
        %1959 = vmatpush1.msra.mxu0 0.0
        %1960 = vmatprep.subr.mxu0 0.0
        %1961 = vmatpush1.msra.mxu0 0.0
        %1962 = vmatprep.subr.mxu0 0.0
        %1963 = vmatpush1.msra.mxu0 0.0
        %1964 = vmatprep.subr.mxu0 0.0
        %1965 = vmatpush1.msra.mxu0 0.0
        %1966 = vmatprep.subr.mxu0 0.0
        %1967 = vmatpush1.msra.mxu0 0.0
        %1968 = vmatprep.subr.mxu0 0.0
        %1969 = vmatpush1.msra.mxu0 %v1947
        %1970 = vmatprep.subr.mxu0 0.0
        %1971 = vmatpush1.msra.mxu0 %v1946
        %1972 = vmatprep.subr.mxu0 0.0
        %1973 = vmatpush1.msra.mxu0 %v1945
        %1974 = vmatprep.subr.mxu0 0.0
        %1975 = vmatpush1.msra.mxu0 %v1944
        %1976 = vmatprep.subr.mxu0 0.0
        %1977 = vmatpush1.msra.mxu0 %v1943
        %1978 = vmatprep.subr.mxu0 0.0
        %1979 = vmatpush1.msra.mxu0 %v1942
        %1980 = vmatprep.subr.mxu0 0.0
        %1981 = vmatpush1.msra.mxu0 %v1941
        %1982 = vmatprep.subr.mxu0 0.0
        %1983 = vmatpush1.msra.mxu0 %v1940
        %1984 = vmatprep.subr.mxu0 0.0
        %1985 = vmatpush2.msra.mxu0 0.0
        %1986 = vmatprep.subr.mxu0 0.0
        %1987 = vmatpush2.msra.mxu0 0.0
        %1988 = vmatprep.subr.mxu0 0.0
        %1989 = vmatpush2.msra.mxu0 0.0
        %1990 = vmatprep.subr.mxu0 0.0
        %1991 = vmatpush2.msra.mxu0 0.0
        %1992 = vmatprep.subr.mxu0 0.0
        %1993 = vmatpush2.msra.mxu0 0.0
        %1994 = vmatprep.subr.mxu0 0.0
        %1995 = vmatpush2.msra.mxu0 0.0
        %1996 = vmatprep.subr.mxu0 0.0
        %1997 = vmatpush2.msra.mxu0 0.0
        %1998 = vmatprep.subr.mxu0 0.0
        %1999 = vmatpush2.msra.mxu0 0.0
        %2000 = vmatprep.subr.mxu0 0.0
        %2001 = vmatpush2.msra.mxu0 0.0
        %2002 = vmatprep.subr.mxu0 0.0
        %2003 = vmatpush2.msra.mxu0 0.0
        %2004 = vmatprep.subr.mxu0 0.0
        %2005 = vmatpush2.msra.mxu0 0.0
        %2006 = vmatprep.subr.mxu0 0.0
        %2007 = vmatpush2.msra.mxu0 0.0
        %2008 = vmatprep.subr.mxu0 0.0
        %2009 = vmatpush2.msra.mxu0 0.0
        %2010 = vmatprep.subr.mxu0 0.0
        %2011 = vmatpush2.msra.mxu0 0.0
        %2012 = vmatprep.subr.mxu0 0.0
        %2013 = vmatpush2.msra.mxu0 0.0
        %2014 = vmatprep.subr.mxu0 0.0
        %2015 = vmatpush2.msra.mxu0 0.0
        %2016 = vmatprep.mubr.f32.mxu0 0.0
        %2017 = vmatmul.mubr.f32.gmra.mxu0 %v1069
        %v2018 = vpop.f32.mrf.mxu0
        %v2019 = vadd.f32 0.0, %v2018
        %v2020 = vpop.f32.mrf.mxu0
        %2021 = vmatprep.mubr.f32.mxu0 0.0
        %2022 = vmatmul.mubr.f32.gmra.mxu0 %v1071
        %v2023 = vpop.f32.mrf.mxu0
        %v2024 = vadd.f32 0.0, %v2023
        %v2025 = vpop.f32.mrf.mxu0
        %2026 = vmatprep.mubr.f32.mxu0 0.0
        %2027 = vmatmul.mubr.f32.gmra.mxu0 %v1073
        %v2028 = vpop.f32.mrf.mxu0
        %v2029 = vadd.f32 0.0, %v2028
        %v2030 = vpop.f32.mrf.mxu0
        %2031 = vmatprep.mubr.f32.mxu0 0.0
        %2032 = vmatmul.mubr.f32.gmra.mxu0 %v1075
        %v2033 = vpop.f32.mrf.mxu0
        %v2034 = vadd.f32 0.0, %v2033
        %v2035 = vpop.f32.mrf.mxu0
        %2036 = vmatprep.mubr.f32.mxu0 0.0
        %2037 = vmatmul.mubr.f32.gmra.mxu0 %v1077
        %v2038 = vpop.f32.mrf.mxu0
        %v2039 = vadd.f32 0.0, %v2038
        %v2040 = vpop.f32.mrf.mxu0
        %2041 = vmatprep.mubr.f32.mxu0 0.0
        %2042 = vmatmul.mubr.f32.gmra.mxu0 %v1079
        %v2043 = vpop.f32.mrf.mxu0
        %v2044 = vadd.f32 0.0, %v2043
        %v2045 = vpop.f32.mrf.mxu0
        %2046 = vmatprep.mubr.f32.mxu0 0.0
        %2047 = vmatmul.mubr.f32.gmra.mxu0 %v1081
        %v2048 = vpop.f32.mrf.mxu0
        %v2049 = vadd.f32 0.0, %v2048
        %v2050 = vpop.f32.mrf.mxu0
        %2051 = vmatprep.mubr.f32.mxu0 0.0
        %2052 = vmatmul.mubr.f32.gmra.mxu0 %v1083
        %v2053 = vpop.f32.mrf.mxu0
        %v2054 = vadd.f32 0.0, %v2053
        %v2055 = vpop.f32.mrf.mxu0
        %2056 = vmatprep.mubr.f32.mxu0 0.0
        %2057 = vmatmul.mubr.f32.gmra.mxu0 %v1085
        %v2058 = vpop.f32.mrf.mxu0
        %v2059 = vadd.f32 0.0, %v2058
        %v2060 = vpop.f32.mrf.mxu0
        %2061 = vmatprep.mubr.f32.mxu0 0.0
        %2062 = vmatmul.mubr.f32.gmra.mxu0 %v1087
        %v2063 = vpop.f32.mrf.mxu0
        %v2064 = vadd.f32 0.0, %v2063
        %v2065 = vpop.f32.mrf.mxu0
        %2066 = vmatprep.mubr.f32.mxu0 0.0
        %2067 = vmatmul.mubr.f32.gmra.mxu0 %v1089
        %v2068 = vpop.f32.mrf.mxu0
        %v2069 = vadd.f32 0.0, %v2068
        %v2070 = vpop.f32.mrf.mxu0
        %2071 = vmatprep.mubr.f32.mxu0 0.0
        %2072 = vmatmul.mubr.f32.gmra.mxu0 %v1091
        %v2073 = vpop.f32.mrf.mxu0
        %v2074 = vadd.f32 0.0, %v2073
        %v2075 = vpop.f32.mrf.mxu0
        %2076 = vmatprep.mubr.f32.mxu0 0.0
        %2077 = vmatmul.mubr.f32.gmra.mxu0 %v1093
        %v2078 = vpop.f32.mrf.mxu0
        %v2079 = vadd.f32 0.0, %v2078
        %v2080 = vpop.f32.mrf.mxu0
        %2081 = vmatprep.mubr.f32.mxu0 0.0
        %2082 = vmatmul.mubr.f32.gmra.mxu0 %v1095
        %v2083 = vpop.f32.mrf.mxu0
        %v2084 = vadd.f32 0.0, %v2083
        %v2085 = vpop.f32.mrf.mxu0
        %2086 = vmatprep.mubr.f32.mxu0 0.0
        %2087 = vmatmul.mubr.f32.gmra.mxu0 %v1097
        %v2088 = vpop.f32.mrf.mxu0
        %v2089 = vadd.f32 0.0, %v2088
        %v2090 = vpop.f32.mrf.mxu0
        %2091 = vmatprep.mubr.f32.mxu0 0.0
        %2092 = vmatmul.mubr.f32.gmra.mxu0 %v1099
        %v2093 = vpop.f32.mrf.mxu0
        %v2094 = vadd.f32 0.0, %v2093
        %v2095 = vpop.f32.mrf.mxu0
        %2096 = vmatprep.mubr.f32.mxu0 0.0
        %2097 = vmatmul.mubr.f32.gmra.mxu0 %v1101
        %v2098 = vpop.f32.mrf.mxu0
        %v2099 = vadd.f32 0.0, %v2098
        %v2100 = vpop.f32.mrf.mxu0
        %2101 = vmatprep.mubr.f32.mxu0 0.0
        %2102 = vmatmul.mubr.f32.gmra.mxu0 %v1103
        %v2103 = vpop.f32.mrf.mxu0
        %v2104 = vadd.f32 0.0, %v2103
        %v2105 = vpop.f32.mrf.mxu0
        %2106 = vmatprep.mubr.f32.mxu0 0.0
        %2107 = vmatmul.mubr.f32.gmra.mxu0 %v1105
        %v2108 = vpop.f32.mrf.mxu0
        %v2109 = vadd.f32 0.0, %v2108
        %v2110 = vpop.f32.mrf.mxu0
        %2111 = vmatprep.mubr.f32.mxu0 0.0
        %2112 = vmatmul.mubr.f32.gmra.mxu0 %v1107
        %v2113 = vpop.f32.mrf.mxu0
        %v2114 = vadd.f32 0.0, %v2113
        %v2115 = vpop.f32.mrf.mxu0
        %2116 = vmatprep.mubr.f32.mxu0 0.0
        %2117 = vmatmul.mubr.f32.gmra.mxu0 %v1109
        %v2118 = vpop.f32.mrf.mxu0
        %v2119 = vadd.f32 0.0, %v2118
        %v2120 = vpop.f32.mrf.mxu0
        %2121 = vmatprep.mubr.f32.mxu0 0.0
        %2122 = vmatmul.mubr.f32.gmra.mxu0 %v1111
        %v2123 = vpop.f32.mrf.mxu0
        %v2124 = vadd.f32 0.0, %v2123
        %v2125 = vpop.f32.mrf.mxu0
        %2126 = vmatprep.mubr.f32.mxu0 0.0
        %2127 = vmatmul.mubr.f32.gmra.mxu0 %v1113
        %v2128 = vpop.f32.mrf.mxu0
        %v2129 = vadd.f32 0.0, %v2128
        %v2130 = vpop.f32.mrf.mxu0
        %2131 = vmatprep.mubr.f32.mxu0 0.0
        %2132 = vmatmul.mubr.f32.gmra.mxu0 %v1115
        %v2133 = vpop.f32.mrf.mxu0
        %v2134 = vadd.f32 0.0, %v2133
        %v2135 = vpop.f32.mrf.mxu0
        %2136 = vmatprep.mubr.f32.mxu0 0.0
        %2137 = vmatmul.mubr.f32.gmra.mxu0 %v1117
        %v2138 = vpop.f32.mrf.mxu0
        %v2139 = vadd.f32 0.0, %v2138
        %v2140 = vpop.f32.mrf.mxu0
        %2141 = vmatprep.mubr.f32.mxu0 0.0
        %2142 = vmatmul.mubr.f32.gmra.mxu0 %v1119
        %v2143 = vpop.f32.mrf.mxu0
        %v2144 = vadd.f32 0.0, %v2143
        %v2145 = vpop.f32.mrf.mxu0
        %2146 = vmatprep.mubr.f32.mxu0 0.0
        %2147 = vmatmul.mubr.f32.gmra.mxu0 %v1121
        %v2148 = vpop.f32.mrf.mxu0
        %v2149 = vadd.f32 0.0, %v2148
        %v2150 = vpop.f32.mrf.mxu0
        %2151 = vmatprep.mubr.f32.mxu0 0.0
        %2152 = vmatmul.mubr.f32.gmra.mxu0 %v1123
        %v2153 = vpop.f32.mrf.mxu0
        %v2154 = vadd.f32 0.0, %v2153
        %v2155 = vpop.f32.mrf.mxu0
        %2156 = vmatprep.mubr.f32.mxu0 0.0
        %2157 = vmatmul.mubr.f32.gmra.mxu0 %v1125
        %v2158 = vpop.f32.mrf.mxu0
        %v2159 = vadd.f32 0.0, %v2158
        %v2160 = vpop.f32.mrf.mxu0
        %2161 = vmatprep.mubr.f32.mxu0 0.0
        %2162 = vmatmul.mubr.f32.gmra.mxu0 %v1127
        %v2163 = vpop.f32.mrf.mxu0
        %v2164 = vadd.f32 0.0, %v2163
        %v2165 = vpop.f32.mrf.mxu0
        %2166 = vmatprep.mubr.f32.mxu0 0.0
        %2167 = vmatmul.mubr.f32.gmra.mxu0 %v1948
        %v2168 = vpop.f32.mrf.mxu0
        %v2169 = vadd.f32 0.0, %v2168
        %v2170 = vpop.f32.mrf.mxu0
        %2171 = vmatprep.mubr.f32.mxu0 0.0
        %2172 = vmatmul.mubr.f32.gmra.mxu0 %v1950
        %v2173 = vpop.f32.mrf.mxu0
        %v2174 = vadd.f32 0.0, %v2173
        %v2175 = vpop.f32.mrf.mxu0
        %2176 = vdwg.mxu0
        %v2177 = vadd.f32 %v1902, %v2019
        %v2178 = vadd.f32 %v1903, %v2024
        %v2179 = vadd.f32 %v1904, %v2029
        %v2180 = vadd.f32 %v1905, %v2034
        %v2181 = vadd.f32 %v1906, %v2039
        %v2182 = vadd.f32 %v1907, %v2044
        %v2183 = vadd.f32 %v1908, %v2049
        %v2184 = vadd.f32 %v1909, %v2054
        %v2185 = vadd.f32 %v1910, %v2059
        %v2186 = vadd.f32 %v1911, %v2064
        %v2187 = vadd.f32 %v1912, %v2069
        %v2188 = vadd.f32 %v1913, %v2074
        %v2189 = vadd.f32 %v1914, %v2079
        %v2190 = vadd.f32 %v1915, %v2084
        %v2191 = vadd.f32 %v1916, %v2089
        %v2192 = vadd.f32 %v1917, %v2094
        %v2193 = vadd.f32 %v1918, %v2099
        %v2194 = vadd.f32 %v1919, %v2104
        %v2195 = vadd.f32 %v1920, %v2109
        %v2196 = vadd.f32 %v1921, %v2114
        %v2197 = vadd.f32 %v1922, %v2119
        %v2198 = vadd.f32 %v1923, %v2124
        %v2199 = vadd.f32 %v1924, %v2129
        %v2200 = vadd.f32 %v1925, %v2134
        %v2201 = vadd.f32 %v1926, %v2139
        %v2202 = vadd.f32 %v1927, %v2144
        %v2203 = vadd.f32 %v1928, %v2149
        %v2204 = vadd.f32 %v1929, %v2154
        %v2205 = vadd.f32 %v1930, %v2159
        %v2206 = vadd.f32 %v1931, %v2164
        %v2207 = vadd.f32 %v1932, %v2169
        %v2208 = vadd.f32 %v1933, %v2174
        %s2209 = scalar_lea.vmem %s1, 384
        %v2210 = vld [vmem:[%s2209] sm:$0xff]
        %v2211 = vld [vmem:[%s2209 + $0x8] sm:$0xff]
        %v2212 = vld [vmem:[%s2209 + $0x10] sm:$0xff]
        %v2213 = vld [vmem:[%s2209 + $0x18] sm:$0xff]
        %v2214 = vld [vmem:[%s2209 + $0x20] sm:$0xff]
        %v2215 = vld [vmem:[%s2209 + $0x28] sm:$0xff]
        %v2216 = vld [vmem:[%s2209 + $0x30] sm:$0xff]
        %v2217 = vld [vmem:[%s2209 + $0x38] sm:$0xff]
        %v2219 = vsel %vm396, %v247, 0
        %v2222 = vsel %vm396, %v248, 0
        %2224 = vmatprep.subr.mxu0 0.0
        %2225 = vmatpush1.msra.mxu0 0.0
        %2226 = vmatprep.subr.mxu0 0.0
        %2227 = vmatpush1.msra.mxu0 0.0
        %2228 = vmatprep.subr.mxu0 0.0
        %2229 = vmatpush1.msra.mxu0 0.0
        %2230 = vmatprep.subr.mxu0 0.0
        %2231 = vmatpush1.msra.mxu0 0.0
        %2232 = vmatprep.subr.mxu0 0.0
        %2233 = vmatpush1.msra.mxu0 0.0
        %2234 = vmatprep.subr.mxu0 0.0
        %2235 = vmatpush1.msra.mxu0 0.0
        %2236 = vmatprep.subr.mxu0 0.0
        %2237 = vmatpush1.msra.mxu0 0.0
        %2238 = vmatprep.subr.mxu0 0.0
        %2239 = vmatpush1.msra.mxu0 0.0
        %2240 = vmatprep.subr.mxu0 0.0
        %2241 = vmatpush1.msra.mxu0 %v2217
        %2242 = vmatprep.subr.mxu0 0.0
        %2243 = vmatpush1.msra.mxu0 %v2216
        %2244 = vmatprep.subr.mxu0 0.0
        %2245 = vmatpush1.msra.mxu0 %v2215
        %2246 = vmatprep.subr.mxu0 0.0
        %2247 = vmatpush1.msra.mxu0 %v2214
        %2248 = vmatprep.subr.mxu0 0.0
        %2249 = vmatpush1.msra.mxu0 %v2213
        %2250 = vmatprep.subr.mxu0 0.0
        %2251 = vmatpush1.msra.mxu0 %v2212
        %2252 = vmatprep.subr.mxu0 0.0
        %2253 = vmatpush1.msra.mxu0 %v2211
        %2254 = vmatprep.subr.mxu0 0.0
        %2255 = vmatpush1.msra.mxu0 %v2210
        %2256 = vmatprep.subr.mxu0 0.0
        %2257 = vmatpush2.msra.mxu0 0.0
        %2258 = vmatprep.subr.mxu0 0.0
        %2259 = vmatpush2.msra.mxu0 0.0
        %2260 = vmatprep.subr.mxu0 0.0
        %2261 = vmatpush2.msra.mxu0 0.0
        %2262 = vmatprep.subr.mxu0 0.0
        %2263 = vmatpush2.msra.mxu0 0.0
        %2264 = vmatprep.subr.mxu0 0.0
        %2265 = vmatpush2.msra.mxu0 0.0
        %2266 = vmatprep.subr.mxu0 0.0
        %2267 = vmatpush2.msra.mxu0 0.0
        %2268 = vmatprep.subr.mxu0 0.0
        %2269 = vmatpush2.msra.mxu0 0.0
        %2270 = vmatprep.subr.mxu0 0.0
        %2271 = vmatpush2.msra.mxu0 0.0
        %2272 = vmatprep.subr.mxu0 0.0
        %2273 = vmatpush2.msra.mxu0 0.0
        %2274 = vmatprep.subr.mxu0 0.0
        %2275 = vmatpush2.msra.mxu0 0.0
        %2276 = vmatprep.subr.mxu0 0.0
        %2277 = vmatpush2.msra.mxu0 0.0
        %2278 = vmatprep.subr.mxu0 0.0
        %2279 = vmatpush2.msra.mxu0 0.0
        %2280 = vmatprep.subr.mxu0 0.0
        %2281 = vmatpush2.msra.mxu0 0.0
        %2282 = vmatprep.subr.mxu0 0.0
        %2283 = vmatpush2.msra.mxu0 0.0
        %2284 = vmatprep.subr.mxu0 0.0
        %2285 = vmatpush2.msra.mxu0 0.0
        %2286 = vmatprep.subr.mxu0 0.0
        %2287 = vmatpush2.msra.mxu0 0.0
        %2288 = vmatprep.mubr.f32.mxu0 0.0
        %2289 = vmatmul.mubr.f32.gmra.mxu0 %v694
        %v2290 = vpop.f32.mrf.mxu0
        %v2291 = vadd.f32 0.0, %v2290
        %v2292 = vpop.f32.mrf.mxu0
        %2293 = vmatprep.mubr.f32.mxu0 0.0
        %2294 = vmatmul.mubr.f32.gmra.mxu0 %v696
        %v2295 = vpop.f32.mrf.mxu0
        %v2296 = vadd.f32 0.0, %v2295
        %v2297 = vpop.f32.mrf.mxu0
        %2298 = vmatprep.mubr.f32.mxu0 0.0
        %2299 = vmatmul.mubr.f32.gmra.mxu0 %v698
        %v2300 = vpop.f32.mrf.mxu0
        %v2301 = vadd.f32 0.0, %v2300
        %v2302 = vpop.f32.mrf.mxu0
        %2303 = vmatprep.mubr.f32.mxu0 0.0
        %2304 = vmatmul.mubr.f32.gmra.mxu0 %v700
        %v2305 = vpop.f32.mrf.mxu0
        %v2306 = vadd.f32 0.0, %v2305
        %v2307 = vpop.f32.mrf.mxu0
        %2308 = vmatprep.mubr.f32.mxu0 0.0
        %2309 = vmatmul.mubr.f32.gmra.mxu0 %v702
        %v2310 = vpop.f32.mrf.mxu0
        %v2311 = vadd.f32 0.0, %v2310
        %v2312 = vpop.f32.mrf.mxu0
        %2313 = vmatprep.mubr.f32.mxu0 0.0
        %2314 = vmatmul.mubr.f32.gmra.mxu0 %v704
        %v2315 = vpop.f32.mrf.mxu0
        %v2316 = vadd.f32 0.0, %v2315
        %v2317 = vpop.f32.mrf.mxu0
        %2318 = vmatprep.mubr.f32.mxu0 0.0
        %2319 = vmatmul.mubr.f32.gmra.mxu0 %v706
        %v2320 = vpop.f32.mrf.mxu0
        %v2321 = vadd.f32 0.0, %v2320
        %v2322 = vpop.f32.mrf.mxu0
        %2323 = vmatprep.mubr.f32.mxu0 0.0
        %2324 = vmatmul.mubr.f32.gmra.mxu0 %v708
        %v2325 = vpop.f32.mrf.mxu0
        %v2326 = vadd.f32 0.0, %v2325
        %v2327 = vpop.f32.mrf.mxu0
        %2328 = vmatprep.mubr.f32.mxu0 0.0
        %2329 = vmatmul.mubr.f32.gmra.mxu0 %v710
        %v2330 = vpop.f32.mrf.mxu0
        %v2331 = vadd.f32 0.0, %v2330
        %v2332 = vpop.f32.mrf.mxu0
        %2333 = vmatprep.mubr.f32.mxu0 0.0
        %2334 = vmatmul.mubr.f32.gmra.mxu0 %v712
        %v2335 = vpop.f32.mrf.mxu0
        %v2336 = vadd.f32 0.0, %v2335
        %v2337 = vpop.f32.mrf.mxu0
        %2338 = vmatprep.mubr.f32.mxu0 0.0
        %2339 = vmatmul.mubr.f32.gmra.mxu0 %v714
        %v2340 = vpop.f32.mrf.mxu0
        %v2341 = vadd.f32 0.0, %v2340
        %v2342 = vpop.f32.mrf.mxu0
        %2343 = vmatprep.mubr.f32.mxu0 0.0
        %2344 = vmatmul.mubr.f32.gmra.mxu0 %v716
        %v2345 = vpop.f32.mrf.mxu0
        %v2346 = vadd.f32 0.0, %v2345
        %v2347 = vpop.f32.mrf.mxu0
        %2348 = vmatprep.mubr.f32.mxu0 0.0
        %2349 = vmatmul.mubr.f32.gmra.mxu0 %v718
        %v2350 = vpop.f32.mrf.mxu0
        %v2351 = vadd.f32 0.0, %v2350
        %v2352 = vpop.f32.mrf.mxu0
        %2353 = vmatprep.mubr.f32.mxu0 0.0
        %2354 = vmatmul.mubr.f32.gmra.mxu0 %v720
        %v2355 = vpop.f32.mrf.mxu0
        %v2356 = vadd.f32 0.0, %v2355
        %v2357 = vpop.f32.mrf.mxu0
        %2358 = vmatprep.mubr.f32.mxu0 0.0
        %2359 = vmatmul.mubr.f32.gmra.mxu0 %v722
        %v2360 = vpop.f32.mrf.mxu0
        %v2361 = vadd.f32 0.0, %v2360
        %v2362 = vpop.f32.mrf.mxu0
        %2363 = vmatprep.mubr.f32.mxu0 0.0
        %2364 = vmatmul.mubr.f32.gmra.mxu0 %v724
        %v2365 = vpop.f32.mrf.mxu0
        %v2366 = vadd.f32 0.0, %v2365
        %v2367 = vpop.f32.mrf.mxu0
        %2368 = vmatprep.mubr.f32.mxu0 0.0
        %2369 = vmatmul.mubr.f32.gmra.mxu0 %v726
        %v2370 = vpop.f32.mrf.mxu0
        %v2371 = vadd.f32 0.0, %v2370
        %v2372 = vpop.f32.mrf.mxu0
        %2373 = vmatprep.mubr.f32.mxu0 0.0
        %2374 = vmatmul.mubr.f32.gmra.mxu0 %v728
        %v2375 = vpop.f32.mrf.mxu0
        %v2376 = vadd.f32 0.0, %v2375
        %v2377 = vpop.f32.mrf.mxu0
        %2378 = vmatprep.mubr.f32.mxu0 0.0
        %2379 = vmatmul.mubr.f32.gmra.mxu0 %v730
        %v2380 = vpop.f32.mrf.mxu0
        %v2381 = vadd.f32 0.0, %v2380
        %v2382 = vpop.f32.mrf.mxu0
        %2383 = vmatprep.mubr.f32.mxu0 0.0
        %2384 = vmatmul.mubr.f32.gmra.mxu0 %v732
        %v2385 = vpop.f32.mrf.mxu0
        %v2386 = vadd.f32 0.0, %v2385
        %v2387 = vpop.f32.mrf.mxu0
        %2388 = vmatprep.mubr.f32.mxu0 0.0
        %2389 = vmatmul.mubr.f32.gmra.mxu0 %v734
        %v2390 = vpop.f32.mrf.mxu0
        %v2391 = vadd.f32 0.0, %v2390
        %v2392 = vpop.f32.mrf.mxu0
        %2393 = vmatprep.mubr.f32.mxu0 0.0
        %2394 = vmatmul.mubr.f32.gmra.mxu0 %v736
        %v2395 = vpop.f32.mrf.mxu0
        %v2396 = vadd.f32 0.0, %v2395
        %v2397 = vpop.f32.mrf.mxu0
        %2398 = vmatprep.mubr.f32.mxu0 0.0
        %2399 = vmatmul.mubr.f32.gmra.mxu0 %v738
        %v2400 = vpop.f32.mrf.mxu0
        %v2401 = vadd.f32 0.0, %v2400
        %v2402 = vpop.f32.mrf.mxu0
        %2403 = vmatprep.mubr.f32.mxu0 0.0
        %2404 = vmatmul.mubr.f32.gmra.mxu0 %v740
        %v2405 = vpop.f32.mrf.mxu0
        %v2406 = vadd.f32 0.0, %v2405
        %v2407 = vpop.f32.mrf.mxu0
        %2408 = vmatprep.mubr.f32.mxu0 0.0
        %2409 = vmatmul.mubr.f32.gmra.mxu0 %v742
        %v2410 = vpop.f32.mrf.mxu0
        %v2411 = vadd.f32 0.0, %v2410
        %v2412 = vpop.f32.mrf.mxu0
        %2413 = vmatprep.mubr.f32.mxu0 0.0
        %2414 = vmatmul.mubr.f32.gmra.mxu0 %v744
        %v2415 = vpop.f32.mrf.mxu0
        %v2416 = vadd.f32 0.0, %v2415
        %v2417 = vpop.f32.mrf.mxu0
        %2418 = vmatprep.mubr.f32.mxu0 0.0
        %2419 = vmatmul.mubr.f32.gmra.mxu0 %v746
        %v2420 = vpop.f32.mrf.mxu0
        %v2421 = vadd.f32 0.0, %v2420
        %v2422 = vpop.f32.mrf.mxu0
        %2423 = vmatprep.mubr.f32.mxu0 0.0
        %2424 = vmatmul.mubr.f32.gmra.mxu0 %v748
        %v2425 = vpop.f32.mrf.mxu0
        %v2426 = vadd.f32 0.0, %v2425
        %v2427 = vpop.f32.mrf.mxu0
        %2428 = vmatprep.mubr.f32.mxu0 0.0
        %2429 = vmatmul.mubr.f32.gmra.mxu0 %v1396
        %v2430 = vpop.f32.mrf.mxu0
        %v2431 = vadd.f32 0.0, %v2430
        %v2432 = vpop.f32.mrf.mxu0
        %2433 = vmatprep.mubr.f32.mxu0 0.0
        %2434 = vmatmul.mubr.f32.gmra.mxu0 %v1399
        %v2435 = vpop.f32.mrf.mxu0
        %v2436 = vadd.f32 0.0, %v2435
        %v2437 = vpop.f32.mrf.mxu0
        %2438 = vmatprep.mubr.f32.mxu0 0.0
        %2439 = vmatmul.mubr.f32.gmra.mxu0 %v2219
        %v2440 = vpop.f32.mrf.mxu0
        %v2441 = vadd.f32 0.0, %v2440
        %v2442 = vpop.f32.mrf.mxu0
        %2443 = vmatprep.mubr.f32.mxu0 0.0
        %2444 = vmatmul.mubr.f32.gmra.mxu0 %v2222
        %v2445 = vpop.f32.mrf.mxu0
        %v2446 = vadd.f32 0.0, %v2445
        %v2447 = vpop.f32.mrf.mxu0
        %2448 = vdwg.mxu0
        %v2449 = vadd.f32 %v2177, %v2291
        %v2450 = vadd.f32 %v2178, %v2296
        %v2451 = vadd.f32 %v2179, %v2301
        %v2452 = vadd.f32 %v2180, %v2306
        %v2453 = vadd.f32 %v2181, %v2311
        %v2454 = vadd.f32 %v2182, %v2316
        %v2455 = vadd.f32 %v2183, %v2321
        %v2456 = vadd.f32 %v2184, %v2326
        %v2457 = vadd.f32 %v2185, %v2331
        %v2458 = vadd.f32 %v2186, %v2336
        %v2459 = vadd.f32 %v2187, %v2341
        %v2460 = vadd.f32 %v2188, %v2346
        %v2461 = vadd.f32 %v2189, %v2351
        %v2462 = vadd.f32 %v2190, %v2356
        %v2463 = vadd.f32 %v2191, %v2361
        %v2464 = vadd.f32 %v2192, %v2366
        %v2465 = vadd.f32 %v2193, %v2371
        %v2466 = vadd.f32 %v2194, %v2376
        %v2467 = vadd.f32 %v2195, %v2381
        %v2468 = vadd.f32 %v2196, %v2386
        %v2469 = vadd.f32 %v2197, %v2391
        %v2470 = vadd.f32 %v2198, %v2396
        %v2471 = vadd.f32 %v2199, %v2401
        %v2472 = vadd.f32 %v2200, %v2406
        %v2473 = vadd.f32 %v2201, %v2411
        %v2474 = vadd.f32 %v2202, %v2416
        %v2475 = vadd.f32 %v2203, %v2421
        %v2476 = vadd.f32 %v2204, %v2426
        %v2477 = vadd.f32 %v2205, %v2431
        %v2478 = vadd.f32 %v2206, %v2436
        %v2479 = vadd.f32 %v2207, %v2441
        %v2480 = vadd.f32 %v2208, %v2446
        %v2482 = vrot.slane %v247, 1
        %v2483 = vrot.slane %v248, 1
        %v2484 = vsel %vm306, %v2482, %v2483
        %v2485 = vrot.slane %v249, 1
        %v2486 = vsel %vm306, %v2483, %v2485
        %s2487 = scalar_lea.vmem %s1, 448
        %v2488 = vld [vmem:[%s2487] sm:$0xff]
        %v2489 = vld [vmem:[%s2487 + $0x8] sm:$0xff]
        %v2490 = vld [vmem:[%s2487 + $0x10] sm:$0xff]
        %v2491 = vld [vmem:[%s2487 + $0x18] sm:$0xff]
        %v2492 = vld [vmem:[%s2487 + $0x20] sm:$0xff]
        %v2493 = vld [vmem:[%s2487 + $0x28] sm:$0xff]
        %v2494 = vld [vmem:[%s2487 + $0x30] sm:$0xff]
        %v2495 = vld [vmem:[%s2487 + $0x38] sm:$0xff]
        %v2496 = vsel %vm396, %v2484, 0
        %v2498 = vsel %vm396, %v2486, 0
        %2500 = vmatprep.subr.mxu0 0.0
        %2501 = vmatpush1.msra.mxu0 0.0
        %2502 = vmatprep.subr.mxu0 0.0
        %2503 = vmatpush1.msra.mxu0 0.0
        %2504 = vmatprep.subr.mxu0 0.0
        %2505 = vmatpush1.msra.mxu0 0.0
        %2506 = vmatprep.subr.mxu0 0.0
        %2507 = vmatpush1.msra.mxu0 0.0
        %2508 = vmatprep.subr.mxu0 0.0
        %2509 = vmatpush1.msra.mxu0 0.0
        %2510 = vmatprep.subr.mxu0 0.0
        %2511 = vmatpush1.msra.mxu0 0.0
        %2512 = vmatprep.subr.mxu0 0.0
        %2513 = vmatpush1.msra.mxu0 0.0
        %2514 = vmatprep.subr.mxu0 0.0
        %2515 = vmatpush1.msra.mxu0 0.0
        %2516 = vmatprep.subr.mxu0 0.0
        %2517 = vmatpush1.msra.mxu0 %v2495
        %2518 = vmatprep.subr.mxu0 0.0
        %2519 = vmatpush1.msra.mxu0 %v2494
        %2520 = vmatprep.subr.mxu0 0.0
        %2521 = vmatpush1.msra.mxu0 %v2493
        %2522 = vmatprep.subr.mxu0 0.0
        %2523 = vmatpush1.msra.mxu0 %v2492
        %2524 = vmatprep.subr.mxu0 0.0
        %2525 = vmatpush1.msra.mxu0 %v2491
        %2526 = vmatprep.subr.mxu0 0.0
        %2527 = vmatpush1.msra.mxu0 %v2490
        %2528 = vmatprep.subr.mxu0 0.0
        %2529 = vmatpush1.msra.mxu0 %v2489
        %2530 = vmatprep.subr.mxu0 0.0
        %2531 = vmatpush1.msra.mxu0 %v2488
        %2532 = vmatprep.subr.mxu0 0.0
        %2533 = vmatpush2.msra.mxu0 0.0
        %2534 = vmatprep.subr.mxu0 0.0
        %2535 = vmatpush2.msra.mxu0 0.0
        %2536 = vmatprep.subr.mxu0 0.0
        %2537 = vmatpush2.msra.mxu0 0.0
        %2538 = vmatprep.subr.mxu0 0.0
        %2539 = vmatpush2.msra.mxu0 0.0
        %2540 = vmatprep.subr.mxu0 0.0
        %2541 = vmatpush2.msra.mxu0 0.0
        %2542 = vmatprep.subr.mxu0 0.0
        %2543 = vmatpush2.msra.mxu0 0.0
        %2544 = vmatprep.subr.mxu0 0.0
        %2545 = vmatpush2.msra.mxu0 0.0
        %2546 = vmatprep.subr.mxu0 0.0
        %2547 = vmatpush2.msra.mxu0 0.0
        %2548 = vmatprep.subr.mxu0 0.0
        %2549 = vmatpush2.msra.mxu0 0.0
        %2550 = vmatprep.subr.mxu0 0.0
        %2551 = vmatpush2.msra.mxu0 0.0
        %2552 = vmatprep.subr.mxu0 0.0
        %2553 = vmatpush2.msra.mxu0 0.0
        %2554 = vmatprep.subr.mxu0 0.0
        %2555 = vmatpush2.msra.mxu0 0.0
        %2556 = vmatprep.subr.mxu0 0.0
        %2557 = vmatpush2.msra.mxu0 0.0
        %2558 = vmatprep.subr.mxu0 0.0
        %2559 = vmatpush2.msra.mxu0 0.0
        %2560 = vmatprep.subr.mxu0 0.0
        %2561 = vmatpush2.msra.mxu0 0.0
        %2562 = vmatprep.subr.mxu0 0.0
        %2563 = vmatpush2.msra.mxu0 0.0
        %2564 = vmatprep.mubr.f32.mxu0 0.0
        %2565 = vmatmul.mubr.f32.gmra.mxu0 %v405
        %v2566 = vpop.f32.mrf.mxu0
        %v2567 = vadd.f32 0.0, %v2566
        %v2568 = vpop.f32.mrf.mxu0
        %2569 = vmatprep.mubr.f32.mxu0 0.0
        %2570 = vmatmul.mubr.f32.gmra.mxu0 %v407
        %v2571 = vpop.f32.mrf.mxu0
        %v2572 = vadd.f32 0.0, %v2571
        %v2573 = vpop.f32.mrf.mxu0
        %2574 = vmatprep.mubr.f32.mxu0 0.0
        %2575 = vmatmul.mubr.f32.gmra.mxu0 %v409
        %v2576 = vpop.f32.mrf.mxu0
        %v2577 = vadd.f32 0.0, %v2576
        %v2578 = vpop.f32.mrf.mxu0
        %2579 = vmatprep.mubr.f32.mxu0 0.0
        %2580 = vmatmul.mubr.f32.gmra.mxu0 %v411
        %v2581 = vpop.f32.mrf.mxu0
        %v2582 = vadd.f32 0.0, %v2581
        %v2583 = vpop.f32.mrf.mxu0
        %2584 = vmatprep.mubr.f32.mxu0 0.0
        %2585 = vmatmul.mubr.f32.gmra.mxu0 %v413
        %v2586 = vpop.f32.mrf.mxu0
        %v2587 = vadd.f32 0.0, %v2586
        %v2588 = vpop.f32.mrf.mxu0
        %2589 = vmatprep.mubr.f32.mxu0 0.0
        %2590 = vmatmul.mubr.f32.gmra.mxu0 %v415
        %v2591 = vpop.f32.mrf.mxu0
        %v2592 = vadd.f32 0.0, %v2591
        %v2593 = vpop.f32.mrf.mxu0
        %2594 = vmatprep.mubr.f32.mxu0 0.0
        %2595 = vmatmul.mubr.f32.gmra.mxu0 %v417
        %v2596 = vpop.f32.mrf.mxu0
        %v2597 = vadd.f32 0.0, %v2596
        %v2598 = vpop.f32.mrf.mxu0
        %2599 = vmatprep.mubr.f32.mxu0 0.0
        %2600 = vmatmul.mubr.f32.gmra.mxu0 %v419
        %v2601 = vpop.f32.mrf.mxu0
        %v2602 = vadd.f32 0.0, %v2601
        %v2603 = vpop.f32.mrf.mxu0
        %2604 = vmatprep.mubr.f32.mxu0 0.0
        %2605 = vmatmul.mubr.f32.gmra.mxu0 %v421
        %v2606 = vpop.f32.mrf.mxu0
        %v2607 = vadd.f32 0.0, %v2606
        %v2608 = vpop.f32.mrf.mxu0
        %2609 = vmatprep.mubr.f32.mxu0 0.0
        %2610 = vmatmul.mubr.f32.gmra.mxu0 %v423
        %v2611 = vpop.f32.mrf.mxu0
        %v2612 = vadd.f32 0.0, %v2611
        %v2613 = vpop.f32.mrf.mxu0
        %2614 = vmatprep.mubr.f32.mxu0 0.0
        %2615 = vmatmul.mubr.f32.gmra.mxu0 %v425
        %v2616 = vpop.f32.mrf.mxu0
        %v2617 = vadd.f32 0.0, %v2616
        %v2618 = vpop.f32.mrf.mxu0
        %2619 = vmatprep.mubr.f32.mxu0 0.0
        %2620 = vmatmul.mubr.f32.gmra.mxu0 %v427
        %v2621 = vpop.f32.mrf.mxu0
        %v2622 = vadd.f32 0.0, %v2621
        %v2623 = vpop.f32.mrf.mxu0
        %2624 = vmatprep.mubr.f32.mxu0 0.0
        %2625 = vmatmul.mubr.f32.gmra.mxu0 %v429
        %v2626 = vpop.f32.mrf.mxu0
        %v2627 = vadd.f32 0.0, %v2626
        %v2628 = vpop.f32.mrf.mxu0
        %2629 = vmatprep.mubr.f32.mxu0 0.0
        %2630 = vmatmul.mubr.f32.gmra.mxu0 %v431
        %v2631 = vpop.f32.mrf.mxu0
        %v2632 = vadd.f32 0.0, %v2631
        %v2633 = vpop.f32.mrf.mxu0
        %2634 = vmatprep.mubr.f32.mxu0 0.0
        %2635 = vmatmul.mubr.f32.gmra.mxu0 %v433
        %v2636 = vpop.f32.mrf.mxu0
        %v2637 = vadd.f32 0.0, %v2636
        %v2638 = vpop.f32.mrf.mxu0
        %2639 = vmatprep.mubr.f32.mxu0 0.0
        %2640 = vmatmul.mubr.f32.gmra.mxu0 %v435
        %v2641 = vpop.f32.mrf.mxu0
        %v2642 = vadd.f32 0.0, %v2641
        %v2643 = vpop.f32.mrf.mxu0
        %2644 = vmatprep.mubr.f32.mxu0 0.0
        %2645 = vmatmul.mubr.f32.gmra.mxu0 %v437
        %v2646 = vpop.f32.mrf.mxu0
        %v2647 = vadd.f32 0.0, %v2646
        %v2648 = vpop.f32.mrf.mxu0
        %2649 = vmatprep.mubr.f32.mxu0 0.0
        %2650 = vmatmul.mubr.f32.gmra.mxu0 %v439
        %v2651 = vpop.f32.mrf.mxu0
        %v2652 = vadd.f32 0.0, %v2651
        %v2653 = vpop.f32.mrf.mxu0
        %2654 = vmatprep.mubr.f32.mxu0 0.0
        %2655 = vmatmul.mubr.f32.gmra.mxu0 %v441
        %v2656 = vpop.f32.mrf.mxu0
        %v2657 = vadd.f32 0.0, %v2656
        %v2658 = vpop.f32.mrf.mxu0
        %2659 = vmatprep.mubr.f32.mxu0 0.0
        %2660 = vmatmul.mubr.f32.gmra.mxu0 %v443
        %v2661 = vpop.f32.mrf.mxu0
        %v2662 = vadd.f32 0.0, %v2661
        %v2663 = vpop.f32.mrf.mxu0
        %2664 = vmatprep.mubr.f32.mxu0 0.0
        %2665 = vmatmul.mubr.f32.gmra.mxu0 %v445
        %v2666 = vpop.f32.mrf.mxu0
        %v2667 = vadd.f32 0.0, %v2666
        %v2668 = vpop.f32.mrf.mxu0
        %2669 = vmatprep.mubr.f32.mxu0 0.0
        %2670 = vmatmul.mubr.f32.gmra.mxu0 %v447
        %v2671 = vpop.f32.mrf.mxu0
        %v2672 = vadd.f32 0.0, %v2671
        %v2673 = vpop.f32.mrf.mxu0
        %2674 = vmatprep.mubr.f32.mxu0 0.0
        %2675 = vmatmul.mubr.f32.gmra.mxu0 %v449
        %v2676 = vpop.f32.mrf.mxu0
        %v2677 = vadd.f32 0.0, %v2676
        %v2678 = vpop.f32.mrf.mxu0
        %2679 = vmatprep.mubr.f32.mxu0 0.0
        %2680 = vmatmul.mubr.f32.gmra.mxu0 %v451
        %v2681 = vpop.f32.mrf.mxu0
        %v2682 = vadd.f32 0.0, %v2681
        %v2683 = vpop.f32.mrf.mxu0
        %2684 = vmatprep.mubr.f32.mxu0 0.0
        %2685 = vmatmul.mubr.f32.gmra.mxu0 %v453
        %v2686 = vpop.f32.mrf.mxu0
        %v2687 = vadd.f32 0.0, %v2686
        %v2688 = vpop.f32.mrf.mxu0
        %2689 = vmatprep.mubr.f32.mxu0 0.0
        %2690 = vmatmul.mubr.f32.gmra.mxu0 %v455
        %v2691 = vpop.f32.mrf.mxu0
        %v2692 = vadd.f32 0.0, %v2691
        %v2693 = vpop.f32.mrf.mxu0
        %2694 = vmatprep.mubr.f32.mxu0 0.0
        %2695 = vmatmul.mubr.f32.gmra.mxu0 %v457
        %v2696 = vpop.f32.mrf.mxu0
        %v2697 = vadd.f32 0.0, %v2696
        %v2698 = vpop.f32.mrf.mxu0
        %2699 = vmatprep.mubr.f32.mxu0 0.0
        %2700 = vmatmul.mubr.f32.gmra.mxu0 %v459
        %v2701 = vpop.f32.mrf.mxu0
        %v2702 = vadd.f32 0.0, %v2701
        %v2703 = vpop.f32.mrf.mxu0
        %2704 = vmatprep.mubr.f32.mxu0 0.0
        %2705 = vmatmul.mubr.f32.gmra.mxu0 %v1673
        %v2706 = vpop.f32.mrf.mxu0
        %v2707 = vadd.f32 0.0, %v2706
        %v2708 = vpop.f32.mrf.mxu0
        %2709 = vmatprep.mubr.f32.mxu0 0.0
        %2710 = vmatmul.mubr.f32.gmra.mxu0 %v1675
        %v2711 = vpop.f32.mrf.mxu0
        %v2712 = vadd.f32 0.0, %v2711
        %v2713 = vpop.f32.mrf.mxu0
        %2714 = vmatprep.mubr.f32.mxu0 0.0
        %2715 = vmatmul.mubr.f32.gmra.mxu0 %v2496
        %v2716 = vpop.f32.mrf.mxu0
        %v2717 = vadd.f32 0.0, %v2716
        %v2718 = vpop.f32.mrf.mxu0
        %2719 = vmatprep.mubr.f32.mxu0 0.0
        %2720 = vmatmul.mubr.f32.gmra.mxu0 %v2498
        %v2721 = vpop.f32.mrf.mxu0
        %v2722 = vadd.f32 0.0, %v2721
        %v2723 = vpop.f32.mrf.mxu0
        %2724 = vdwg.mxu0
        %v2725 = vadd.f32 %v2449, %v2567
        %v2726 = vadd.f32 %v2450, %v2572
        %v2727 = vadd.f32 %v2451, %v2577
        %v2728 = vadd.f32 %v2452, %v2582
        %v2729 = vadd.f32 %v2453, %v2587
        %v2730 = vadd.f32 %v2454, %v2592
        %v2731 = vadd.f32 %v2455, %v2597
        %v2732 = vadd.f32 %v2456, %v2602
        %v2733 = vadd.f32 %v2457, %v2607
        %v2734 = vadd.f32 %v2458, %v2612
        %v2735 = vadd.f32 %v2459, %v2617
        %v2736 = vadd.f32 %v2460, %v2622
        %v2737 = vadd.f32 %v2461, %v2627
        %v2738 = vadd.f32 %v2462, %v2632
        %v2739 = vadd.f32 %v2463, %v2637
        %v2740 = vadd.f32 %v2464, %v2642
        %v2741 = vadd.f32 %v2465, %v2647
        %v2742 = vadd.f32 %v2466, %v2652
        %v2743 = vadd.f32 %v2467, %v2657
        %v2744 = vadd.f32 %v2468, %v2662
        %v2745 = vadd.f32 %v2469, %v2667
        %v2746 = vadd.f32 %v2470, %v2672
        %v2747 = vadd.f32 %v2471, %v2677
        %v2748 = vadd.f32 %v2472, %v2682
        %v2749 = vadd.f32 %v2473, %v2687
        %v2750 = vadd.f32 %v2474, %v2692
        %v2751 = vadd.f32 %v2475, %v2697
        %v2752 = vadd.f32 %v2476, %v2702
        %v2753 = vadd.f32 %v2477, %v2707
        %v2754 = vadd.f32 %v2478, %v2712
        %v2755 = vadd.f32 %v2479, %v2717
        %v2756 = vadd.f32 %v2480, %v2722
        %v2757 = vrot.slane %v247, 2
        %v2758 = vrot.slane %v248, 2
        %v2759 = vsel %vm975, %v2757, %v2758
        %v2760 = vrot.slane %v249, 2
        %v2761 = vsel %vm975, %v2758, %v2760
        %s2762 = scalar_lea.vmem %s1, 512
        %v2763 = vld [vmem:[%s2762] sm:$0xff]
        %v2764 = vld [vmem:[%s2762 + $0x8] sm:$0xff]
        %v2765 = vld [vmem:[%s2762 + $0x10] sm:$0xff]
        %v2766 = vld [vmem:[%s2762 + $0x18] sm:$0xff]
        %v2767 = vld [vmem:[%s2762 + $0x20] sm:$0xff]
        %v2768 = vld [vmem:[%s2762 + $0x28] sm:$0xff]
        %v2769 = vld [vmem:[%s2762 + $0x30] sm:$0xff]
        %v2770 = vld [vmem:[%s2762 + $0x38] sm:$0xff]
        %v2771 = vsel %vm396, %v2759, 0
        %v2773 = vsel %vm396, %v2761, 0
        %2775 = vmatprep.subr.mxu0 0.0
        %2776 = vmatpush1.msra.mxu0 0.0
        %2777 = vmatprep.subr.mxu0 0.0
        %2778 = vmatpush1.msra.mxu0 0.0
        %2779 = vmatprep.subr.mxu0 0.0
        %2780 = vmatpush1.msra.mxu0 0.0
        %2781 = vmatprep.subr.mxu0 0.0
        %2782 = vmatpush1.msra.mxu0 0.0
        %2783 = vmatprep.subr.mxu0 0.0
        %2784 = vmatpush1.msra.mxu0 0.0
        %2785 = vmatprep.subr.mxu0 0.0
        %2786 = vmatpush1.msra.mxu0 0.0
        %2787 = vmatprep.subr.mxu0 0.0
        %2788 = vmatpush1.msra.mxu0 0.0
        %2789 = vmatprep.subr.mxu0 0.0
        %2790 = vmatpush1.msra.mxu0 0.0
        %2791 = vmatprep.subr.mxu0 0.0
        %2792 = vmatpush1.msra.mxu0 %v2770
        %2793 = vmatprep.subr.mxu0 0.0
        %2794 = vmatpush1.msra.mxu0 %v2769
        %2795 = vmatprep.subr.mxu0 0.0
        %2796 = vmatpush1.msra.mxu0 %v2768
        %2797 = vmatprep.subr.mxu0 0.0
        %2798 = vmatpush1.msra.mxu0 %v2767
        %2799 = vmatprep.subr.mxu0 0.0
        %2800 = vmatpush1.msra.mxu0 %v2766
        %2801 = vmatprep.subr.mxu0 0.0
        %2802 = vmatpush1.msra.mxu0 %v2765
        %2803 = vmatprep.subr.mxu0 0.0
        %2804 = vmatpush1.msra.mxu0 %v2764
        %2805 = vmatprep.subr.mxu0 0.0
        %2806 = vmatpush1.msra.mxu0 %v2763
        %2807 = vmatprep.subr.mxu0 0.0
        %2808 = vmatpush2.msra.mxu0 0.0
        %2809 = vmatprep.subr.mxu0 0.0
        %2810 = vmatpush2.msra.mxu0 0.0
        %2811 = vmatprep.subr.mxu0 0.0
        %2812 = vmatpush2.msra.mxu0 0.0
        %2813 = vmatprep.subr.mxu0 0.0
        %2814 = vmatpush2.msra.mxu0 0.0
        %2815 = vmatprep.subr.mxu0 0.0
        %2816 = vmatpush2.msra.mxu0 0.0
        %2817 = vmatprep.subr.mxu0 0.0
        %2818 = vmatpush2.msra.mxu0 0.0
        %2819 = vmatprep.subr.mxu0 0.0
        %2820 = vmatpush2.msra.mxu0 0.0
        %2821 = vmatprep.subr.mxu0 0.0
        %2822 = vmatpush2.msra.mxu0 0.0
        %2823 = vmatprep.subr.mxu0 0.0
        %2824 = vmatpush2.msra.mxu0 0.0
        %2825 = vmatprep.subr.mxu0 0.0
        %2826 = vmatpush2.msra.mxu0 0.0
        %2827 = vmatprep.subr.mxu0 0.0
        %2828 = vmatpush2.msra.mxu0 0.0
        %2829 = vmatprep.subr.mxu0 0.0
        %2830 = vmatpush2.msra.mxu0 0.0
        %2831 = vmatprep.subr.mxu0 0.0
        %2832 = vmatpush2.msra.mxu0 0.0
        %2833 = vmatprep.subr.mxu0 0.0
        %2834 = vmatpush2.msra.mxu0 0.0
        %2835 = vmatprep.subr.mxu0 0.0
        %2836 = vmatpush2.msra.mxu0 0.0
        %2837 = vmatprep.subr.mxu0 0.0
        %2838 = vmatpush2.msra.mxu0 0.0
        %2839 = vmatprep.mubr.f32.mxu0 0.0
        %2840 = vmatmul.mubr.f32.gmra.mxu0 %v1073
        %v2841 = vpop.f32.mrf.mxu0
        %v2842 = vadd.f32 0.0, %v2841
        %v2843 = vpop.f32.mrf.mxu0
        %2844 = vmatprep.mubr.f32.mxu0 0.0
        %2845 = vmatmul.mubr.f32.gmra.mxu0 %v1075
        %v2846 = vpop.f32.mrf.mxu0
        %v2847 = vadd.f32 0.0, %v2846
        %v2848 = vpop.f32.mrf.mxu0
        %2849 = vmatprep.mubr.f32.mxu0 0.0
        %2850 = vmatmul.mubr.f32.gmra.mxu0 %v1077
        %v2851 = vpop.f32.mrf.mxu0
        %v2852 = vadd.f32 0.0, %v2851
        %v2853 = vpop.f32.mrf.mxu0
        %2854 = vmatprep.mubr.f32.mxu0 0.0
        %2855 = vmatmul.mubr.f32.gmra.mxu0 %v1079
        %v2856 = vpop.f32.mrf.mxu0
        %v2857 = vadd.f32 0.0, %v2856
        %v2858 = vpop.f32.mrf.mxu0
        %2859 = vmatprep.mubr.f32.mxu0 0.0
        %2860 = vmatmul.mubr.f32.gmra.mxu0 %v1081
        %v2861 = vpop.f32.mrf.mxu0
        %v2862 = vadd.f32 0.0, %v2861
        %v2863 = vpop.f32.mrf.mxu0
        %2864 = vmatprep.mubr.f32.mxu0 0.0
        %2865 = vmatmul.mubr.f32.gmra.mxu0 %v1083
        %v2866 = vpop.f32.mrf.mxu0
        %v2867 = vadd.f32 0.0, %v2866
        %v2868 = vpop.f32.mrf.mxu0
        %2869 = vmatprep.mubr.f32.mxu0 0.0
        %2870 = vmatmul.mubr.f32.gmra.mxu0 %v1085
        %v2871 = vpop.f32.mrf.mxu0
        %v2872 = vadd.f32 0.0, %v2871
        %v2873 = vpop.f32.mrf.mxu0
        %2874 = vmatprep.mubr.f32.mxu0 0.0
        %2875 = vmatmul.mubr.f32.gmra.mxu0 %v1087
        %v2876 = vpop.f32.mrf.mxu0
        %v2877 = vadd.f32 0.0, %v2876
        %v2878 = vpop.f32.mrf.mxu0
        %2879 = vmatprep.mubr.f32.mxu0 0.0
        %2880 = vmatmul.mubr.f32.gmra.mxu0 %v1089
        %v2881 = vpop.f32.mrf.mxu0
        %v2882 = vadd.f32 0.0, %v2881
        %v2883 = vpop.f32.mrf.mxu0
        %2884 = vmatprep.mubr.f32.mxu0 0.0
        %2885 = vmatmul.mubr.f32.gmra.mxu0 %v1091
        %v2886 = vpop.f32.mrf.mxu0
        %v2887 = vadd.f32 0.0, %v2886
        %v2888 = vpop.f32.mrf.mxu0
        %2889 = vmatprep.mubr.f32.mxu0 0.0
        %2890 = vmatmul.mubr.f32.gmra.mxu0 %v1093
        %v2891 = vpop.f32.mrf.mxu0
        %v2892 = vadd.f32 0.0, %v2891
        %v2893 = vpop.f32.mrf.mxu0
        %2894 = vmatprep.mubr.f32.mxu0 0.0
        %2895 = vmatmul.mubr.f32.gmra.mxu0 %v1095
        %v2896 = vpop.f32.mrf.mxu0
        %v2897 = vadd.f32 0.0, %v2896
        %v2898 = vpop.f32.mrf.mxu0
        %2899 = vmatprep.mubr.f32.mxu0 0.0
        %2900 = vmatmul.mubr.f32.gmra.mxu0 %v1097
        %v2901 = vpop.f32.mrf.mxu0
        %v2902 = vadd.f32 0.0, %v2901
        %v2903 = vpop.f32.mrf.mxu0
        %2904 = vmatprep.mubr.f32.mxu0 0.0
        %2905 = vmatmul.mubr.f32.gmra.mxu0 %v1099
        %v2906 = vpop.f32.mrf.mxu0
        %v2907 = vadd.f32 0.0, %v2906
        %v2908 = vpop.f32.mrf.mxu0
        %2909 = vmatprep.mubr.f32.mxu0 0.0
        %2910 = vmatmul.mubr.f32.gmra.mxu0 %v1101
        %v2911 = vpop.f32.mrf.mxu0
        %v2912 = vadd.f32 0.0, %v2911
        %v2913 = vpop.f32.mrf.mxu0
        %2914 = vmatprep.mubr.f32.mxu0 0.0
        %2915 = vmatmul.mubr.f32.gmra.mxu0 %v1103
        %v2916 = vpop.f32.mrf.mxu0
        %v2917 = vadd.f32 0.0, %v2916
        %v2918 = vpop.f32.mrf.mxu0
        %2919 = vmatprep.mubr.f32.mxu0 0.0
        %2920 = vmatmul.mubr.f32.gmra.mxu0 %v1105
        %v2921 = vpop.f32.mrf.mxu0
        %v2922 = vadd.f32 0.0, %v2921
        %v2923 = vpop.f32.mrf.mxu0
        %2924 = vmatprep.mubr.f32.mxu0 0.0
        %2925 = vmatmul.mubr.f32.gmra.mxu0 %v1107
        %v2926 = vpop.f32.mrf.mxu0
        %v2927 = vadd.f32 0.0, %v2926
        %v2928 = vpop.f32.mrf.mxu0
        %2929 = vmatprep.mubr.f32.mxu0 0.0
        %2930 = vmatmul.mubr.f32.gmra.mxu0 %v1109
        %v2931 = vpop.f32.mrf.mxu0
        %v2932 = vadd.f32 0.0, %v2931
        %v2933 = vpop.f32.mrf.mxu0
        %2934 = vmatprep.mubr.f32.mxu0 0.0
        %2935 = vmatmul.mubr.f32.gmra.mxu0 %v1111
        %v2936 = vpop.f32.mrf.mxu0
        %v2937 = vadd.f32 0.0, %v2936
        %v2938 = vpop.f32.mrf.mxu0
        %2939 = vmatprep.mubr.f32.mxu0 0.0
        %2940 = vmatmul.mubr.f32.gmra.mxu0 %v1113
        %v2941 = vpop.f32.mrf.mxu0
        %v2942 = vadd.f32 0.0, %v2941
        %v2943 = vpop.f32.mrf.mxu0
        %2944 = vmatprep.mubr.f32.mxu0 0.0
        %2945 = vmatmul.mubr.f32.gmra.mxu0 %v1115
        %v2946 = vpop.f32.mrf.mxu0
        %v2947 = vadd.f32 0.0, %v2946
        %v2948 = vpop.f32.mrf.mxu0
        %2949 = vmatprep.mubr.f32.mxu0 0.0
        %2950 = vmatmul.mubr.f32.gmra.mxu0 %v1117
        %v2951 = vpop.f32.mrf.mxu0
        %v2952 = vadd.f32 0.0, %v2951
        %v2953 = vpop.f32.mrf.mxu0
        %2954 = vmatprep.mubr.f32.mxu0 0.0
        %2955 = vmatmul.mubr.f32.gmra.mxu0 %v1119
        %v2956 = vpop.f32.mrf.mxu0
        %v2957 = vadd.f32 0.0, %v2956
        %v2958 = vpop.f32.mrf.mxu0
        %2959 = vmatprep.mubr.f32.mxu0 0.0
        %2960 = vmatmul.mubr.f32.gmra.mxu0 %v1121
        %v2961 = vpop.f32.mrf.mxu0
        %v2962 = vadd.f32 0.0, %v2961
        %v2963 = vpop.f32.mrf.mxu0
        %2964 = vmatprep.mubr.f32.mxu0 0.0
        %2965 = vmatmul.mubr.f32.gmra.mxu0 %v1123
        %v2966 = vpop.f32.mrf.mxu0
        %v2967 = vadd.f32 0.0, %v2966
        %v2968 = vpop.f32.mrf.mxu0
        %2969 = vmatprep.mubr.f32.mxu0 0.0
        %2970 = vmatmul.mubr.f32.gmra.mxu0 %v1125
        %v2971 = vpop.f32.mrf.mxu0
        %v2972 = vadd.f32 0.0, %v2971
        %v2973 = vpop.f32.mrf.mxu0
        %2974 = vmatprep.mubr.f32.mxu0 0.0
        %2975 = vmatmul.mubr.f32.gmra.mxu0 %v1127
        %v2976 = vpop.f32.mrf.mxu0
        %v2977 = vadd.f32 0.0, %v2976
        %v2978 = vpop.f32.mrf.mxu0
        %2979 = vmatprep.mubr.f32.mxu0 0.0
        %2980 = vmatmul.mubr.f32.gmra.mxu0 %v1948
        %v2981 = vpop.f32.mrf.mxu0
        %v2982 = vadd.f32 0.0, %v2981
        %v2983 = vpop.f32.mrf.mxu0
        %2984 = vmatprep.mubr.f32.mxu0 0.0
        %2985 = vmatmul.mubr.f32.gmra.mxu0 %v1950
        %v2986 = vpop.f32.mrf.mxu0
        %v2987 = vadd.f32 0.0, %v2986
        %v2988 = vpop.f32.mrf.mxu0
        %2989 = vmatprep.mubr.f32.mxu0 0.0
        %2990 = vmatmul.mubr.f32.gmra.mxu0 %v2771
        %v2991 = vpop.f32.mrf.mxu0
        %v2992 = vadd.f32 0.0, %v2991
        %v2993 = vpop.f32.mrf.mxu0
        %2994 = vmatprep.mubr.f32.mxu0 0.0
        %2995 = vmatmul.mubr.f32.gmra.mxu0 %v2773
        %v2996 = vpop.f32.mrf.mxu0
        %v2997 = vadd.f32 0.0, %v2996
        %v2998 = vpop.f32.mrf.mxu0
        %2999 = vdwg.mxu0
        %v3000 = vadd.f32 %v2725, %v2842
        %v3001 = vadd.f32 %v2726, %v2847
        %v3002 = vadd.f32 %v2727, %v2852
        %v3003 = vadd.f32 %v2728, %v2857
        %v3004 = vadd.f32 %v2729, %v2862
        %v3005 = vadd.f32 %v2730, %v2867
        %v3006 = vadd.f32 %v2731, %v2872
        %v3007 = vadd.f32 %v2732, %v2877
        %v3008 = vadd.f32 %v2733, %v2882
        %v3009 = vadd.f32 %v2734, %v2887
        %v3010 = vadd.f32 %v2735, %v2892
        %v3011 = vadd.f32 %v2736, %v2897
        %v3012 = vadd.f32 %v2737, %v2902
        %v3013 = vadd.f32 %v2738, %v2907
        %v3014 = vadd.f32 %v2739, %v2912
        %v3015 = vadd.f32 %v2740, %v2917
        %v3016 = vadd.f32 %v2741, %v2922
        %v3017 = vadd.f32 %v2742, %v2927
        %v3018 = vadd.f32 %v2743, %v2932
        %v3019 = vadd.f32 %v2744, %v2937
        %v3020 = vadd.f32 %v2745, %v2942
        %v3021 = vadd.f32 %v2746, %v2947
        %v3022 = vadd.f32 %v2747, %v2952
        %v3023 = vadd.f32 %v2748, %v2957
        %v3024 = vadd.f32 %v2749, %v2962
        %v3025 = vadd.f32 %v2750, %v2967
        %v3026 = vadd.f32 %v2751, %v2972
        %v3027 = vadd.f32 %v2752, %v2977
        %v3028 = vadd.f32 %v2753, %v2982
        %v3029 = vadd.f32 %v2754, %v2987
        %v3030 = vadd.f32 %v2755, %v2992
        %v3031 = vadd.f32 %v2756, %v2997
        %v3032 = vld [vmem:[%s2] sm:$0x1]
        %v3034 = vlaneseq
        %v3035 = vshrl.u32 %v3034, 7
        %v3036 = vsub.s32 0, %v3035
        %v3037 = vrot.slane %v3032, %v3036
        %v3039 = vadd.f32 %v3000, %v3037
        %v3040 = vadd.f32 %v3001, %v3037
        %v3041 = vadd.f32 %v3002, %v3037
        %v3042 = vadd.f32 %v3003, %v3037
        %v3043 = vadd.f32 %v3004, %v3037
        %v3044 = vadd.f32 %v3005, %v3037
        %v3045 = vadd.f32 %v3006, %v3037
        %v3046 = vadd.f32 %v3007, %v3037
        %v3047 = vadd.f32 %v3008, %v3037
        %v3048 = vadd.f32 %v3009, %v3037
        %v3049 = vadd.f32 %v3010, %v3037
        %v3050 = vadd.f32 %v3011, %v3037
        %v3051 = vadd.f32 %v3012, %v3037
        %v3052 = vadd.f32 %v3013, %v3037
        %v3053 = vadd.f32 %v3014, %v3037
        %v3054 = vadd.f32 %v3015, %v3037
        %v3055 = vadd.f32 %v3016, %v3037
        %v3056 = vadd.f32 %v3017, %v3037
        %v3057 = vadd.f32 %v3018, %v3037
        %v3058 = vadd.f32 %v3019, %v3037
        %v3059 = vadd.f32 %v3020, %v3037
        %v3060 = vadd.f32 %v3021, %v3037
        %v3061 = vadd.f32 %v3022, %v3037
        %v3062 = vadd.f32 %v3023, %v3037
        %v3063 = vadd.f32 %v3024, %v3037
        %v3064 = vadd.f32 %v3025, %v3037
        %v3065 = vadd.f32 %v3026, %v3037
        %v3066 = vadd.f32 %v3027, %v3037
        %v3067 = vadd.f32 %v3028, %v3037
        %v3068 = vadd.f32 %v3029, %v3037
        %v3069 = vadd.f32 %v3030, %v3037
        %v3070 = vadd.f32 %v3031, %v3037
        %vm3071 = vcmp.ge.f32.partialorder %v3039, 0.0
        %vm3072 = vcmp.ge.f32.partialorder %v3040, 0.0
        %vm3073 = vcmp.ge.f32.partialorder %v3041, 0.0
        %vm3074 = vcmp.ge.f32.partialorder %v3042, 0.0
        %vm3075 = vcmp.ge.f32.partialorder %v3043, 0.0
        %vm3076 = vcmp.ge.f32.partialorder %v3044, 0.0
        %vm3077 = vcmp.ge.f32.partialorder %v3045, 0.0
        %vm3078 = vcmp.ge.f32.partialorder %v3046, 0.0
        %vm3079 = vcmp.ge.f32.partialorder %v3047, 0.0
        %vm3080 = vcmp.ge.f32.partialorder %v3048, 0.0
        %vm3081 = vcmp.ge.f32.partialorder %v3049, 0.0
        %vm3082 = vcmp.ge.f32.partialorder %v3050, 0.0
        %vm3083 = vcmp.ge.f32.partialorder %v3051, 0.0
        %vm3084 = vcmp.ge.f32.partialorder %v3052, 0.0
        %vm3085 = vcmp.ge.f32.partialorder %v3053, 0.0
        %vm3086 = vcmp.ge.f32.partialorder %v3054, 0.0
        %vm3087 = vcmp.ge.f32.partialorder %v3055, 0.0
        %vm3088 = vcmp.ge.f32.partialorder %v3056, 0.0
        %vm3089 = vcmp.ge.f32.partialorder %v3057, 0.0
        %vm3090 = vcmp.ge.f32.partialorder %v3058, 0.0
        %vm3091 = vcmp.ge.f32.partialorder %v3059, 0.0
        %vm3092 = vcmp.ge.f32.partialorder %v3060, 0.0
        %vm3093 = vcmp.ge.f32.partialorder %v3061, 0.0
        %vm3094 = vcmp.ge.f32.partialorder %v3062, 0.0
        %vm3095 = vcmp.ge.f32.partialorder %v3063, 0.0
        %vm3096 = vcmp.ge.f32.partialorder %v3064, 0.0
        %vm3097 = vcmp.ge.f32.partialorder %v3065, 0.0
        %vm3098 = vcmp.ge.f32.partialorder %v3066, 0.0
        %vm3099 = vcmp.ge.f32.partialorder %v3067, 0.0
        %vm3100 = vcmp.ge.f32.partialorder %v3068, 0.0
        %vm3101 = vcmp.ge.f32.partialorder %v3069, 0.0
        %vm3102 = vcmp.ge.f32.partialorder %v3070, 0.0
        %v3103 = vld [vmem:[%s3] sm:$0x1]
        %v3105 = vlaneseq
        %v3106 = vshrl.u32 %v3105, 7
        %v3107 = vsub.s32 0, %v3106
        %v3108 = vrot.slane %v3103, %v3107
        %v3110 = vmul.f32 %v3039, %v3108
        %v3111 = vmul.f32 %v3040, %v3108
        %v3112 = vmul.f32 %v3041, %v3108
        %v3113 = vmul.f32 %v3042, %v3108
        %v3114 = vmul.f32 %v3043, %v3108
        %v3115 = vmul.f32 %v3044, %v3108
        %v3116 = vmul.f32 %v3045, %v3108
        %v3117 = vmul.f32 %v3046, %v3108
        %v3118 = vmul.f32 %v3047, %v3108
        %v3119 = vmul.f32 %v3048, %v3108
        %v3120 = vmul.f32 %v3049, %v3108
        %v3121 = vmul.f32 %v3050, %v3108
        %v3122 = vmul.f32 %v3051, %v3108
        %v3123 = vmul.f32 %v3052, %v3108
        %v3124 = vmul.f32 %v3053, %v3108
        %v3125 = vmul.f32 %v3054, %v3108
        %v3126 = vmul.f32 %v3055, %v3108
        %v3127 = vmul.f32 %v3056, %v3108
        %v3128 = vmul.f32 %v3057, %v3108
        %v3129 = vmul.f32 %v3058, %v3108
        %v3130 = vmul.f32 %v3059, %v3108
        %v3131 = vmul.f32 %v3060, %v3108
        %v3132 = vmul.f32 %v3061, %v3108
        %v3133 = vmul.f32 %v3062, %v3108
        %v3134 = vmul.f32 %v3063, %v3108
        %v3135 = vmul.f32 %v3064, %v3108
        %v3136 = vmul.f32 %v3065, %v3108
        %v3137 = vmul.f32 %v3066, %v3108
        %v3138 = vmul.f32 %v3067, %v3108
        %v3139 = vmul.f32 %v3068, %v3108
        %v3140 = vmul.f32 %v3069, %v3108
        %v3141 = vmul.f32 %v3070, %v3108
        %v3142 = vsel %vm3071, %v3039, %v3110
        %v3143 = vsel %vm3072, %v3040, %v3111
        %v3144 = vsel %vm3073, %v3041, %v3112
        %v3145 = vsel %vm3074, %v3042, %v3113
        %v3146 = vsel %vm3075, %v3043, %v3114
        %v3147 = vsel %vm3076, %v3044, %v3115
        %v3148 = vsel %vm3077, %v3045, %v3116
        %v3149 = vsel %vm3078, %v3046, %v3117
        %v3150 = vsel %vm3079, %v3047, %v3118
        %v3151 = vsel %vm3080, %v3048, %v3119
        %v3152 = vsel %vm3081, %v3049, %v3120
        %v3153 = vsel %vm3082, %v3050, %v3121
        %v3154 = vsel %vm3083, %v3051, %v3122
        %v3155 = vsel %vm3084, %v3052, %v3123
        %v3156 = vsel %vm3085, %v3053, %v3124
        %v3157 = vsel %vm3086, %v3054, %v3125
        %v3158 = vsel %vm3087, %v3055, %v3126
        %v3159 = vsel %vm3088, %v3056, %v3127
        %v3160 = vsel %vm3089, %v3057, %v3128
        %v3161 = vsel %vm3090, %v3058, %v3129
        %v3162 = vsel %vm3091, %v3059, %v3130
        %v3163 = vsel %vm3092, %v3060, %v3131
        %v3164 = vsel %vm3093, %v3061, %v3132
        %v3165 = vsel %vm3094, %v3062, %v3133
        %v3166 = vsel %vm3095, %v3063, %v3134
        %v3167 = vsel %vm3096, %v3064, %v3135
        %v3168 = vsel %vm3097, %v3065, %v3136
        %v3169 = vsel %vm3098, %v3066, %v3137
        %v3170 = vsel %vm3099, %v3067, %v3138
        %v3171 = vsel %vm3100, %v3068, %v3139
        %v3172 = vsel %vm3101, %v3069, %v3140
        %v3173 = vsel %vm3102, %v3070, %v3141
        %3174 = vst [vmem:[%s190] sm:$0xff] %v3142
        %3175 = vst [vmem:[%s190 + $0x8] sm:$0xff] %v3143
        %3176 = vst [vmem:[%s190 + $0x10] sm:$0xff] %v3144
        %3177 = vst [vmem:[%s190 + $0x18] sm:$0xff] %v3145
        %3178 = vst [vmem:[%s190 + $0x20] sm:$0xff] %v3146
        %3179 = vst [vmem:[%s190 + $0x28] sm:$0xff] %v3147
        %3180 = vst [vmem:[%s190 + $0x30] sm:$0xff] %v3148
        %3181 = vst [vmem:[%s190 + $0x38] sm:$0xff] %v3149
        %3182 = vst [vmem:[%s190 + $0x40] sm:$0xff] %v3150
        %3183 = vst [vmem:[%s190 + $0x48] sm:$0xff] %v3151
        %3184 = vst [vmem:[%s190 + $0x50] sm:$0xff] %v3152
        %3185 = vst [vmem:[%s190 + $0x58] sm:$0xff] %v3153
        %3186 = vst [vmem:[%s190 + $0x60] sm:$0xff] %v3154
        %3187 = vst [vmem:[%s190 + $0x68] sm:$0xff] %v3155
        %3188 = vst [vmem:[%s190 + $0x70] sm:$0xff] %v3156
        %3189 = vst [vmem:[%s190 + $0x78] sm:$0xff] %v3157
        %3190 = vst [vmem:[%s190 + $0x80] sm:$0xff] %v3158
        %3191 = vst [vmem:[%s190 + $0x88] sm:$0xff] %v3159
        %3192 = vst [vmem:[%s190 + $0x90] sm:$0xff] %v3160
        %3193 = vst [vmem:[%s190 + $0x98] sm:$0xff] %v3161
        %3194 = vst [vmem:[%s190 + $0xa0] sm:$0xff] %v3162
        %3195 = vst [vmem:[%s190 + $0xa8] sm:$0xff] %v3163
        %3196 = vst [vmem:[%s190 + $0xb0] sm:$0xff] %v3164
        %3197 = vst [vmem:[%s190 + $0xb8] sm:$0xff] %v3165
        %3198 = vst [vmem:[%s190 + $0xc0] sm:$0xff] %v3166
        %3199 = vst [vmem:[%s190 + $0xc8] sm:$0xff] %v3167
        %3200 = vst [vmem:[%s190 + $0xd0] sm:$0xff] %v3168
        %3201 = vst [vmem:[%s190 + $0xd8] sm:$0xff] %v3169
        %3202 = vst [vmem:[%s190 + $0xe0] sm:$0xff] %v3170
        %3203 = vst [vmem:[%s190 + $0xe8] sm:$0xff] %v3171
        %3204 = vst [vmem:[%s190 + $0xf0] sm:$0xff] %v3172
        %3205 = vst [vmem:[%s190 + $0xf8] sm:$0xff] %v3173
        %s3206 = sand.u32 %s115, 1
        %s3207 = scalar_lea.sflag [#allocation3], %s3206
        %s3208 = sand.u32 %s115, 1
        %s3209 = smul.addr %s3208, 256
        %s3210 = scalar_lea.vmem [#allocation2], %s3209
        // Predicated region
        $region37: #{tpu_custom_call.1} parent=35 // pred_check
          %p3211 = pneg %p125
        $region38: #{tpu_custom_call.1} parent=35 // pred_check_branch
          %3213 = sbr.rel (%p3211) target = $region40
        $region39: #{tpu_custom_call.1} parent=35 // pred_region
          %s3215 = ssub.s32 4096, 4096
          %3216 = vsyncadd %s3207, %s3215
          %s3217 = smul.addr %s18, 32
          %s3218 = smul.addr %s3217, 128
          %s3219 = scalar_lea.hbm %s4, %s3218
          %s3220 = sshll.u32 %s3210, 4
          %s3221 = int_to_ptr.vmem [resolvable:$true] %s3220
          %3226 = dma.vmem_to_hbm [thread:$0]  %s3221, 4096, %s3219, %s3207, 128, 128, 8
        $region40: #{tpu_custom_call.1} parent=35 // pred_fallthru
          _
      $region36: #{tpu_custom_call.1} parent=5 // pred_fallthru
        _
      %p3227 = scmp.le.s32.totalorder 2, %s13
      // Predicated region
      $region41: #{tpu_custom_call.1} parent=5 // pred_check
        %p3228 = pneg %p3227
      $region42: #{tpu_custom_call.1} parent=5 // pred_check_branch
        %3230 = sbr.rel (%p3228) target = $region44
      $region43: #{tpu_custom_call.1} parent=5 // pred_region
        %s3231 = ssub.s32 %s13, 2
        // Predicated region
        $region45: #{tpu_custom_call.1} parent=43 // pred_check
          %p3232 = pneg %p131
        $region46: #{tpu_custom_call.1} parent=43 // pred_check_branch
          %3234 = sbr.rel (%p3232) target = $region48
        $region47: #{tpu_custom_call.1} parent=43 // pred_region
          %s3235 = sand.u32 %s116, 1
          %s3236 = scalar_lea.sflag [#allocation3], %s3235
          %s3237 = sand.u32 %s116, 1
          %s3238 = smul.addr %s3237, 256
          %s3239 = scalar_lea.vmem [#allocation2], %s3238
          %3240 = dma.done %s3236, 4096
        $region48: #{tpu_custom_call.1} parent=43 // pred_fallthru
          _
      $region44: #{tpu_custom_call.1} parent=5 // pred_fallthru
        _
    $region6: #{tpu_custom_call.1} parent=1 // loop_footer
      %s17 = sadd.s32 1, %s13
    $region7: #{tpu_custom_call.1} parent=1 // loop_footer_branch
      %12 = sbr.rel target = $region3
    $region8: #{tpu_custom_call.1} parent=1 // loop_exit
      _
    %3241 = vsyncpa [#allocation3], 1
    %s3242 = scalar_lea.sflag [#allocation3], 1
    %3243 = vsyncpa %s3242, 1

</llo_original>
